<compile_context>
chip_gen: v5e
topology: v5e:2x2
jax: 0.10.0
libtpu: 0.0.40
codegen_flags: <defaults>
</compile_context>

<pallas_src>
import functools

import jax
import jax.numpy as jnp
import numpy as np
from jax import lax
from jax.experimental import pallas as pl
from jax.experimental.pallas import tpu as pltpu


def _round_up(x, m):
    return (x + m - 1) // m * m


# --------------------------------------------------------------------------
# Pallas kernel
# --------------------------------------------------------------------------
def _decoder_kernel(x_ref, wi1_ref, wh1_ref, b1_ref, wi2_ref, wh2_ref, b2_ref,
                    wf_ref, bf_ref, out_ref, xproj_ref,
                    *, hidden: int, seq_len: int, batch_blk: int, chunk: int):
    H = hidden          # padded hidden size (multiple of 128)
    B = batch_blk       # per-grid-step batch rows (multiple of 8)
    T = seq_len
    Tc = chunk          # time steps projected per xproj chunk
    G = 4 * H

    # Hoist the layer-2 bias broadcast out of the recurrence (JAX does not
    # CSE broadcast_in_dim; doing this per step would be pure VPU filler).
    b2b = jnp.broadcast_to(b2_ref[...], (B, G))

    def split_gates(g):
        # Gates are packed (i, f, o, g) on the host: one wide sigmoid covers
        # i|f|o, one tanh covers g.  H is a multiple of 128 so every slice is
        # lane aligned.
        s = jax.nn.sigmoid(g[:, :3 * H])
        return s[:, 0:H], s[:, H:2 * H], s[:, 2 * H:3 * H], jnp.tanh(g[:, 3 * H:])

    def step(s_idx, carry):
        h1, c1, h2, c2 = carry
        r = pl.multiple_of(s_idx * B, B)        # sublane-aligned dynamic start

        # ---- layer 1: only the recurrent dot remains inside the loop -----
        g1 = (xproj_ref[pl.ds(r, B), :]
              + jnp.dot(h1.astype(jnp.bfloat16), wh1_ref[...],
                        preferred_element_type=jnp.float32))
        i1, f1, o1, gg1 = split_gates(g1)
        c1n = f1 * c1 + i1 * gg1
        h1n = o1 * jnp.tanh(c1n)

        # ---- layer 2: two independent dots (h2 @ Wh2 only depends on the
        #      previous step, so it can overlap this step's layer-1 work) ---
        g2 = (jnp.dot(h1n.astype(jnp.bfloat16), wi2_ref[...],
                      preferred_element_type=jnp.float32)
              + jnp.dot(h2.astype(jnp.bfloat16), wh2_ref[...],
                        preferred_element_type=jnp.float32)
              + b2b)
        i2, f2, o2, gg2 = split_gates(g2)
        c2n = f2 * c2 + i2 * gg2
        h2n = o2 * jnp.tanh(c2n)
        return (h1n, c1n, h2n, c2n)

    def run_chunk(t0, n_steps, carry):
        # Project n_steps of the layer-1 input in one (n*B, D) x (D, G) matmul
        # (combined bias folded in with a single broadcast), then recur.
        row0 = pl.multiple_of(t0 * B, B)
        xproj_ref[pl.ds(0, n_steps * B), :] = (
            jnp.dot(x_ref[pl.ds(row0, n_steps * B), :], wi1_ref[...],
                    preferred_element_type=jnp.float32)
            + b1_ref[...])
        # Bounded unroll: keeps adjacent-step overlap visible to the LLO
        # scheduler without exploding code size for long T.
        return lax.fori_loop(0, n_steps, step, carry,
                             unroll=min(n_steps, 8))

    z = jnp.zeros((B, H), jnp.float32)
    carry = (z, z, z, z)
    n_full, rem = T // Tc, T % Tc
    if n_full > 0:
        carry = lax.fori_loop(0, n_full,
                              lambda ci, c: run_chunk(ci * Tc, Tc, c), carry)
    if rem > 0:
        carry = run_chunk(n_full * Tc, rem, carry)
    h2 = carry[2]

    # Final linear on the second layer's final hidden state.  Output slab is
    # lane-dense (O padded to 128) -> unmasked stores.
    out_ref[...] = (jnp.dot(h2.astype(jnp.bfloat16), wf_ref[...],
                            preferred_element_type=jnp.float32)
                    + bf_ref[...]).astype(out_ref.dtype)


# --------------------------------------------------------------------------
# Host-side wrapper (padding / weight prep / pallas_call)
# --------------------------------------------------------------------------
def _reorder_pad_gates(w, H, H_pad):
    """Reorder PyTorch gate packing (i,f,g,o) -> (i,f,o,g) along the 4H axis
    and zero-pad each gate to H_pad lanes."""
    r = w.shape[0]
    w = w.reshape(r, 4, H)[:, [0, 1, 3, 2], :]
    w = jnp.pad(w, ((0, 0), (0, 0), (0, H_pad - H)))
    return w.reshape(r, 4 * H_pad)


def _pad_rows(w, rows_pad):
    return jnp.pad(w, ((0, rows_pad - w.shape[0]), (0, 0)))


def _choose_batch_block(b8, *, mxu_m=128):
    """Batch rows per grid step: fill the MXU M dimension, but once the batch
    is large enough keep >=2 grid blocks so the 'parallel' batch axis can
    split across v7x's two TensorCores.  Bump mxu_m to 256 on v6e/v7x when
    the batch is huge."""
    if b8 <= 8:
        return b8
    half = _round_up(-(-b8 // 2), 8)       # ~ceil(b8/2), sublane aligned
    return max(8, min(half, mxu_m))


def decoder_forward(x, params, *, hidden_sz: int, output_sz: int,
                    mxu_m: int = 128,
                    xproj_budget_bytes: int = 8 * 1024 * 1024):
    """x: (batch, seq, input_sz) float32. Returns (batch, output_sz) float32."""
    B, T, D = x.shape
    H, O = hidden_sz, output_sz

    B8 = _round_up(B, 8)
    BB = _choose_batch_block(B8, mxu_m=mxu_m)     # per-grid-step batch block
    B_pad = _round_up(B8, BB)
    nb = B_pad // BB
    H_pad = _round_up(H, 128)                     # lane-align gate slices
    O_pad = _round_up(O, 128)                     # lane-dense output store
    G = 4 * H_pad

    # Time-chunk size for the hoisted X @ Wi1 projection (bounds the f32
    # scratch to ~xproj_budget_bytes regardless of T / BB).
    Tc = max(1, min(T, xproj_budget_bytes // (BB * G * 4)))

    # --- input: time-major, batch padded, blocked over batch and flattened so
    #     each grid step's kernel sees a (T*BB, D) slab (row = t*BB + local_b).
    #     Cast to bf16 on the host (halves DMA, native MXU operand dtype).
    x_tm = jnp.transpose(x, (1, 0, 2))                        # (T, B, D)
    x_tm = jnp.pad(x_tm, ((0, 0), (0, B_pad - B), (0, 0)))    # (T, B_pad, D)
    x_blk = (x_tm.reshape(T, nb, BB, D)
             .transpose(1, 0, 2, 3)
             .reshape(nb, T * BB, D)).astype(jnp.bfloat16)    # (nb, T*BB, D)

    # --- weights: pre-transposed, gate-reordered, zero-padded per gate to
    #     128 lanes; MXU operands in bf16, biases kept f32.
    # Padded h/c lanes provably stay zero (zero weights/bias -> gates=0 ->
    # i=f=o=0.5, g=0 -> c_new=h_new=0), so padding never perturbs real lanes.
    bf16 = jnp.bfloat16
    wi1 = _reorder_pad_gates(params["w_ih1"].T, H, H_pad).astype(bf16)        # (D, G)
    wh1 = _pad_rows(_reorder_pad_gates(params["w_hh1"].T, H, H_pad),
                    H_pad).astype(bf16)                                       # (H_pad, G)
    b1 = _reorder_pad_gates((params["b_ih1"] + params["b_hh1"]).reshape(1, 4 * H),
                            H, H_pad)                                         # (1, G) f32
    wi2 = _pad_rows(_reorder_pad_gates(params["w_ih2"].T, H, H_pad),
                    H_pad).astype(bf16)                                       # (H_pad, G)
    wh2 = _pad_rows(_reorder_pad_gates(params["w_hh2"].T, H, H_pad),
                    H_pad).astype(bf16)                                       # (H_pad, G)
    b2 = _reorder_pad_gates((params["b_ih2"] + params["b_hh2"]).reshape(1, 4 * H),
                            H, H_pad)                                         # (1, G) f32
    wf = jnp.pad(params["w_fc"].T,
                 ((0, H_pad - H), (0, O_pad - O))).astype(bf16)               # (H_pad, O_pad)
    bfc = jnp.pad(params["b_fc"].reshape(1, O), ((0, 0), (0, O_pad - O)))     # (1, O_pad) f32

    kernel = functools.partial(_decoder_kernel, hidden=H_pad, seq_len=T,
                               batch_blk=BB, chunk=Tc)

    out = pl.pallas_call(
        kernel,
        out_shape=jax.ShapeDtypeStruct((B_pad, O_pad), jnp.float32),
        grid=(nb,),
        in_specs=[
            pl.BlockSpec((None, T * BB, D), lambda b: (b, 0, 0)),   # x slab
            pl.BlockSpec((D, G), lambda b: (0, 0)),                 # Wi1
            pl.BlockSpec((H_pad, G), lambda b: (0, 0)),             # Wh1
            pl.BlockSpec((1, G), lambda b: (0, 0)),                 # b1
            pl.BlockSpec((H_pad, G), lambda b: (0, 0)),             # Wi2
            pl.BlockSpec((H_pad, G), lambda b: (0, 0)),             # Wh2
            pl.BlockSpec((1, G), lambda b: (0, 0)),                 # b2
            pl.BlockSpec((H_pad, O_pad), lambda b: (0, 0)),         # Wfc
            pl.BlockSpec((1, O_pad), lambda b: (0, 0)),             # bfc
        ],
        out_specs=pl.BlockSpec((BB, O_pad), lambda b: (b, 0)),
        scratch_shapes=[pltpu.VMEM((Tc * BB, G), jnp.float32)],     # xproj chunk
        compiler_params=pltpu.CompilerParams(
            dimension_semantics=("parallel",),
            vmem_limit_bytes=32 * 1024 * 1024),
    )(x_blk, wi1, wh1, b1, wi2, wh2, b2, wf, bfc)

    return out[:B, :O]


# --------------------------------------------------------------------------
# pure-JAX f32 reference (mirrors the assumed PyTorch module)
# --------------------------------------------------------------------------
def _lstm_layer_ref(x, w_ih, w_hh, b_ih, b_hh):
    B, T, _ = x.shape
    H = w_hh.shape[1]
    h = jnp.zeros((B, H), jnp.float32)
    c = jnp.zeros((B, H), jnp.float32)
    hs = []
    for t in range(T):
        gates = x[:, t] @ w_ih.T + h @ w_hh.T + b_ih + b_hh
        i = jax.nn.sigmoid(gates[:, 0 * H:1 * H])
        f = jax.nn.sigmoid(gates[:, 1 * H:2 * H])
        g = jnp.tanh(gates[:, 2 * H:3 * H])
        o = jax.nn.sigmoid(gates[:, 3 * H:4 * H])
        c = f * c + i * g
        h = o * jnp.tanh(c)
        hs.append(h)
    return jnp.stack(hs, axis=1), h


def decoder_ref(x, params):
    seq1, _ = _lstm_layer_ref(x, params["w_ih1"], params["w_hh1"],
                              params["b_ih1"], params["b_hh1"])
    _, h2 = _lstm_layer_ref(seq1, params["w_ih2"], params["w_hh2"],
                            params["b_ih2"], params["b_hh2"])
    return h2 @ params["w_fc"].T + params["b_fc"]


# --------------------------------------------------------------------------
if __name__ == "__main__":
    input_sz, hidden_sz, output_sz, output_seq = 16, 32, 8, 8
    batch, seq = 4, 8

    key = jax.random.PRNGKey(0)
    ks = jax.random.split(key, 12)
    s = 0.1
    params = {
        "w_ih1": s * jax.random.normal(ks[0], (4 * hidden_sz, input_sz), jnp.float32),
        "w_hh1": s * jax.random.normal(ks[1], (4 * hidden_sz, hidden_sz), jnp.float32),
        "b_ih1": s * jax.random.normal(ks[2], (4 * hidden_sz,), jnp.float32),
        "b_hh1": s * jax.random.normal(ks[3], (4 * hidden_sz,), jnp.float32),
        "w_ih2": s * jax.random.normal(ks[4], (4 * hidden_sz, hidden_sz), jnp.float32),
        "w_hh2": s * jax.random.normal(ks[5], (4 * hidden_sz, hidden_sz), jnp.float32),
        "b_ih2": s * jax.random.normal(ks[6], (4 * hidden_sz,), jnp.float32),
        "b_hh2": s * jax.random.normal(ks[7], (4 * hidden_sz,), jnp.float32),
        "w_fc":  s * jax.random.normal(ks[8], (output_sz, hidden_sz), jnp.float32),
        "b_fc":  s * jax.random.normal(ks[9], (output_sz,), jnp.float32),
    }

    x = jax.random.normal(ks[10], (batch, seq, input_sz), jnp.float32)

    out = decoder_forward(x, params, hidden_sz=hidden_sz, output_sz=output_sz)
    out = jax.block_until_ready(out)

    ref = decoder_ref(x, params)
    # bf16 MXU operands vs f32 reference -> deliberately relaxed tolerance.
    np.testing.assert_allclose(np.asarray(out), np.asarray(ref),
                               rtol=2e-2, atol=2e-2)

    print("KERNEL_OK")
</pallas_src>

<mosaic_0001>
module attributes {stable_mosaic.version = 11 : i64} {
  func.func @_decoder_kernel(%arg0: i32, %arg1: memref<1x64x16xbf16, #tpu.memory_space<vmem>>, %arg2: memref<16x512xbf16, #tpu.memory_space<vmem>>, %arg3: memref<128x512xbf16, #tpu.memory_space<vmem>>, %arg4: memref<1x512xf32, #tpu.memory_space<vmem>>, %arg5: memref<128x512xbf16, #tpu.memory_space<vmem>>, %arg6: memref<128x512xbf16, #tpu.memory_space<vmem>>, %arg7: memref<1x512xf32, #tpu.memory_space<vmem>>, %arg8: memref<128x128xbf16, #tpu.memory_space<vmem>>, %arg9: memref<1x128xf32, #tpu.memory_space<vmem>>, %arg10: memref<8x128xf32, #tpu.memory_space<vmem>>, %arg11: memref<64x512xf32, #tpu.memory_space<vmem>>) attributes {dimension_semantics = [#tpu.dimension_semantics<parallel>], iteration_bounds = array<i64: 1>, scalar_prefetch = 0 : i64, scratch_operands = 1 : i64, tpu.core_type = #tpu.core_type<tc>, window_params = [{transform_indices = @transform_0, window_bounds = array<i64: 1, 64, 16>}, {pipeline_mode = #tpu.pipeline_mode<synchronous>, transform_indices = @transform_1, window_bounds = array<i64: 16, 512>}, {pipeline_mode = #tpu.pipeline_mode<synchronous>, transform_indices = @transform_2, window_bounds = array<i64: 128, 512>}, {pipeline_mode = #tpu.pipeline_mode<synchronous>, transform_indices = @transform_3, window_bounds = array<i64: 1, 512>}, {pipeline_mode = #tpu.pipeline_mode<synchronous>, transform_indices = @transform_4, window_bounds = array<i64: 128, 512>}, {pipeline_mode = #tpu.pipeline_mode<synchronous>, transform_indices = @transform_5, window_bounds = array<i64: 128, 512>}, {pipeline_mode = #tpu.pipeline_mode<synchronous>, transform_indices = @transform_6, window_bounds = array<i64: 1, 512>}, {pipeline_mode = #tpu.pipeline_mode<synchronous>, transform_indices = @transform_7, window_bounds = array<i64: 128, 128>}, {pipeline_mode = #tpu.pipeline_mode<synchronous>, transform_indices = @transform_8, window_bounds = array<i64: 1, 128>}, {transform_indices = @transform_9, window_bounds = array<i64: 8, 128>}]} {
    %c0 = arith.constant 0 : index
    %c0_0 = arith.constant 0 : index
    %0 = vector.load %arg7[%c0, %c0_0] : memref<1x512xf32, #tpu.memory_space<vmem>>, vector<1x512xf32>
    %1 = vector.shape_cast %0 : vector<1x512xf32> to vector<1x512xf32>
    %2 = vector.broadcast %1 : vector<1x512xf32> to vector<8x512xf32>
    %cst = arith.constant 0.000000e+00 : f32
    %3 = vector.broadcast %cst : f32 to vector<8x128xf32>
    %c0_i32 = arith.constant 0 : i32
    %c8_i32 = arith.constant 8 : i32
    %4 = arith.muli %c0_i32, %c8_i32 : i32
    %c8_i32_1 = arith.constant 8 : i32
    %5 = arith.muli %4, %c8_i32_1 : i32
    %6 = tpu.assume_multiple %5, 8 : i32
    %c0_2 = arith.constant 0 : index
    %7 = arith.index_cast %6 : i32 to index
    %c0_3 = arith.constant 0 : index
    %8 = vector.load %arg1[%c0_2, %7, %c0_3] : memref<1x64x16xbf16, #tpu.memory_space<vmem>>, vector<1x64x16xbf16>
    %9 = vector.shape_cast %8 : vector<1x64x16xbf16> to vector<64x16xbf16>
    %c0_4 = arith.constant 0 : index
    %c0_5 = arith.constant 0 : index
    %10 = vector.load %arg2[%c0_4, %c0_5] : memref<16x512xbf16, #tpu.memory_space<vmem>>, vector<16x512xbf16>
    %cst_6 = arith.constant dense<0.000000e+00> : vector<64x512xf32>
    %11 = tpu.matmul %9, %10, %cst_6 {dimension_numbers = #tpu.dot_dimension_numbers<[1], [0], [0], [1], [0, 0, 1, 1], [], []>} : vector<64x16xbf16>, vector<16x512xbf16>, vector<64x512xf32> -> vector<64x512xf32>
    %c0_7 = arith.constant 0 : index
    %c0_8 = arith.constant 0 : index
    %12 = vector.load %arg4[%c0_7, %c0_8] : memref<1x512xf32, #tpu.memory_space<vmem>>, vector<1x512xf32>
    %13 = vector.broadcast %12 : vector<1x512xf32> to vector<64x512xf32>
    %14 = arith.addf %11, %13 : vector<64x512xf32>
    %c0_9 = arith.constant 0 : index
    %c0_10 = arith.constant 0 : index
    %15 = vector.load %arg11[%c0_9, %c0_10] : memref<64x512xf32, #tpu.memory_space<vmem>>, vector<64x512xf32>
    tpu.vector_store %arg11[%c0_9, %c0_10], %14 {strides = array<i32>} : memref<64x512xf32, #tpu.memory_space<vmem>>, vector<64x512xf32>,
    %c0_i32_11 = arith.constant 0 : i32
    %c8_i32_12 = arith.constant 8 : i32
    %16 = arith.muli %c0_i32_11, %c8_i32_12 : i32
    %17 = tpu.assume_multiple %16, 8 : i32
    %18 = arith.index_cast %17 : i32 to index
    %c0_13 = arith.constant 0 : index
    %19 = vector.load %arg11[%18, %c0_13] : memref<64x512xf32, #tpu.memory_space<vmem>>, vector<8x512xf32>
    %20 = arith.truncf %3 : vector<8x128xf32> to vector<8x128xbf16>
    %c0_14 = arith.constant 0 : index
    %c0_15 = arith.constant 0 : index
    %21 = vector.load %arg3[%c0_14, %c0_15] : memref<128x512xbf16, #tpu.memory_space<vmem>>, vector<128x512xbf16>
    %cst_16 = arith.constant dense<0.000000e+00> : vector<8x512xf32>
    %22 = tpu.matmul %20, %21, %cst_16 {dimension_numbers = #tpu.dot_dimension_numbers<[1], [0], [0], [1], [0, 0, 1, 1], [], []>} : vector<8x128xbf16>, vector<128x512xbf16>, vector<8x512xf32> -> vector<8x512xf32>
    %23 = arith.addf %19, %22 : vector<8x512xf32>
    %24 = vector.extract_strided_slice %23 {offsets = [0, 0], sizes = [8, 384], strides = [1, 1]} : vector<8x512xf32> to vector<8x384xf32>
    %25 = arith.negf %24 : vector<8x384xf32>
    %26 = math.exp %25 : vector<8x384xf32>
    %cst_17 = arith.constant 1.000000e+00 : f32
    %27 = vector.broadcast %cst_17 : f32 to vector<8x384xf32>
    %28 = arith.addf %27, %26 : vector<8x384xf32>
    %29 = arith.divf %27, %28 : vector<8x384xf32>
    %30 = vector.extract_strided_slice %29 {offsets = [0, 0], sizes = [8, 128], strides = [1, 1]} : vector<8x384xf32> to vector<8x128xf32>
    %31 = vector.extract_strided_slice %29 {offsets = [0, 128], sizes = [8, 128], strides = [1, 1]} : vector<8x384xf32> to vector<8x128xf32>
    %32 = vector.extract_strided_slice %29 {offsets = [0, 256], sizes = [8, 128], strides = [1, 1]} : vector<8x384xf32> to vector<8x128xf32>
    %33 = vector.extract_strided_slice %23 {offsets = [0, 384], sizes = [8, 128], strides = [1, 1]} : vector<8x512xf32> to vector<8x128xf32>
    %34 = math.tanh %33 : vector<8x128xf32>
    %35 = arith.mulf %31, %3 : vector<8x128xf32>
    %36 = arith.mulf %30, %34 : vector<8x128xf32>
    %37 = arith.addf %35, %36 : vector<8x128xf32>
    %38 = math.tanh %37 : vector<8x128xf32>
    %39 = arith.mulf %32, %38 : vector<8x128xf32>
    %40 = arith.truncf %39 : vector<8x128xf32> to vector<8x128xbf16>
    %c0_18 = arith.constant 0 : index
    %c0_19 = arith.constant 0 : index
    %41 = vector.load %arg5[%c0_18, %c0_19] : memref<128x512xbf16, #tpu.memory_space<vmem>>, vector<128x512xbf16>
    %cst_20 = arith.constant dense<0.000000e+00> : vector<8x512xf32>
    %42 = tpu.matmul %40, %41, %cst_20 {dimension_numbers = #tpu.dot_dimension_numbers<[1], [0], [0], [1], [0, 0, 1, 1], [], []>} : vector<8x128xbf16>, vector<128x512xbf16>, vector<8x512xf32> -> vector<8x512xf32>
    %43 = arith.truncf %3 : vector<8x128xf32> to vector<8x128xbf16>
    %c0_21 = arith.constant 0 : index
    %c0_22 = arith.constant 0 : index
    %44 = vector.load %arg6[%c0_21, %c0_22] : memref<128x512xbf16, #tpu.memory_space<vmem>>, vector<128x512xbf16>
    %cst_23 = arith.constant dense<0.000000e+00> : vector<8x512xf32>
    %45 = tpu.matmul %43, %44, %cst_23 {dimension_numbers = #tpu.dot_dimension_numbers<[1], [0], [0], [1], [0, 0, 1, 1], [], []>} : vector<8x128xbf16>, vector<128x512xbf16>, vector<8x512xf32> -> vector<8x512xf32>
    %46 = arith.addf %42, %45 : vector<8x512xf32>
    %47 = arith.addf %46, %2 : vector<8x512xf32>
    %48 = vector.extract_strided_slice %47 {offsets = [0, 0], sizes = [8, 384], strides = [1, 1]} : vector<8x512xf32> to vector<8x384xf32>
    %49 = arith.negf %48 : vector<8x384xf32>
    %50 = math.exp %49 : vector<8x384xf32>
    %cst_24 = arith.constant 1.000000e+00 : f32
    %51 = vector.broadcast %cst_24 : f32 to vector<8x384xf32>
    %52 = arith.addf %51, %50 : vector<8x384xf32>
    %53 = arith.divf %51, %52 : vector<8x384xf32>
    %54 = vector.extract_strided_slice %53 {offsets = [0, 0], sizes = [8, 128], strides = [1, 1]} : vector<8x384xf32> to vector<8x128xf32>
    %55 = vector.extract_strided_slice %53 {offsets = [0, 128], sizes = [8, 128], strides = [1, 1]} : vector<8x384xf32> to vector<8x128xf32>
    %56 = vector.extract_strided_slice %53 {offsets = [0, 256], sizes = [8, 128], strides = [1, 1]} : vector<8x384xf32> to vector<8x128xf32>
    %57 = vector.extract_strided_slice %47 {offsets = [0, 384], sizes = [8, 128], strides = [1, 1]} : vector<8x512xf32> to vector<8x128xf32>
    %58 = math.tanh %57 : vector<8x128xf32>
    %59 = arith.mulf %55, %3 : vector<8x128xf32>
    %60 = arith.mulf %54, %58 : vector<8x128xf32>
    %61 = arith.addf %59, %60 : vector<8x128xf32>
    %62 = math.tanh %61 : vector<8x128xf32>
    %63 = arith.mulf %56, %62 : vector<8x128xf32>
    %c1_i32 = arith.constant 1 : i32
    %c8_i32_25 = arith.constant 8 : i32
    %64 = arith.muli %c1_i32, %c8_i32_25 : i32
    %65 = tpu.assume_multiple %64, 8 : i32
    %66 = arith.index_cast %65 : i32 to index
    %c0_26 = arith.constant 0 : index
    %67 = vector.load %arg11[%66, %c0_26] : memref<64x512xf32, #tpu.memory_space<vmem>>, vector<8x512xf32>
    %68 = arith.truncf %39 : vector<8x128xf32> to vector<8x128xbf16>
    %c0_27 = arith.constant 0 : index
    %c0_28 = arith.constant 0 : index
    %69 = vector.load %arg3[%c0_27, %c0_28] : memref<128x512xbf16, #tpu.memory_space<vmem>>, vector<128x512xbf16>
    %cst_29 = arith.constant dense<0.000000e+00> : vector<8x512xf32>
    %70 = tpu.matmul %68, %69, %cst_29 {dimension_numbers = #tpu.dot_dimension_numbers<[1], [0], [0], [1], [0, 0, 1, 1], [], []>} : vector<8x128xbf16>, vector<128x512xbf16>, vector<8x512xf32> -> vector<8x512xf32>
    %71 = arith.addf %67, %70 : vector<8x512xf32>
    %72 = vector.extract_strided_slice %71 {offsets = [0, 0], sizes = [8, 384], strides = [1, 1]} : vector<8x512xf32> to vector<8x384xf32>
    %73 = arith.negf %72 : vector<8x384xf32>
    %74 = math.exp %73 : vector<8x384xf32>
    %cst_30 = arith.constant 1.000000e+00 : f32
    %75 = vector.broadcast %cst_30 : f32 to vector<8x384xf32>
    %76 = arith.addf %75, %74 : vector<8x384xf32>
    %77 = arith.divf %75, %76 : vector<8x384xf32>
    %78 = vector.extract_strided_slice %77 {offsets = [0, 0], sizes = [8, 128], strides = [1, 1]} : vector<8x384xf32> to vector<8x128xf32>
    %79 = vector.extract_strided_slice %77 {offsets = [0, 128], sizes = [8, 128], strides = [1, 1]} : vector<8x384xf32> to vector<8x128xf32>
    %80 = vector.extract_strided_slice %77 {offsets = [0, 256], sizes = [8, 128], strides = [1, 1]} : vector<8x384xf32> to vector<8x128xf32>
    %81 = vector.extract_strided_slice %71 {offsets = [0, 384], sizes = [8, 128], strides = [1, 1]} : vector<8x512xf32> to vector<8x128xf32>
    %82 = math.tanh %81 : vector<8x128xf32>
    %83 = arith.mulf %79, %37 : vector<8x128xf32>
    %84 = arith.mulf %78, %82 : vector<8x128xf32>
    %85 = arith.addf %83, %84 : vector<8x128xf32>
    %86 = math.tanh %85 : vector<8x128xf32>
    %87 = arith.mulf %80, %86 : vector<8x128xf32>
    %88 = arith.truncf %87 : vector<8x128xf32> to vector<8x128xbf16>
    %c0_31 = arith.constant 0 : index
    %c0_32 = arith.constant 0 : index
    %89 = vector.load %arg5[%c0_31, %c0_32] : memref<128x512xbf16, #tpu.memory_space<vmem>>, vector<128x512xbf16>
    %cst_33 = arith.constant dense<0.000000e+00> : vector<8x512xf32>
    %90 = tpu.matmul %88, %89, %cst_33 {dimension_numbers = #tpu.dot_dimension_numbers<[1], [0], [0], [1], [0, 0, 1, 1], [], []>} : vector<8x128xbf16>, vector<128x512xbf16>, vector<8x512xf32> -> vector<8x512xf32>
    %91 = arith.truncf %63 : vector<8x128xf32> to vector<8x128xbf16>
    %c0_34 = arith.constant 0 : index
    %c0_35 = arith.constant 0 : index
    %92 = vector.load %arg6[%c0_34, %c0_35] : memref<128x512xbf16, #tpu.memory_space<vmem>>, vector<128x512xbf16>
    %cst_36 = arith.constant dense<0.000000e+00> : vector<8x512xf32>
    %93 = tpu.matmul %91, %92, %cst_36 {dimension_numbers = #tpu.dot_dimension_numbers<[1], [0], [0], [1], [0, 0, 1, 1], [], []>} : vector<8x128xbf16>, vector<128x512xbf16>, vector<8x512xf32> -> vector<8x512xf32>
    %94 = arith.addf %90, %93 : vector<8x512xf32>
    %95 = arith.addf %94, %2 : vector<8x512xf32>
    %96 = vector.extract_strided_slice %95 {offsets = [0, 0], sizes = [8, 384], strides = [1, 1]} : vector<8x512xf32> to vector<8x384xf32>
    %97 = arith.negf %96 : vector<8x384xf32>
    %98 = math.exp %97 : vector<8x384xf32>
    %cst_37 = arith.constant 1.000000e+00 : f32
    %99 = vector.broadcast %cst_37 : f32 to vector<8x384xf32>
    %100 = arith.addf %99, %98 : vector<8x384xf32>
    %101 = arith.divf %99, %100 : vector<8x384xf32>
    %102 = vector.extract_strided_slice %101 {offsets = [0, 0], sizes = [8, 128], strides = [1, 1]} : vector<8x384xf32> to vector<8x128xf32>
    %103 = vector.extract_strided_slice %101 {offsets = [0, 128], sizes = [8, 128], strides = [1, 1]} : vector<8x384xf32> to vector<8x128xf32>
    %104 = vector.extract_strided_slice %101 {offsets = [0, 256], sizes = [8, 128], strides = [1, 1]} : vector<8x384xf32> to vector<8x128xf32>
    %105 = vector.extract_strided_slice %95 {offsets = [0, 384], sizes = [8, 128], strides = [1, 1]} : vector<8x512xf32> to vector<8x128xf32>
    %106 = math.tanh %105 : vector<8x128xf32>
    %107 = arith.mulf %103, %61 : vector<8x128xf32>
    %108 = arith.mulf %102, %106 : vector<8x128xf32>
    %109 = arith.addf %107, %108 : vector<8x128xf32>
    %110 = math.tanh %109 : vector<8x128xf32>
    %111 = arith.mulf %104, %110 : vector<8x128xf32>
    %c2_i32 = arith.constant 2 : i32
    %c8_i32_38 = arith.constant 8 : i32
    %112 = arith.muli %c2_i32, %c8_i32_38 : i32
    %113 = tpu.assume_multiple %112, 8 : i32
    %114 = arith.index_cast %113 : i32 to index
    %c0_39 = arith.constant 0 : index
    %115 = vector.load %arg11[%114, %c0_39] : memref<64x512xf32, #tpu.memory_space<vmem>>, vector<8x512xf32>
    %116 = arith.truncf %87 : vector<8x128xf32> to vector<8x128xbf16>
    %c0_40 = arith.constant 0 : index
    %c0_41 = arith.constant 0 : index
    %117 = vector.load %arg3[%c0_40, %c0_41] : memref<128x512xbf16, #tpu.memory_space<vmem>>, vector<128x512xbf16>
    %cst_42 = arith.constant dense<0.000000e+00> : vector<8x512xf32>
    %118 = tpu.matmul %116, %117, %cst_42 {dimension_numbers = #tpu.dot_dimension_numbers<[1], [0], [0], [1], [0, 0, 1, 1], [], []>} : vector<8x128xbf16>, vector<128x512xbf16>, vector<8x512xf32> -> vector<8x512xf32>
    %119 = arith.addf %115, %118 : vector<8x512xf32>
    %120 = vector.extract_strided_slice %119 {offsets = [0, 0], sizes = [8, 384], strides = [1, 1]} : vector<8x512xf32> to vector<8x384xf32>
    %121 = arith.negf %120 : vector<8x384xf32>
    %122 = math.exp %121 : vector<8x384xf32>
    %cst_43 = arith.constant 1.000000e+00 : f32
    %123 = vector.broadcast %cst_43 : f32 to vector<8x384xf32>
    %124 = arith.addf %123, %122 : vector<8x384xf32>
    %125 = arith.divf %123, %124 : vector<8x384xf32>
    %126 = vector.extract_strided_slice %125 {offsets = [0, 0], sizes = [8, 128], strides = [1, 1]} : vector<8x384xf32> to vector<8x128xf32>
    %127 = vector.extract_strided_slice %125 {offsets = [0, 128], sizes = [8, 128], strides = [1, 1]} : vector<8x384xf32> to vector<8x128xf32>
    %128 = vector.extract_strided_slice %125 {offsets = [0, 256], sizes = [8, 128], strides = [1, 1]} : vector<8x384xf32> to vector<8x128xf32>
    %129 = vector.extract_strided_slice %119 {offsets = [0, 384], sizes = [8, 128], strides = [1, 1]} : vector<8x512xf32> to vector<8x128xf32>
    %130 = math.tanh %129 : vector<8x128xf32>
    %131 = arith.mulf %127, %85 : vector<8x128xf32>
    %132 = arith.mulf %126, %130 : vector<8x128xf32>
    %133 = arith.addf %131, %132 : vector<8x128xf32>
    %134 = math.tanh %133 : vector<8x128xf32>
    %135 = arith.mulf %128, %134 : vector<8x128xf32>
    %136 = arith.truncf %135 : vector<8x128xf32> to vector<8x128xbf16>
    %c0_44 = arith.constant 0 : index
    %c0_45 = arith.constant 0 : index
    %137 = vector.load %arg5[%c0_44, %c0_45] : memref<128x512xbf16, #tpu.memory_space<vmem>>, vector<128x512xbf16>
    %cst_46 = arith.constant dense<0.000000e+00> : vector<8x512xf32>
    %138 = tpu.matmul %136, %137, %cst_46 {dimension_numbers = #tpu.dot_dimension_numbers<[1], [0], [0], [1], [0, 0, 1, 1], [], []>} : vector<8x128xbf16>, vector<128x512xbf16>, vector<8x512xf32> -> vector<8x512xf32>
    %139 = arith.truncf %111 : vector<8x128xf32> to vector<8x128xbf16>
    %c0_47 = arith.constant 0 : index
    %c0_48 = arith.constant 0 : index
    %140 = vector.load %arg6[%c0_47, %c0_48] : memref<128x512xbf16, #tpu.memory_space<vmem>>, vector<128x512xbf16>
    %cst_49 = arith.constant dense<0.000000e+00> : vector<8x512xf32>
    %141 = tpu.matmul %139, %140, %cst_49 {dimension_numbers = #tpu.dot_dimension_numbers<[1], [0], [0], [1], [0, 0, 1, 1], [], []>} : vector<8x128xbf16>, vector<128x512xbf16>, vector<8x512xf32> -> vector<8x512xf32>
    %142 = arith.addf %138, %141 : vector<8x512xf32>
    %143 = arith.addf %142, %2 : vector<8x512xf32>
    %144 = vector.extract_strided_slice %143 {offsets = [0, 0], sizes = [8, 384], strides = [1, 1]} : vector<8x512xf32> to vector<8x384xf32>
    %145 = arith.negf %144 : vector<8x384xf32>
    %146 = math.exp %145 : vector<8x384xf32>
    %cst_50 = arith.constant 1.000000e+00 : f32
    %147 = vector.broadcast %cst_50 : f32 to vector<8x384xf32>
    %148 = arith.addf %147, %146 : vector<8x384xf32>
    %149 = arith.divf %147, %148 : vector<8x384xf32>
    %150 = vector.extract_strided_slice %149 {offsets = [0, 0], sizes = [8, 128], strides = [1, 1]} : vector<8x384xf32> to vector<8x128xf32>
    %151 = vector.extract_strided_slice %149 {offsets = [0, 128], sizes = [8, 128], strides = [1, 1]} : vector<8x384xf32> to vector<8x128xf32>
    %152 = vector.extract_strided_slice %149 {offsets = [0, 256], sizes = [8, 128], strides = [1, 1]} : vector<8x384xf32> to vector<8x128xf32>
    %153 = vector.extract_strided_slice %143 {offsets = [0, 384], sizes = [8, 128], strides = [1, 1]} : vector<8x512xf32> to vector<8x128xf32>
    %154 = math.tanh %153 : vector<8x128xf32>
    %155 = arith.mulf %151, %109 : vector<8x128xf32>
    %156 = arith.mulf %150, %154 : vector<8x128xf32>
    %157 = arith.addf %155, %156 : vector<8x128xf32>
    %158 = math.tanh %157 : vector<8x128xf32>
    %159 = arith.mulf %152, %158 : vector<8x128xf32>
    %c3_i32 = arith.constant 3 : i32
    %c8_i32_51 = arith.constant 8 : i32
    %160 = arith.muli %c3_i32, %c8_i32_51 : i32
    %161 = tpu.assume_multiple %160, 8 : i32
    %162 = arith.index_cast %161 : i32 to index
    %c0_52 = arith.constant 0 : index
    %163 = vector.load %arg11[%162, %c0_52] : memref<64x512xf32, #tpu.memory_space<vmem>>, vector<8x512xf32>
    %164 = arith.truncf %135 : vector<8x128xf32> to vector<8x128xbf16>
    %c0_53 = arith.constant 0 : index
    %c0_54 = arith.constant 0 : index
    %165 = vector.load %arg3[%c0_53, %c0_54] : memref<128x512xbf16, #tpu.memory_space<vmem>>, vector<128x512xbf16>
    %cst_55 = arith.constant dense<0.000000e+00> : vector<8x512xf32>
    %166 = tpu.matmul %164, %165, %cst_55 {dimension_numbers = #tpu.dot_dimension_numbers<[1], [0], [0], [1], [0, 0, 1, 1], [], []>} : vector<8x128xbf16>, vector<128x512xbf16>, vector<8x512xf32> -> vector<8x512xf32>
    %167 = arith.addf %163, %166 : vector<8x512xf32>
    %168 = vector.extract_strided_slice %167 {offsets = [0, 0], sizes = [8, 384], strides = [1, 1]} : vector<8x512xf32> to vector<8x384xf32>
    %169 = arith.negf %168 : vector<8x384xf32>
    %170 = math.exp %169 : vector<8x384xf32>
    %cst_56 = arith.constant 1.000000e+00 : f32
    %171 = vector.broadcast %cst_56 : f32 to vector<8x384xf32>
    %172 = arith.addf %171, %170 : vector<8x384xf32>
    %173 = arith.divf %171, %172 : vector<8x384xf32>
    %174 = vector.extract_strided_slice %173 {offsets = [0, 0], sizes = [8, 128], strides = [1, 1]} : vector<8x384xf32> to vector<8x128xf32>
    %175 = vector.extract_strided_slice %173 {offsets = [0, 128], sizes = [8, 128], strides = [1, 1]} : vector<8x384xf32> to vector<8x128xf32>
    %176 = vector.extract_strided_slice %173 {offsets = [0, 256], sizes = [8, 128], strides = [1, 1]} : vector<8x384xf32> to vector<8x128xf32>
    %177 = vector.extract_strided_slice %167 {offsets = [0, 384], sizes = [8, 128], strides = [1, 1]} : vector<8x512xf32> to vector<8x128xf32>
    %178 = math.tanh %177 : vector<8x128xf32>
    %179 = arith.mulf %175, %133 : vector<8x128xf32>
    %180 = arith.mulf %174, %178 : vector<8x128xf32>
    %181 = arith.addf %179, %180 : vector<8x128xf32>
    %182 = math.tanh %181 : vector<8x128xf32>
    %183 = arith.mulf %176, %182 : vector<8x128xf32>
    %184 = arith.truncf %183 : vector<8x128xf32> to vector<8x128xbf16>
    %c0_57 = arith.constant 0 : index
    %c0_58 = arith.constant 0 : index
    %185 = vector.load %arg5[%c0_57, %c0_58] : memref<128x512xbf16, #tpu.memory_space<vmem>>, vector<128x512xbf16>
    %cst_59 = arith.constant dense<0.000000e+00> : vector<8x512xf32>
    %186 = tpu.matmul %184, %185, %cst_59 {dimension_numbers = #tpu.dot_dimension_numbers<[1], [0], [0], [1], [0, 0, 1, 1], [], []>} : vector<8x128xbf16>, vector<128x512xbf16>, vector<8x512xf32> -> vector<8x512xf32>
    %187 = arith.truncf %159 : vector<8x128xf32> to vector<8x128xbf16>
    %c0_60 = arith.constant 0 : index
    %c0_61 = arith.constant 0 : index
    %188 = vector.load %arg6[%c0_60, %c0_61] : memref<128x512xbf16, #tpu.memory_space<vmem>>, vector<128x512xbf16>
    %cst_62 = arith.constant dense<0.000000e+00> : vector<8x512xf32>
    %189 = tpu.matmul %187, %188, %cst_62 {dimension_numbers = #tpu.dot_dimension_numbers<[1], [0], [0], [1], [0, 0, 1, 1], [], []>} : vector<8x128xbf16>, vector<128x512xbf16>, vector<8x512xf32> -> vector<8x512xf32>
    %190 = arith.addf %186, %189 : vector<8x512xf32>
    %191 = arith.addf %190, %2 : vector<8x512xf32>
    %192 = vector.extract_strided_slice %191 {offsets = [0, 0], sizes = [8, 384], strides = [1, 1]} : vector<8x512xf32> to vector<8x384xf32>
    %193 = arith.negf %192 : vector<8x384xf32>
    %194 = math.exp %193 : vector<8x384xf32>
    %cst_63 = arith.constant 1.000000e+00 : f32
    %195 = vector.broadcast %cst_63 : f32 to vector<8x384xf32>
    %196 = arith.addf %195, %194 : vector<8x384xf32>
    %197 = arith.divf %195, %196 : vector<8x384xf32>
    %198 = vector.extract_strided_slice %197 {offsets = [0, 0], sizes = [8, 128], strides = [1, 1]} : vector<8x384xf32> to vector<8x128xf32>
    %199 = vector.extract_strided_slice %197 {offsets = [0, 128], sizes = [8, 128], strides = [1, 1]} : vector<8x384xf32> to vector<8x128xf32>
    %200 = vector.extract_strided_slice %197 {offsets = [0, 256], sizes = [8, 128], strides = [1, 1]} : vector<8x384xf32> to vector<8x128xf32>
    %201 = vector.extract_strided_slice %191 {offsets = [0, 384], sizes = [8, 128], strides = [1, 1]} : vector<8x512xf32> to vector<8x128xf32>
    %202 = math.tanh %201 : vector<8x128xf32>
    %203 = arith.mulf %199, %157 : vector<8x128xf32>
    %204 = arith.mulf %198, %202 : vector<8x128xf32>
    %205 = arith.addf %203, %204 : vector<8x128xf32>
    %206 = math.tanh %205 : vector<8x128xf32>
    %207 = arith.mulf %200, %206 : vector<8x128xf32>
    %c4_i32 = arith.constant 4 : i32
    %c8_i32_64 = arith.constant 8 : i32
    %208 = arith.muli %c4_i32, %c8_i32_64 : i32
    %209 = tpu.assume_multiple %208, 8 : i32
    %210 = arith.index_cast %209 : i32 to index
    %c0_65 = arith.constant 0 : index
    %211 = vector.load %arg11[%210, %c0_65] : memref<64x512xf32, #tpu.memory_space<vmem>>, vector<8x512xf32>
    %212 = arith.truncf %183 : vector<8x128xf32> to vector<8x128xbf16>
    %c0_66 = arith.constant 0 : index
    %c0_67 = arith.constant 0 : index
    %213 = vector.load %arg3[%c0_66, %c0_67] : memref<128x512xbf16, #tpu.memory_space<vmem>>, vector<128x512xbf16>
    %cst_68 = arith.constant dense<0.000000e+00> : vector<8x512xf32>
    %214 = tpu.matmul %212, %213, %cst_68 {dimension_numbers = #tpu.dot_dimension_numbers<[1], [0], [0], [1], [0, 0, 1, 1], [], []>} : vector<8x128xbf16>, vector<128x512xbf16>, vector<8x512xf32> -> vector<8x512xf32>
    %215 = arith.addf %211, %214 : vector<8x512xf32>
    %216 = vector.extract_strided_slice %215 {offsets = [0, 0], sizes = [8, 384], strides = [1, 1]} : vector<8x512xf32> to vector<8x384xf32>
    %217 = arith.negf %216 : vector<8x384xf32>
    %218 = math.exp %217 : vector<8x384xf32>
    %cst_69 = arith.constant 1.000000e+00 : f32
    %219 = vector.broadcast %cst_69 : f32 to vector<8x384xf32>
    %220 = arith.addf %219, %218 : vector<8x384xf32>
    %221 = arith.divf %219, %220 : vector<8x384xf32>
    %222 = vector.extract_strided_slice %221 {offsets = [0, 0], sizes = [8, 128], strides = [1, 1]} : vector<8x384xf32> to vector<8x128xf32>
    %223 = vector.extract_strided_slice %221 {offsets = [0, 128], sizes = [8, 128], strides = [1, 1]} : vector<8x384xf32> to vector<8x128xf32>
    %224 = vector.extract_strided_slice %221 {offsets = [0, 256], sizes = [8, 128], strides = [1, 1]} : vector<8x384xf32> to vector<8x128xf32>
    %225 = vector.extract_strided_slice %215 {offsets = [0, 384], sizes = [8, 128], strides = [1, 1]} : vector<8x512xf32> to vector<8x128xf32>
    %226 = math.tanh %225 : vector<8x128xf32>
    %227 = arith.mulf %223, %181 : vector<8x128xf32>
    %228 = arith.mulf %222, %226 : vector<8x128xf32>
    %229 = arith.addf %227, %228 : vector<8x128xf32>
    %230 = math.tanh %229 : vector<8x128xf32>
    %231 = arith.mulf %224, %230 : vector<8x128xf32>
    %232 = arith.truncf %231 : vector<8x128xf32> to vector<8x128xbf16>
    %c0_70 = arith.constant 0 : index
    %c0_71 = arith.constant 0 : index
    %233 = vector.load %arg5[%c0_70, %c0_71] : memref<128x512xbf16, #tpu.memory_space<vmem>>, vector<128x512xbf16>
    %cst_72 = arith.constant dense<0.000000e+00> : vector<8x512xf32>
    %234 = tpu.matmul %232, %233, %cst_72 {dimension_numbers = #tpu.dot_dimension_numbers<[1], [0], [0], [1], [0, 0, 1, 1], [], []>} : vector<8x128xbf16>, vector<128x512xbf16>, vector<8x512xf32> -> vector<8x512xf32>
    %235 = arith.truncf %207 : vector<8x128xf32> to vector<8x128xbf16>
    %c0_73 = arith.constant 0 : index
    %c0_74 = arith.constant 0 : index
    %236 = vector.load %arg6[%c0_73, %c0_74] : memref<128x512xbf16, #tpu.memory_space<vmem>>, vector<128x512xbf16>
    %cst_75 = arith.constant dense<0.000000e+00> : vector<8x512xf32>
    %237 = tpu.matmul %235, %236, %cst_75 {dimension_numbers = #tpu.dot_dimension_numbers<[1], [0], [0], [1], [0, 0, 1, 1], [], []>} : vector<8x128xbf16>, vector<128x512xbf16>, vector<8x512xf32> -> vector<8x512xf32>
    %238 = arith.addf %234, %237 : vector<8x512xf32>
    %239 = arith.addf %238, %2 : vector<8x512xf32>
    %240 = vector.extract_strided_slice %239 {offsets = [0, 0], sizes = [8, 384], strides = [1, 1]} : vector<8x512xf32> to vector<8x384xf32>
    %241 = arith.negf %240 : vector<8x384xf32>
    %242 = math.exp %241 : vector<8x384xf32>
    %cst_76 = arith.constant 1.000000e+00 : f32
    %243 = vector.broadcast %cst_76 : f32 to vector<8x384xf32>
    %244 = arith.addf %243, %242 : vector<8x384xf32>
    %245 = arith.divf %243, %244 : vector<8x384xf32>
    %246 = vector.extract_strided_slice %245 {offsets = [0, 0], sizes = [8, 128], strides = [1, 1]} : vector<8x384xf32> to vector<8x128xf32>
    %247 = vector.extract_strided_slice %245 {offsets = [0, 128], sizes = [8, 128], strides = [1, 1]} : vector<8x384xf32> to vector<8x128xf32>
    %248 = vector.extract_strided_slice %245 {offsets = [0, 256], sizes = [8, 128], strides = [1, 1]} : vector<8x384xf32> to vector<8x128xf32>
    %249 = vector.extract_strided_slice %239 {offsets = [0, 384], sizes = [8, 128], strides = [1, 1]} : vector<8x512xf32> to vector<8x128xf32>
    %250 = math.tanh %249 : vector<8x128xf32>
    %251 = arith.mulf %247, %205 : vector<8x128xf32>
    %252 = arith.mulf %246, %250 : vector<8x128xf32>
    %253 = arith.addf %251, %252 : vector<8x128xf32>
    %254 = math.tanh %253 : vector<8x128xf32>
    %255 = arith.mulf %248, %254 : vector<8x128xf32>
    %c5_i32 = arith.constant 5 : i32
    %c8_i32_77 = arith.constant 8 : i32
    %256 = arith.muli %c5_i32, %c8_i32_77 : i32
    %257 = tpu.assume_multiple %256, 8 : i32
    %258 = arith.index_cast %257 : i32 to index
    %c0_78 = arith.constant 0 : index
    %259 = vector.load %arg11[%258, %c0_78] : memref<64x512xf32, #tpu.memory_space<vmem>>, vector<8x512xf32>
    %260 = arith.truncf %231 : vector<8x128xf32> to vector<8x128xbf16>
    %c0_79 = arith.constant 0 : index
    %c0_80 = arith.constant 0 : index
    %261 = vector.load %arg3[%c0_79, %c0_80] : memref<128x512xbf16, #tpu.memory_space<vmem>>, vector<128x512xbf16>
    %cst_81 = arith.constant dense<0.000000e+00> : vector<8x512xf32>
    %262 = tpu.matmul %260, %261, %cst_81 {dimension_numbers = #tpu.dot_dimension_numbers<[1], [0], [0], [1], [0, 0, 1, 1], [], []>} : vector<8x128xbf16>, vector<128x512xbf16>, vector<8x512xf32> -> vector<8x512xf32>
    %263 = arith.addf %259, %262 : vector<8x512xf32>
    %264 = vector.extract_strided_slice %263 {offsets = [0, 0], sizes = [8, 384], strides = [1, 1]} : vector<8x512xf32> to vector<8x384xf32>
    %265 = arith.negf %264 : vector<8x384xf32>
    %266 = math.exp %265 : vector<8x384xf32>
    %cst_82 = arith.constant 1.000000e+00 : f32
    %267 = vector.broadcast %cst_82 : f32 to vector<8x384xf32>
    %268 = arith.addf %267, %266 : vector<8x384xf32>
    %269 = arith.divf %267, %268 : vector<8x384xf32>
    %270 = vector.extract_strided_slice %269 {offsets = [0, 0], sizes = [8, 128], strides = [1, 1]} : vector<8x384xf32> to vector<8x128xf32>
    %271 = vector.extract_strided_slice %269 {offsets = [0, 128], sizes = [8, 128], strides = [1, 1]} : vector<8x384xf32> to vector<8x128xf32>
    %272 = vector.extract_strided_slice %269 {offsets = [0, 256], sizes = [8, 128], strides = [1, 1]} : vector<8x384xf32> to vector<8x128xf32>
    %273 = vector.extract_strided_slice %263 {offsets = [0, 384], sizes = [8, 128], strides = [1, 1]} : vector<8x512xf32> to vector<8x128xf32>
    %274 = math.tanh %273 : vector<8x128xf32>
    %275 = arith.mulf %271, %229 : vector<8x128xf32>
    %276 = arith.mulf %270, %274 : vector<8x128xf32>
    %277 = arith.addf %275, %276 : vector<8x128xf32>
    %278 = math.tanh %277 : vector<8x128xf32>
    %279 = arith.mulf %272, %278 : vector<8x128xf32>
    %280 = arith.truncf %279 : vector<8x128xf32> to vector<8x128xbf16>
    %c0_83 = arith.constant 0 : index
    %c0_84 = arith.constant 0 : index
    %281 = vector.load %arg5[%c0_83, %c0_84] : memref<128x512xbf16, #tpu.memory_space<vmem>>, vector<128x512xbf16>
    %cst_85 = arith.constant dense<0.000000e+00> : vector<8x512xf32>
    %282 = tpu.matmul %280, %281, %cst_85 {dimension_numbers = #tpu.dot_dimension_numbers<[1], [0], [0], [1], [0, 0, 1, 1], [], []>} : vector<8x128xbf16>, vector<128x512xbf16>, vector<8x512xf32> -> vector<8x512xf32>
    %283 = arith.truncf %255 : vector<8x128xf32> to vector<8x128xbf16>
    %c0_86 = arith.constant 0 : index
    %c0_87 = arith.constant 0 : index
    %284 = vector.load %arg6[%c0_86, %c0_87] : memref<128x512xbf16, #tpu.memory_space<vmem>>, vector<128x512xbf16>
    %cst_88 = arith.constant dense<0.000000e+00> : vector<8x512xf32>
    %285 = tpu.matmul %283, %284, %cst_88 {dimension_numbers = #tpu.dot_dimension_numbers<[1], [0], [0], [1], [0, 0, 1, 1], [], []>} : vector<8x128xbf16>, vector<128x512xbf16>, vector<8x512xf32> -> vector<8x512xf32>
    %286 = arith.addf %282, %285 : vector<8x512xf32>
    %287 = arith.addf %286, %2 : vector<8x512xf32>
    %288 = vector.extract_strided_slice %287 {offsets = [0, 0], sizes = [8, 384], strides = [1, 1]} : vector<8x512xf32> to vector<8x384xf32>
    %289 = arith.negf %288 : vector<8x384xf32>
    %290 = math.exp %289 : vector<8x384xf32>
    %cst_89 = arith.constant 1.000000e+00 : f32
    %291 = vector.broadcast %cst_89 : f32 to vector<8x384xf32>
    %292 = arith.addf %291, %290 : vector<8x384xf32>
    %293 = arith.divf %291, %292 : vector<8x384xf32>
    %294 = vector.extract_strided_slice %293 {offsets = [0, 0], sizes = [8, 128], strides = [1, 1]} : vector<8x384xf32> to vector<8x128xf32>
    %295 = vector.extract_strided_slice %293 {offsets = [0, 128], sizes = [8, 128], strides = [1, 1]} : vector<8x384xf32> to vector<8x128xf32>
    %296 = vector.extract_strided_slice %293 {offsets = [0, 256], sizes = [8, 128], strides = [1, 1]} : vector<8x384xf32> to vector<8x128xf32>
    %297 = vector.extract_strided_slice %287 {offsets = [0, 384], sizes = [8, 128], strides = [1, 1]} : vector<8x512xf32> to vector<8x128xf32>
    %298 = math.tanh %297 : vector<8x128xf32>
    %299 = arith.mulf %295, %253 : vector<8x128xf32>
    %300 = arith.mulf %294, %298 : vector<8x128xf32>
    %301 = arith.addf %299, %300 : vector<8x128xf32>
    %302 = math.tanh %301 : vector<8x128xf32>
    %303 = arith.mulf %296, %302 : vector<8x128xf32>
    %c6_i32 = arith.constant 6 : i32
    %c8_i32_90 = arith.constant 8 : i32
    %304 = arith.muli %c6_i32, %c8_i32_90 : i32
    %305 = tpu.assume_multiple %304, 8 : i32
    %306 = arith.index_cast %305 : i32 to index
    %c0_91 = arith.constant 0 : index
    %307 = vector.load %arg11[%306, %c0_91] : memref<64x512xf32, #tpu.memory_space<vmem>>, vector<8x512xf32>
    %308 = arith.truncf %279 : vector<8x128xf32> to vector<8x128xbf16>
    %c0_92 = arith.constant 0 : index
    %c0_93 = arith.constant 0 : index
    %309 = vector.load %arg3[%c0_92, %c0_93] : memref<128x512xbf16, #tpu.memory_space<vmem>>, vector<128x512xbf16>
    %cst_94 = arith.constant dense<0.000000e+00> : vector<8x512xf32>
    %310 = tpu.matmul %308, %309, %cst_94 {dimension_numbers = #tpu.dot_dimension_numbers<[1], [0], [0], [1], [0, 0, 1, 1], [], []>} : vector<8x128xbf16>, vector<128x512xbf16>, vector<8x512xf32> -> vector<8x512xf32>
    %311 = arith.addf %307, %310 : vector<8x512xf32>
    %312 = vector.extract_strided_slice %311 {offsets = [0, 0], sizes = [8, 384], strides = [1, 1]} : vector<8x512xf32> to vector<8x384xf32>
    %313 = arith.negf %312 : vector<8x384xf32>
    %314 = math.exp %313 : vector<8x384xf32>
    %cst_95 = arith.constant 1.000000e+00 : f32
    %315 = vector.broadcast %cst_95 : f32 to vector<8x384xf32>
    %316 = arith.addf %315, %314 : vector<8x384xf32>
    %317 = arith.divf %315, %316 : vector<8x384xf32>
    %318 = vector.extract_strided_slice %317 {offsets = [0, 0], sizes = [8, 128], strides = [1, 1]} : vector<8x384xf32> to vector<8x128xf32>
    %319 = vector.extract_strided_slice %317 {offsets = [0, 128], sizes = [8, 128], strides = [1, 1]} : vector<8x384xf32> to vector<8x128xf32>
    %320 = vector.extract_strided_slice %317 {offsets = [0, 256], sizes = [8, 128], strides = [1, 1]} : vector<8x384xf32> to vector<8x128xf32>
    %321 = vector.extract_strided_slice %311 {offsets = [0, 384], sizes = [8, 128], strides = [1, 1]} : vector<8x512xf32> to vector<8x128xf32>
    %322 = math.tanh %321 : vector<8x128xf32>
    %323 = arith.mulf %319, %277 : vector<8x128xf32>
    %324 = arith.mulf %318, %322 : vector<8x128xf32>
    %325 = arith.addf %323, %324 : vector<8x128xf32>
    %326 = math.tanh %325 : vector<8x128xf32>
    %327 = arith.mulf %320, %326 : vector<8x128xf32>
    %328 = arith.truncf %327 : vector<8x128xf32> to vector<8x128xbf16>
    %c0_96 = arith.constant 0 : index
    %c0_97 = arith.constant 0 : index
    %329 = vector.load %arg5[%c0_96, %c0_97] : memref<128x512xbf16, #tpu.memory_space<vmem>>, vector<128x512xbf16>
    %cst_98 = arith.constant dense<0.000000e+00> : vector<8x512xf32>
    %330 = tpu.matmul %328, %329, %cst_98 {dimension_numbers = #tpu.dot_dimension_numbers<[1], [0], [0], [1], [0, 0, 1, 1], [], []>} : vector<8x128xbf16>, vector<128x512xbf16>, vector<8x512xf32> -> vector<8x512xf32>
    %331 = arith.truncf %303 : vector<8x128xf32> to vector<8x128xbf16>
    %c0_99 = arith.constant 0 : index
    %c0_100 = arith.constant 0 : index
    %332 = vector.load %arg6[%c0_99, %c0_100] : memref<128x512xbf16, #tpu.memory_space<vmem>>, vector<128x512xbf16>
    %cst_101 = arith.constant dense<0.000000e+00> : vector<8x512xf32>
    %333 = tpu.matmul %331, %332, %cst_101 {dimension_numbers = #tpu.dot_dimension_numbers<[1], [0], [0], [1], [0, 0, 1, 1], [], []>} : vector<8x128xbf16>, vector<128x512xbf16>, vector<8x512xf32> -> vector<8x512xf32>
    %334 = arith.addf %330, %333 : vector<8x512xf32>
    %335 = arith.addf %334, %2 : vector<8x512xf32>
    %336 = vector.extract_strided_slice %335 {offsets = [0, 0], sizes = [8, 384], strides = [1, 1]} : vector<8x512xf32> to vector<8x384xf32>
    %337 = arith.negf %336 : vector<8x384xf32>
    %338 = math.exp %337 : vector<8x384xf32>
    %cst_102 = arith.constant 1.000000e+00 : f32
    %339 = vector.broadcast %cst_102 : f32 to vector<8x384xf32>
    %340 = arith.addf %339, %338 : vector<8x384xf32>
    %341 = arith.divf %339, %340 : vector<8x384xf32>
    %342 = vector.extract_strided_slice %341 {offsets = [0, 0], sizes = [8, 128], strides = [1, 1]} : vector<8x384xf32> to vector<8x128xf32>
    %343 = vector.extract_strided_slice %341 {offsets = [0, 128], sizes = [8, 128], strides = [1, 1]} : vector<8x384xf32> to vector<8x128xf32>
    %344 = vector.extract_strided_slice %341 {offsets = [0, 256], sizes = [8, 128], strides = [1, 1]} : vector<8x384xf32> to vector<8x128xf32>
    %345 = vector.extract_strided_slice %335 {offsets = [0, 384], sizes = [8, 128], strides = [1, 1]} : vector<8x512xf32> to vector<8x128xf32>
    %346 = math.tanh %345 : vector<8x128xf32>
    %347 = arith.mulf %343, %301 : vector<8x128xf32>
    %348 = arith.mulf %342, %346 : vector<8x128xf32>
    %349 = arith.addf %347, %348 : vector<8x128xf32>
    %350 = math.tanh %349 : vector<8x128xf32>
    %351 = arith.mulf %344, %350 : vector<8x128xf32>
    %c7_i32 = arith.constant 7 : i32
    %c8_i32_103 = arith.constant 8 : i32
    %352 = arith.muli %c7_i32, %c8_i32_103 : i32
    %353 = tpu.assume_multiple %352, 8 : i32
    %354 = arith.index_cast %353 : i32 to index
    %c0_104 = arith.constant 0 : index
    %355 = vector.load %arg11[%354, %c0_104] : memref<64x512xf32, #tpu.memory_space<vmem>>, vector<8x512xf32>
    %356 = arith.truncf %327 : vector<8x128xf32> to vector<8x128xbf16>
    %c0_105 = arith.constant 0 : index
    %c0_106 = arith.constant 0 : index
    %357 = vector.load %arg3[%c0_105, %c0_106] : memref<128x512xbf16, #tpu.memory_space<vmem>>, vector<128x512xbf16>
    %cst_107 = arith.constant dense<0.000000e+00> : vector<8x512xf32>
    %358 = tpu.matmul %356, %357, %cst_107 {dimension_numbers = #tpu.dot_dimension_numbers<[1], [0], [0], [1], [0, 0, 1, 1], [], []>} : vector<8x128xbf16>, vector<128x512xbf16>, vector<8x512xf32> -> vector<8x512xf32>
    %359 = arith.addf %355, %358 : vector<8x512xf32>
    %360 = vector.extract_strided_slice %359 {offsets = [0, 0], sizes = [8, 384], strides = [1, 1]} : vector<8x512xf32> to vector<8x384xf32>
    %361 = arith.negf %360 : vector<8x384xf32>
    %362 = math.exp %361 : vector<8x384xf32>
    %cst_108 = arith.constant 1.000000e+00 : f32
    %363 = vector.broadcast %cst_108 : f32 to vector<8x384xf32>
    %364 = arith.addf %363, %362 : vector<8x384xf32>
    %365 = arith.divf %363, %364 : vector<8x384xf32>
    %366 = vector.extract_strided_slice %365 {offsets = [0, 0], sizes = [8, 128], strides = [1, 1]} : vector<8x384xf32> to vector<8x128xf32>
    %367 = vector.extract_strided_slice %365 {offsets = [0, 128], sizes = [8, 128], strides = [1, 1]} : vector<8x384xf32> to vector<8x128xf32>
    %368 = vector.extract_strided_slice %365 {offsets = [0, 256], sizes = [8, 128], strides = [1, 1]} : vector<8x384xf32> to vector<8x128xf32>
    %369 = vector.extract_strided_slice %359 {offsets = [0, 384], sizes = [8, 128], strides = [1, 1]} : vector<8x512xf32> to vector<8x128xf32>
    %370 = math.tanh %369 : vector<8x128xf32>
    %371 = arith.mulf %367, %325 : vector<8x128xf32>
    %372 = arith.mulf %366, %370 : vector<8x128xf32>
    %373 = arith.addf %371, %372 : vector<8x128xf32>
    %374 = math.tanh %373 : vector<8x128xf32>
    %375 = arith.mulf %368, %374 : vector<8x128xf32>
    %376 = arith.truncf %375 : vector<8x128xf32> to vector<8x128xbf16>
    %c0_109 = arith.constant 0 : index
    %c0_110 = arith.constant 0 : index
    %377 = vector.load %arg5[%c0_109, %c0_110] : memref<128x512xbf16, #tpu.memory_space<vmem>>, vector<128x512xbf16>
    %cst_111 = arith.constant dense<0.000000e+00> : vector<8x512xf32>
    %378 = tpu.matmul %376, %377, %cst_111 {dimension_numbers = #tpu.dot_dimension_numbers<[1], [0], [0], [1], [0, 0, 1, 1], [], []>} : vector<8x128xbf16>, vector<128x512xbf16>, vector<8x512xf32> -> vector<8x512xf32>
    %379 = arith.truncf %351 : vector<8x128xf32> to vector<8x128xbf16>
    %c0_112 = arith.constant 0 : index
    %c0_113 = arith.constant 0 : index
    %380 = vector.load %arg6[%c0_112, %c0_113] : memref<128x512xbf16, #tpu.memory_space<vmem>>, vector<128x512xbf16>
    %cst_114 = arith.constant dense<0.000000e+00> : vector<8x512xf32>
    %381 = tpu.matmul %379, %380, %cst_114 {dimension_numbers = #tpu.dot_dimension_numbers<[1], [0], [0], [1], [0, 0, 1, 1], [], []>} : vector<8x128xbf16>, vector<128x512xbf16>, vector<8x512xf32> -> vector<8x512xf32>
    %382 = arith.addf %378, %381 : vector<8x512xf32>
    %383 = arith.addf %382, %2 : vector<8x512xf32>
    %384 = vector.extract_strided_slice %383 {offsets = [0, 0], sizes = [8, 384], strides = [1, 1]} : vector<8x512xf32> to vector<8x384xf32>
    %385 = arith.negf %384 : vector<8x384xf32>
    %386 = math.exp %385 : vector<8x384xf32>
    %cst_115 = arith.constant 1.000000e+00 : f32
    %387 = vector.broadcast %cst_115 : f32 to vector<8x384xf32>
    %388 = arith.addf %387, %386 : vector<8x384xf32>
    %389 = arith.divf %387, %388 : vector<8x384xf32>
    %390 = vector.extract_strided_slice %389 {offsets = [0, 0], sizes = [8, 128], strides = [1, 1]} : vector<8x384xf32> to vector<8x128xf32>
    %391 = vector.extract_strided_slice %389 {offsets = [0, 128], sizes = [8, 128], strides = [1, 1]} : vector<8x384xf32> to vector<8x128xf32>
    %392 = vector.extract_strided_slice %389 {offsets = [0, 256], sizes = [8, 128], strides = [1, 1]} : vector<8x384xf32> to vector<8x128xf32>
    %393 = vector.extract_strided_slice %383 {offsets = [0, 384], sizes = [8, 128], strides = [1, 1]} : vector<8x512xf32> to vector<8x128xf32>
    %394 = math.tanh %393 : vector<8x128xf32>
    %395 = arith.mulf %391, %349 : vector<8x128xf32>
    %396 = arith.mulf %390, %394 : vector<8x128xf32>
    %397 = arith.addf %395, %396 : vector<8x128xf32>
    %398 = math.tanh %397 : vector<8x128xf32>
    %399 = arith.mulf %392, %398 : vector<8x128xf32>
    %c8_i32_116 = arith.constant 8 : i32
    %c1_i32_117 = arith.constant 1 : i32
    %400 = arith.truncf %399 : vector<8x128xf32> to vector<8x128xbf16>
    %c0_118 = arith.constant 0 : index
    %c0_119 = arith.constant 0 : index
    %401 = vector.load %arg8[%c0_118, %c0_119] : memref<128x128xbf16, #tpu.memory_space<vmem>>, vector<128x128xbf16>
    %cst_120 = arith.constant dense<0.000000e+00> : vector<8x128xf32>
    %402 = tpu.matmul %400, %401, %cst_120 {dimension_numbers = #tpu.dot_dimension_numbers<[1], [0], [0], [1], [0, 0, 1, 1], [], []>} : vector<8x128xbf16>, vector<128x128xbf16>, vector<8x128xf32> -> vector<8x128xf32>
    %c0_121 = arith.constant 0 : index
    %c0_122 = arith.constant 0 : index
    %403 = vector.load %arg9[%c0_121, %c0_122] : memref<1x128xf32, #tpu.memory_space<vmem>>, vector<1x128xf32>
    %404 = vector.broadcast %403 : vector<1x128xf32> to vector<8x128xf32>
    %405 = arith.addf %402, %404 : vector<8x128xf32>
    %c0_123 = arith.constant 0 : index
    %c0_124 = arith.constant 0 : index
    %406 = vector.load %arg10[%c0_123, %c0_124] : memref<8x128xf32, #tpu.memory_space<vmem>>, vector<8x128xf32>
    tpu.vector_store %arg10[%c0_123, %c0_124], %405 {strides = array<i32>} : memref<8x128xf32, #tpu.memory_space<vmem>>, vector<8x128xf32>,
    return
  }
  func.func @transform_0(%arg0: i32) -> (i32, i32, i32) {
    %c0_i32 = arith.constant 0 : i32
    %c0_i32_0 = arith.constant 0 : i32
    %c0_i32_1 = arith.constant 0 : i32
    return %arg0, %c0_i32, %c0_i32_0 : i32, i32, i32
  }
  func.func @transform_1(%arg0: i32) -> (i32, i32) {
    %c0_i32 = arith.constant 0 : i32
    %c0_i32_0 = arith.constant 0 : i32
    %c0_i32_1 = arith.constant 0 : i32
    return %c0_i32, %c0_i32_0 : i32, i32
  }
  func.func @transform_2(%arg0: i32) -> (i32, i32) {
    %c0_i32 = arith.constant 0 : i32
    %c0_i32_0 = arith.constant 0 : i32
    %c0_i32_1 = arith.constant 0 : i32
    return %c0_i32, %c0_i32_0 : i32, i32
  }
  func.func @transform_3(%arg0: i32) -> (i32, i32) {
    %c0_i32 = arith.constant 0 : i32
    %c0_i32_0 = arith.constant 0 : i32
    %c0_i32_1 = arith.constant 0 : i32
    return %c0_i32, %c0_i32_0 : i32, i32
  }
  func.func @transform_4(%arg0: i32) -> (i32, i32) {
    %c0_i32 = arith.constant 0 : i32
    %c0_i32_0 = arith.constant 0 : i32
    %c0_i32_1 = arith.constant 0 : i32
    return %c0_i32, %c0_i32_0 : i32, i32
  }
  func.func @transform_5(%arg0: i32) -> (i32, i32) {
    %c0_i32 = arith.constant 0 : i32
    %c0_i32_0 = arith.constant 0 : i32
    %c0_i32_1 = arith.constant 0 : i32
    return %c0_i32, %c0_i32_0 : i32, i32
  }
  func.func @transform_6(%arg0: i32) -> (i32, i32) {
    %c0_i32 = arith.constant 0 : i32
    %c0_i32_0 = arith.constant 0 : i32
    %c0_i32_1 = arith.constant 0 : i32
    return %c0_i32, %c0_i32_0 : i32, i32
  }
  func.func @transform_7(%arg0: i32) -> (i32, i32) {
    %c0_i32 = arith.constant 0 : i32
    %c0_i32_0 = arith.constant 0 : i32
    %c0_i32_1 = arith.constant 0 : i32
    return %c0_i32, %c0_i32_0 : i32, i32
  }
  func.func @transform_8(%arg0: i32) -> (i32, i32) {
    %c0_i32 = arith.constant 0 : i32
    %c0_i32_0 = arith.constant 0 : i32
    %c0_i32_1 = arith.constant 0 : i32
    return %c0_i32, %c0_i32_0 : i32, i32
  }
  func.func @transform_9(%arg0: i32) -> (i32, i32) {
    %c0_i32 = arith.constant 0 : i32
    %c0_i32_0 = arith.constant 0 : i32
    return %arg0, %c0_i32 : i32, i32
  }
}

</mosaic_0001>

<llo_original>
// kernel: tpu_custom_call.1
$region0: #{tpu_custom_call.1}
  #allocation0 [shape = 'u32[]', space=smem, size = 0x4, offset = 0x4, fixed_abs, tag = 'smem constant byte address 0x4 - core index']
  #allocation1 [shape = 'u32[72,128]{1,0:T(1,128)}', space=vmem, size = 0x9000, scoped, tag = 'internal scratch']
  #allocation2 [shape = 'f32[64,512]{1,0:T(8,128)}', space=vmem, size = 0x20000, scoped, tag = 'scratch operand']
  %s0 = inlined_call_operand.vmem [shape: bf16[1,64,16], index: 0, kind: input, shape index: {}]
  %s1 = inlined_call_operand.vmem [shape: bf16[16,512], index: 1, kind: input, shape index: {}]
  %s2 = inlined_call_operand.hbm [shape: bf16[128,512], index: 2, kind: input, shape index: {}]
  %s3 = inlined_call_operand.vmem [shape: f32[1,512], index: 3, kind: input, shape index: {}]
  %s4 = inlined_call_operand.hbm [shape: bf16[128,512], index: 4, kind: input, shape index: {}]
  %s5 = inlined_call_operand.hbm [shape: bf16[128,512], index: 5, kind: input, shape index: {}]
  %s6 = inlined_call_operand.vmem [shape: f32[1,512], index: 6, kind: input, shape index: {}]
  %s7 = inlined_call_operand.hbm [shape: bf16[128,128], index: 7, kind: input, shape index: {}]
  %s8 = inlined_call_operand.vmem [shape: f32[1,128], index: 8, kind: input, shape index: {}]
  %s9 = inlined_call_operand.hbm [shape: f32[8,128], index: 9, kind: output, shape index: {}]
  %s10 = sld [smem:[#allocation0]]
  $region62: #{tpu_custom_call.1} parent=0
    _
  %s12 = ssub.s32 1, %s10
  %s13 = scalar_select 0, %s12, %s10
  $region1: #{tpu_custom_call.1} parent=0
    #allocation3 [shape = 'u8[131072]{0}', space=vmem, size = 0x20000, scoped, tag = 'input window, operand 2, single buffered']
    #allocation4 [shape = 's32[1]{0}', space=sflag, size = 0x4, scoped, tag = 'scoped memory for tpu_custom_call.1']
    #allocation5 [shape = 's32[1]{0}', space=sflag, size = 0x4, scoped, tag = 'scoped memory for tpu_custom_call.1']
    #allocation6 [shape = 'u8[131072]{0}', space=vmem, size = 0x20000, scoped, tag = 'input window, operand 4, single buffered']
    #allocation7 [shape = 's32[1]{0}', space=sflag, size = 0x4, scoped, tag = 'scoped memory for tpu_custom_call.1']
    #allocation8 [shape = 'u8[131072]{0}', space=vmem, size = 0x20000, scoped, tag = 'input window, operand 5, single buffered']
    #allocation9 [shape = 'u8[32768]{0}', space=vmem, size = 0x8000, scoped, tag = 'input window, operand 7, single buffered']
    #allocation10 [shape = 's32[1]{0}', space=sflag, size = 0x4, scoped, tag = 'scoped memory for tpu_custom_call.1']
    #allocation11 [shape = 'u8[4096]{0}', space=vmem, size = 0x1000, scoped, tag = 'output window, operand 0, single buffered']
    %14 = vsyncpa [#allocation4], 0
    %15 = vsyncpa [#allocation7], 0
    %16 = vsyncpa [#allocation10], 0
    %17 = vsyncpa [#allocation5], 0
    // Predicated region
    $region2: #{tpu_custom_call.1} parent=1 // pred_check
      _
    $region3: #{tpu_custom_call.1} parent=1 // pred_check_branch
      %19 = sbr.rel (0) target = $region5
    $region4: #{tpu_custom_call.1} parent=1 // pred_region
      _
    $region5: #{tpu_custom_call.1} parent=1 // pred_fallthru
      _
    // Predicated region
    $region6: #{tpu_custom_call.1} parent=1 // pred_check
      _
    $region7: #{tpu_custom_call.1} parent=1 // pred_check_branch
      %21 = sbr.rel (0) target = $region9
    $region8: #{tpu_custom_call.1} parent=1 // pred_region
      _
    $region9: #{tpu_custom_call.1} parent=1 // pred_fallthru
      _
    // Predicated region
    $region10: #{tpu_custom_call.1} parent=1 // pred_check
      _
    $region11: #{tpu_custom_call.1} parent=1 // pred_check_branch
      %23 = sbr.rel (0) target = $region13
    $region12: #{tpu_custom_call.1} parent=1 // pred_region
      %25 = vsyncadd [#allocation4], 0
      %s26 = sshll.u32 %s2, 4
      %s27 = int_to_ptr.hbm [resolvable:$true] %s26
      %s28 = sshll.u32 [#allocation3], 4
      %s29 = int_to_ptr.vmem [resolvable:$true] %s28
      %34 = dma.hbm_to_vmem [thread:$0]  %s27, 4096, %s29, [#allocation4], 256, 256, 16
    $region13: #{tpu_custom_call.1} parent=1 // pred_fallthru
      _
    // Predicated region
    $region14: #{tpu_custom_call.1} parent=1 // pred_check
      _
    $region15: #{tpu_custom_call.1} parent=1 // pred_check_branch
      %36 = sbr.rel (0) target = $region17
    $region16: #{tpu_custom_call.1} parent=1 // pred_region
      _
    $region17: #{tpu_custom_call.1} parent=1 // pred_fallthru
      _
    // Predicated region
    $region18: #{tpu_custom_call.1} parent=1 // pred_check
      _
    $region19: #{tpu_custom_call.1} parent=1 // pred_check_branch
      %38 = sbr.rel (0) target = $region21
    $region20: #{tpu_custom_call.1} parent=1 // pred_region
      %40 = vsyncadd [#allocation7], 0
      %s41 = sshll.u32 %s4, 4
      %s42 = int_to_ptr.hbm [resolvable:$true] %s41
      %s43 = sshll.u32 [#allocation6], 4
      %s44 = int_to_ptr.vmem [resolvable:$true] %s43
      %49 = dma.hbm_to_vmem [thread:$0]  %s42, 4096, %s44, [#allocation7], 256, 256, 16
    $region21: #{tpu_custom_call.1} parent=1 // pred_fallthru
      _
    // Predicated region
    $region22: #{tpu_custom_call.1} parent=1 // pred_check
      _
    $region23: #{tpu_custom_call.1} parent=1 // pred_check_branch
      %51 = sbr.rel (0) target = $region25
    $region24: #{tpu_custom_call.1} parent=1 // pred_region
      %53 = vsyncadd [#allocation7], 0
      %s54 = sshll.u32 %s5, 4
      %s55 = int_to_ptr.hbm [resolvable:$true] %s54
      %s56 = sshll.u32 [#allocation8], 4
      %s57 = int_to_ptr.vmem [resolvable:$true] %s56
      %62 = dma.hbm_to_vmem [thread:$0]  %s55, 4096, %s57, [#allocation7], 256, 256, 16
    $region25: #{tpu_custom_call.1} parent=1 // pred_fallthru
      _
    // Predicated region
    $region26: #{tpu_custom_call.1} parent=1 // pred_check
      _
    $region27: #{tpu_custom_call.1} parent=1 // pred_check_branch
      %64 = sbr.rel (0) target = $region29
    $region28: #{tpu_custom_call.1} parent=1 // pred_region
      _
    $region29: #{tpu_custom_call.1} parent=1 // pred_fallthru
      _
    // Predicated region
    $region30: #{tpu_custom_call.1} parent=1 // pred_check
      _
    $region31: #{tpu_custom_call.1} parent=1 // pred_check_branch
      %66 = sbr.rel (0) target = $region33
    $region32: #{tpu_custom_call.1} parent=1 // pred_region
      %68 = vsyncadd [#allocation10], 0
      %s69 = sshll.u32 %s7, 4
      %s70 = int_to_ptr.hbm [resolvable:$true] %s69
      %s71 = sshll.u32 [#allocation9], 4
      %s72 = int_to_ptr.vmem [resolvable:$true] %s71
      %77 = dma.hbm_to_vmem [thread:$0]  %s70, 1024, %s72, [#allocation10], 64, 64, 4
    $region33: #{tpu_custom_call.1} parent=1 // pred_fallthru
      _
    // Predicated region
    $region34: #{tpu_custom_call.1} parent=1 // pred_check
      _
    $region35: #{tpu_custom_call.1} parent=1 // pred_check_branch
      %79 = sbr.rel (0) target = $region37
    $region36: #{tpu_custom_call.1} parent=1 // pred_region
      _
    $region37: #{tpu_custom_call.1} parent=1 // pred_fallthru
      _
    // Predicated region
    $region38: #{tpu_custom_call.1} parent=1 // pred_check
      _
    $region39: #{tpu_custom_call.1} parent=1 // pred_check_branch
      %81 = sbr.rel (0) target = $region41
    $region40: #{tpu_custom_call.1} parent=1 // pred_region
      %83 = dma.done [#allocation4], 4096
    $region41: #{tpu_custom_call.1} parent=1 // pred_fallthru
      _
    // Predicated region
    $region42: #{tpu_custom_call.1} parent=1 // pred_check
      _
    $region43: #{tpu_custom_call.1} parent=1 // pred_check_branch
      %85 = sbr.rel (0) target = $region45
    $region44: #{tpu_custom_call.1} parent=1 // pred_region
      %87 = dma.done [#allocation7], 4096
    $region45: #{tpu_custom_call.1} parent=1 // pred_fallthru
      _
    // Predicated region
    $region46: #{tpu_custom_call.1} parent=1 // pred_check
      _
    $region47: #{tpu_custom_call.1} parent=1 // pred_check_branch
      %89 = sbr.rel (0) target = $region49
    $region48: #{tpu_custom_call.1} parent=1 // pred_region
      %91 = dma.done [#allocation7], 4096
    $region49: #{tpu_custom_call.1} parent=1 // pred_fallthru
      _
    // Predicated region
    $region50: #{tpu_custom_call.1} parent=1 // pred_check
      _
    $region51: #{tpu_custom_call.1} parent=1 // pred_check_branch
      %93 = sbr.rel (0) target = $region53
    $region52: #{tpu_custom_call.1} parent=1 // pred_region
      %95 = dma.done [#allocation10], 1024
    $region53: #{tpu_custom_call.1} parent=1 // pred_fallthru
      _
    %v97 = vld [vmem:[%s6] sm:$0xf]
    %v99 = vperm.slane %v97, 0
    %v100 = vperm.slane %v97, 1
    %v101 = vperm.slane %v97, 2
    %v102 = vperm.slane %v97, 3
    %v107 = vld [vmem:[%s0] sm:$0xf]
    %v108 = vld [vmem:[%s0 + $0x4] sm:$0xf]
    %v109 = vld [vmem:[%s0 + $0x8] sm:$0xf]
    %v110 = vld [vmem:[%s0 + $0xc] sm:$0xf]
    %v111 = vld [vmem:[%s0 + $0x10] sm:$0xf]
    %v112 = vld [vmem:[%s0 + $0x14] sm:$0xf]
    %v113 = vld [vmem:[%s0 + $0x18] sm:$0xf]
    %v114 = vld [vmem:[%s0 + $0x1c] sm:$0xf]
    %v115 = vld [vmem:[%s1] sm:$0xff]
    %v116 = vld [vmem:[%s1 + $0x8] sm:$0xff]
    %v117 = vld [vmem:[%s1 + $0x10] sm:$0xff]
    %v118 = vld [vmem:[%s1 + $0x18] sm:$0xff]
    %v119 = vld [vmem:[%s3] sm:$0xf]
    %v121 = vperm.slane %v119, 0
    %v122 = vperm.slane %v119, 1
    %v123 = vperm.slane %v119, 2
    %v124 = vperm.slane %v119, 3
    %v137 = vunpack.c.l.b16 %v107
    %v138 = vunpack.c.l.b16 %v108
    %v139 = vunpack.c.l.b16 %v109
    %v140 = vunpack.c.l.b16 %v110
    %v141 = vunpack.c.l.b16 %v111
    %v142 = vunpack.c.l.b16 %v112
    %v143 = vunpack.c.l.b16 %v113
    %v144 = vunpack.c.l.b16 %v114
    %v145 = vpack.c.b16 %v138, %v137
    %v146 = vpack.c.b16 %v140, %v139
    %v147 = vpack.c.b16 %v142, %v141
    %v148 = vpack.c.b16 %v144, %v143
    %v153 = vunpack.c.l.b16 %v115
    %v154 = vunpack.c.h.b16 %v115
    %v155 = vunpack.c.l.b16 %v116
    %v156 = vunpack.c.h.b16 %v116
    %v157 = vunpack.c.l.b16 %v117
    %v158 = vunpack.c.h.b16 %v117
    %v159 = vunpack.c.l.b16 %v118
    %v160 = vunpack.c.h.b16 %v118
    %v161 = vpack.c.b16 %v157, %v153
    %v162 = vpack.c.b16 %v158, %v154
    %v163 = vpack.c.b16 %v159, %v155
    %v164 = vpack.c.b16 %v160, %v156
    %vm169 = vcmask 130048
    %v171 = vsel %vm169, %v145, 0
    %v174 = vsel %vm169, %v146, 0
    %v177 = vsel %vm169, %v147, 0
    %v180 = vsel %vm169, %v148, 0
    %182 = vmatpush.bf16.msra.mxu0 0
    %183 = vmatpush.bf16.msra.mxu0 0
    %184 = vmatpush.bf16.msra.mxu0 0
    %185 = vmatpush.bf16.msra.mxu0 0
    %186 = vmatpush.bf16.msra.mxu0 0
    %187 = vmatpush.bf16.msra.mxu0 0
    %188 = vmatpush.bf16.msra.mxu0 0
    %189 = vmatpush.bf16.msra.mxu0 %v161
    %190 = vmatmul.bf16.gmra.mxu0 %v171
    %v191 = vpop.f32.mrf.mxu0
    %v192 = vadd.f32 %v121, %v191
    %v193 = vpop.f32.mrf.mxu0
    %v194 = vadd.f32 %v121, %v193
    %195 = vmatmul.bf16.gmra.mxu0 %v174
    %v196 = vpop.f32.mrf.mxu0
    %v197 = vadd.f32 %v121, %v196
    %v198 = vpop.f32.mrf.mxu0
    %v199 = vadd.f32 %v121, %v198
    %200 = vmatmul.bf16.gmra.mxu0 %v177
    %v201 = vpop.f32.mrf.mxu0
    %v202 = vadd.f32 %v121, %v201
    %v203 = vpop.f32.mrf.mxu0
    %v204 = vadd.f32 %v121, %v203
    %205 = vmatmul.bf16.gmra.mxu0 %v180
    %v206 = vpop.f32.mrf.mxu0
    %v207 = vadd.f32 %v121, %v206
    %v208 = vpop.f32.mrf.mxu0
    %v209 = vadd.f32 %v121, %v208
    %210 = vdwg.mxu0
    %211 = vmatpush.bf16.msra.mxu0 0
    %212 = vmatpush.bf16.msra.mxu0 0
    %213 = vmatpush.bf16.msra.mxu0 0
    %214 = vmatpush.bf16.msra.mxu0 0
    %215 = vmatpush.bf16.msra.mxu0 0
    %216 = vmatpush.bf16.msra.mxu0 0
    %217 = vmatpush.bf16.msra.mxu0 0
    %218 = vmatpush.bf16.msra.mxu0 %v162
    %219 = vmatmul.bf16.gmra.mxu0 %v171
    %v220 = vpop.f32.mrf.mxu0
    %v221 = vadd.f32 %v122, %v220
    %v222 = vpop.f32.mrf.mxu0
    %v223 = vadd.f32 %v122, %v222
    %224 = vmatmul.bf16.gmra.mxu0 %v174
    %v225 = vpop.f32.mrf.mxu0
    %v226 = vadd.f32 %v122, %v225
    %v227 = vpop.f32.mrf.mxu0
    %v228 = vadd.f32 %v122, %v227
    %229 = vmatmul.bf16.gmra.mxu0 %v177
    %v230 = vpop.f32.mrf.mxu0
    %v231 = vadd.f32 %v122, %v230
    %v232 = vpop.f32.mrf.mxu0
    %v233 = vadd.f32 %v122, %v232
    %234 = vmatmul.bf16.gmra.mxu0 %v180
    %v235 = vpop.f32.mrf.mxu0
    %v236 = vadd.f32 %v122, %v235
    %v237 = vpop.f32.mrf.mxu0
    %v238 = vadd.f32 %v122, %v237
    %239 = vdwg.mxu0
    %240 = vmatpush.bf16.msra.mxu0 0
    %241 = vmatpush.bf16.msra.mxu0 0
    %242 = vmatpush.bf16.msra.mxu0 0
    %243 = vmatpush.bf16.msra.mxu0 0
    %244 = vmatpush.bf16.msra.mxu0 0
    %245 = vmatpush.bf16.msra.mxu0 0
    %246 = vmatpush.bf16.msra.mxu0 0
    %247 = vmatpush.bf16.msra.mxu0 %v163
    %248 = vmatmul.bf16.gmra.mxu0 %v171
    %v249 = vpop.f32.mrf.mxu0
    %v250 = vadd.f32 %v123, %v249
    %v251 = vpop.f32.mrf.mxu0
    %v252 = vadd.f32 %v123, %v251
    %253 = vmatmul.bf16.gmra.mxu0 %v174
    %v254 = vpop.f32.mrf.mxu0
    %v255 = vadd.f32 %v123, %v254
    %v256 = vpop.f32.mrf.mxu0
    %v257 = vadd.f32 %v123, %v256
    %258 = vmatmul.bf16.gmra.mxu0 %v177
    %v259 = vpop.f32.mrf.mxu0
    %v260 = vadd.f32 %v123, %v259
    %v261 = vpop.f32.mrf.mxu0
    %v262 = vadd.f32 %v123, %v261
    %263 = vmatmul.bf16.gmra.mxu0 %v180
    %v264 = vpop.f32.mrf.mxu0
    %v265 = vadd.f32 %v123, %v264
    %v266 = vpop.f32.mrf.mxu0
    %v267 = vadd.f32 %v123, %v266
    %268 = vdwg.mxu0
    %269 = vmatpush.bf16.msra.mxu0 0
    %270 = vmatpush.bf16.msra.mxu0 0
    %271 = vmatpush.bf16.msra.mxu0 0
    %272 = vmatpush.bf16.msra.mxu0 0
    %273 = vmatpush.bf16.msra.mxu0 0
    %274 = vmatpush.bf16.msra.mxu0 0
    %275 = vmatpush.bf16.msra.mxu0 0
    %276 = vmatpush.bf16.msra.mxu0 %v164
    %277 = vmatmul.bf16.gmra.mxu0 %v171
    %v278 = vpop.f32.mrf.mxu0
    %v279 = vadd.f32 %v124, %v278
    %v280 = vpop.f32.mrf.mxu0
    %v281 = vadd.f32 %v124, %v280
    %282 = vmatmul.bf16.gmra.mxu0 %v174
    %v283 = vpop.f32.mrf.mxu0
    %v284 = vadd.f32 %v124, %v283
    %v285 = vpop.f32.mrf.mxu0
    %v286 = vadd.f32 %v124, %v285
    %287 = vmatmul.bf16.gmra.mxu0 %v177
    %v288 = vpop.f32.mrf.mxu0
    %v289 = vadd.f32 %v124, %v288
    %v290 = vpop.f32.mrf.mxu0
    %v291 = vadd.f32 %v124, %v290
    %292 = vmatmul.bf16.gmra.mxu0 %v180
    %v293 = vpop.f32.mrf.mxu0
    %v294 = vadd.f32 %v124, %v293
    %v295 = vpop.f32.mrf.mxu0
    %v296 = vadd.f32 %v124, %v295
    %297 = vdwg.mxu0
    %298 = vst [vmem:[#allocation2] sm:$0xff] %v192
    %299 = vst [vmem:[#allocation2 + $0x8] sm:$0xff] %v221
    %300 = vst [vmem:[#allocation2 + $0x10] sm:$0xff] %v250
    %301 = vst [vmem:[#allocation2 + $0x18] sm:$0xff] %v279
    %302 = vst [vmem:[#allocation2 + $0x20] sm:$0xff] %v194
    %303 = vst [vmem:[#allocation2 + $0x28] sm:$0xff] %v223
    %304 = vst [vmem:[#allocation2 + $0x30] sm:$0xff] %v252
    %305 = vst [vmem:[#allocation2 + $0x38] sm:$0xff] %v281
    %306 = vst [vmem:[#allocation2 + $0x40] sm:$0xff] %v197
    %307 = vst [vmem:[#allocation2 + $0x48] sm:$0xff] %v226
    %308 = vst [vmem:[#allocation2 + $0x50] sm:$0xff] %v255
    %309 = vst [vmem:[#allocation2 + $0x58] sm:$0xff] %v284
    %310 = vst [vmem:[#allocation2 + $0x60] sm:$0xff] %v199
    %311 = vst [vmem:[#allocation2 + $0x68] sm:$0xff] %v228
    %312 = vst [vmem:[#allocation2 + $0x70] sm:$0xff] %v257
    %313 = vst [vmem:[#allocation2 + $0x78] sm:$0xff] %v286
    %314 = vst [vmem:[#allocation2 + $0x80] sm:$0xff] %v202
    %315 = vst [vmem:[#allocation2 + $0x88] sm:$0xff] %v231
    %316 = vst [vmem:[#allocation2 + $0x90] sm:$0xff] %v260
    %317 = vst [vmem:[#allocation2 + $0x98] sm:$0xff] %v289
    %318 = vst [vmem:[#allocation2 + $0xa0] sm:$0xff] %v204
    %319 = vst [vmem:[#allocation2 + $0xa8] sm:$0xff] %v233
    %320 = vst [vmem:[#allocation2 + $0xb0] sm:$0xff] %v262
    %321 = vst [vmem:[#allocation2 + $0xb8] sm:$0xff] %v291
    %322 = vst [vmem:[#allocation2 + $0xc0] sm:$0xff] %v207
    %323 = vst [vmem:[#allocation2 + $0xc8] sm:$0xff] %v236
    %324 = vst [vmem:[#allocation2 + $0xd0] sm:$0xff] %v265
    %325 = vst [vmem:[#allocation2 + $0xd8] sm:$0xff] %v294
    %326 = vst [vmem:[#allocation2 + $0xe0] sm:$0xff] %v209
    %327 = vst [vmem:[#allocation2 + $0xe8] sm:$0xff] %v238
    %328 = vst [vmem:[#allocation2 + $0xf0] sm:$0xff] %v267
    %329 = vst [vmem:[#allocation2 + $0xf8] sm:$0xff] %v296
    %s330 = smul.u32 0, 4
    %s331 = smul.addr %s330, 8
    %s332 = scalar_lea.vmem [#allocation2], %s331
    %v333 = vld [vmem:[%s332] sm:$0xff]
    %v334 = vld [vmem:[%s332 + $0x8] sm:$0xff]
    %v335 = vld [vmem:[%s332 + $0x10] sm:$0xff]
    %v336 = vld [vmem:[%s332 + $0x18] sm:$0xff]
    %v337 = vld [vmem:[#allocation3] sm:$0xff]
    %v338 = vld [vmem:[#allocation3 + $0x8] sm:$0xff]
    %v339 = vld [vmem:[#allocation3 + $0x10] sm:$0xff]
    %v340 = vld [vmem:[#allocation3 + $0x18] sm:$0xff]
    %v341 = vld [vmem:[#allocation3 + $0x20] sm:$0xff]
    %v342 = vld [vmem:[#allocation3 + $0x28] sm:$0xff]
    %v343 = vld [vmem:[#allocation3 + $0x30] sm:$0xff]
    %v344 = vld [vmem:[#allocation3 + $0x38] sm:$0xff]
    %v345 = vld [vmem:[#allocation3 + $0x40] sm:$0xff]
    %v346 = vld [vmem:[#allocation3 + $0x48] sm:$0xff]
    %v347 = vld [vmem:[#allocation3 + $0x50] sm:$0xff]
    %v348 = vld [vmem:[#allocation3 + $0x58] sm:$0xff]
    %v349 = vld [vmem:[#allocation3 + $0x60] sm:$0xff]
    %v350 = vld [vmem:[#allocation3 + $0x68] sm:$0xff]
    %v351 = vld [vmem:[#allocation3 + $0x70] sm:$0xff]
    %v352 = vld [vmem:[#allocation3 + $0x78] sm:$0xff]
    %v353 = vld [vmem:[#allocation3 + $0x80] sm:$0xff]
    %v354 = vld [vmem:[#allocation3 + $0x88] sm:$0xff]
    %v355 = vld [vmem:[#allocation3 + $0x90] sm:$0xff]
    %v356 = vld [vmem:[#allocation3 + $0x98] sm:$0xff]
    %v357 = vld [vmem:[#allocation3 + $0xa0] sm:$0xff]
    %v358 = vld [vmem:[#allocation3 + $0xa8] sm:$0xff]
    %v359 = vld [vmem:[#allocation3 + $0xb0] sm:$0xff]
    %v360 = vld [vmem:[#allocation3 + $0xb8] sm:$0xff]
    %v361 = vld [vmem:[#allocation3 + $0xc0] sm:$0xff]
    %v362 = vld [vmem:[#allocation3 + $0xc8] sm:$0xff]
    %v363 = vld [vmem:[#allocation3 + $0xd0] sm:$0xff]
    %v364 = vld [vmem:[#allocation3 + $0xd8] sm:$0xff]
    %v365 = vld [vmem:[#allocation3 + $0xe0] sm:$0xff]
    %v366 = vld [vmem:[#allocation3 + $0xe8] sm:$0xff]
    %v367 = vld [vmem:[#allocation3 + $0xf0] sm:$0xff]
    %v368 = vld [vmem:[#allocation3 + $0xf8] sm:$0xff]
    %v401 = vunpack.c.l.b16 %v337
    %v402 = vunpack.c.h.b16 %v337
    %v403 = vunpack.c.l.b16 %v338
    %v404 = vunpack.c.h.b16 %v338
    %v405 = vunpack.c.l.b16 %v339
    %v406 = vunpack.c.h.b16 %v339
    %v407 = vunpack.c.l.b16 %v340
    %v408 = vunpack.c.h.b16 %v340
    %v409 = vunpack.c.l.b16 %v341
    %v410 = vunpack.c.h.b16 %v341
    %v411 = vunpack.c.l.b16 %v342
    %v412 = vunpack.c.h.b16 %v342
    %v413 = vunpack.c.l.b16 %v343
    %v414 = vunpack.c.h.b16 %v343
    %v415 = vunpack.c.l.b16 %v344
    %v416 = vunpack.c.h.b16 %v344
    %v417 = vunpack.c.l.b16 %v345
    %v418 = vunpack.c.h.b16 %v345
    %v419 = vunpack.c.l.b16 %v346
    %v420 = vunpack.c.h.b16 %v346
    %v421 = vunpack.c.l.b16 %v347
    %v422 = vunpack.c.h.b16 %v347
    %v423 = vunpack.c.l.b16 %v348
    %v424 = vunpack.c.h.b16 %v348
    %v425 = vunpack.c.l.b16 %v349
    %v426 = vunpack.c.h.b16 %v349
    %v427 = vunpack.c.l.b16 %v350
    %v428 = vunpack.c.h.b16 %v350
    %v429 = vunpack.c.l.b16 %v351
    %v430 = vunpack.c.h.b16 %v351
    %v431 = vunpack.c.l.b16 %v352
    %v432 = vunpack.c.h.b16 %v352
    %v433 = vunpack.c.l.b16 %v353
    %v434 = vunpack.c.h.b16 %v353
    %v435 = vunpack.c.l.b16 %v354
    %v436 = vunpack.c.h.b16 %v354
    %v437 = vunpack.c.l.b16 %v355
    %v438 = vunpack.c.h.b16 %v355
    %v439 = vunpack.c.l.b16 %v356
    %v440 = vunpack.c.h.b16 %v356
    %v441 = vunpack.c.l.b16 %v357
    %v442 = vunpack.c.h.b16 %v357
    %v443 = vunpack.c.l.b16 %v358
    %v444 = vunpack.c.h.b16 %v358
    %v445 = vunpack.c.l.b16 %v359
    %v446 = vunpack.c.h.b16 %v359
    %v447 = vunpack.c.l.b16 %v360
    %v448 = vunpack.c.h.b16 %v360
    %v449 = vunpack.c.l.b16 %v361
    %v450 = vunpack.c.h.b16 %v361
    %v451 = vunpack.c.l.b16 %v362
    %v452 = vunpack.c.h.b16 %v362
    %v453 = vunpack.c.l.b16 %v363
    %v454 = vunpack.c.h.b16 %v363
    %v455 = vunpack.c.l.b16 %v364
    %v456 = vunpack.c.h.b16 %v364
    %v457 = vunpack.c.l.b16 %v365
    %v458 = vunpack.c.h.b16 %v365
    %v459 = vunpack.c.l.b16 %v366
    %v460 = vunpack.c.h.b16 %v366
    %v461 = vunpack.c.l.b16 %v367
    %v462 = vunpack.c.h.b16 %v367
    %v463 = vunpack.c.l.b16 %v368
    %v464 = vunpack.c.h.b16 %v368
    %v465 = vpack.c.b16 %v405, %v401
    %v466 = vpack.c.b16 %v406, %v402
    %v467 = vpack.c.b16 %v407, %v403
    %v468 = vpack.c.b16 %v408, %v404
    %v469 = vpack.c.b16 %v413, %v409
    %v470 = vpack.c.b16 %v414, %v410
    %v471 = vpack.c.b16 %v415, %v411
    %v472 = vpack.c.b16 %v416, %v412
    %v473 = vpack.c.b16 %v421, %v417
    %v474 = vpack.c.b16 %v422, %v418
    %v475 = vpack.c.b16 %v423, %v419
    %v476 = vpack.c.b16 %v424, %v420
    %v477 = vpack.c.b16 %v429, %v425
    %v478 = vpack.c.b16 %v430, %v426
    %v479 = vpack.c.b16 %v431, %v427
    %v480 = vpack.c.b16 %v432, %v428
    %v481 = vpack.c.b16 %v437, %v433
    %v482 = vpack.c.b16 %v438, %v434
    %v483 = vpack.c.b16 %v439, %v435
    %v484 = vpack.c.b16 %v440, %v436
    %v485 = vpack.c.b16 %v445, %v441
    %v486 = vpack.c.b16 %v446, %v442
    %v487 = vpack.c.b16 %v447, %v443
    %v488 = vpack.c.b16 %v448, %v444
    %v489 = vpack.c.b16 %v453, %v449
    %v490 = vpack.c.b16 %v454, %v450
    %v491 = vpack.c.b16 %v455, %v451
    %v492 = vpack.c.b16 %v456, %v452
    %v493 = vpack.c.b16 %v461, %v457
    %v494 = vpack.c.b16 %v462, %v458
    %v495 = vpack.c.b16 %v463, %v459
    %v496 = vpack.c.b16 %v464, %v460
    %529 = vmatpush.bf16.msra.mxu0 %v493
    %530 = vmatpush.bf16.msra.mxu0 %v489
    %531 = vmatpush.bf16.msra.mxu0 %v485
    %532 = vmatpush.bf16.msra.mxu0 %v481
    %533 = vmatpush.bf16.msra.mxu0 %v477
    %534 = vmatpush.bf16.msra.mxu0 %v473
    %535 = vmatpush.bf16.msra.mxu0 %v469
    %536 = vmatpush.bf16.msra.mxu0 %v465
    %537 = vmatmul.bf16.gmra.mxu0 0
    %v538 = vpop.f32.mrf.mxu0
    %v539 = vadd.f32 0.0, %v538
    %v540 = vpop.f32.mrf.mxu0
    %541 = vdwg.mxu0
    %542 = vmatpush.bf16.msra.mxu0 %v494
    %543 = vmatpush.bf16.msra.mxu0 %v490
    %544 = vmatpush.bf16.msra.mxu0 %v486
    %545 = vmatpush.bf16.msra.mxu0 %v482
    %546 = vmatpush.bf16.msra.mxu0 %v478
    %547 = vmatpush.bf16.msra.mxu0 %v474
    %548 = vmatpush.bf16.msra.mxu0 %v470
    %549 = vmatpush.bf16.msra.mxu0 %v466
    %550 = vmatmul.bf16.gmra.mxu0 0
    %v551 = vpop.f32.mrf.mxu0
    %v552 = vadd.f32 0.0, %v551
    %v553 = vpop.f32.mrf.mxu0
    %554 = vdwg.mxu0
    %555 = vmatpush.bf16.msra.mxu0 %v495
    %556 = vmatpush.bf16.msra.mxu0 %v491
    %557 = vmatpush.bf16.msra.mxu0 %v487
    %558 = vmatpush.bf16.msra.mxu0 %v483
    %559 = vmatpush.bf16.msra.mxu0 %v479
    %560 = vmatpush.bf16.msra.mxu0 %v475
    %561 = vmatpush.bf16.msra.mxu0 %v471
    %562 = vmatpush.bf16.msra.mxu0 %v467
    %563 = vmatmul.bf16.gmra.mxu0 0
    %v564 = vpop.f32.mrf.mxu0
    %v565 = vadd.f32 0.0, %v564
    %v566 = vpop.f32.mrf.mxu0
    %567 = vdwg.mxu0
    %568 = vmatpush.bf16.msra.mxu0 %v496
    %569 = vmatpush.bf16.msra.mxu0 %v492
    %570 = vmatpush.bf16.msra.mxu0 %v488
    %571 = vmatpush.bf16.msra.mxu0 %v484
    %572 = vmatpush.bf16.msra.mxu0 %v480
    %573 = vmatpush.bf16.msra.mxu0 %v476
    %574 = vmatpush.bf16.msra.mxu0 %v472
    %575 = vmatpush.bf16.msra.mxu0 %v468
    %576 = vmatmul.bf16.gmra.mxu0 0
    %v577 = vpop.f32.mrf.mxu0
    %v578 = vadd.f32 0.0, %v577
    %v579 = vpop.f32.mrf.mxu0
    %580 = vdwg.mxu0
    %v581 = vadd.f32 %v333, %v539
    %v582 = vadd.f32 %v334, %v552
    %v583 = vadd.f32 %v335, %v565
    %v584 = vadd.f32 %v336, %v578
    %v585 = vxor.u32 %v581, 2147483648
    %v586 = vxor.u32 %v582, 2147483648
    %v587 = vxor.u32 %v583, 2147483648
    %v588 = vmul.f32 %v585, 1.442695
    %v589 = vpow.pop %v588
    %v590 = vmul.f32 %v586, 1.442695
    %v591 = vpow.pop %v590
    %v592 = vmul.f32 %v587, 1.442695
    %v593 = vpow.pop %v592
    %v594 = vadd.f32 %v589, 1.0
    %v595 = vadd.f32 %v591, 1.0
    %v596 = vadd.f32 %v593, 1.0
    %v597 = vrcp.pop %v594
    %v598 = vmul.f32 %v594, %v597
    %v599 = vsub.f32 1.0, %v598
    %v600 = vmul.f32 %v597, %v599
    %v601 = vadd.f32 %v597, %v600
    %vm602 = vweird.f32 %v594
    %vm603 = vweird.f32 %v597
    %vm604 = vmor %vm602, %vm603
    %v605 = vsel %vm604, %v597, %v601
    %v606 = vand.u32 2147483647, %v594
    %vm607 = vcmp.eq.f32.partialorder %v606, 8.507059e+37
    %v608 = vand.u32 %v594, 2147483648
    %v609 = vor.u32 1.1754944e-38, %v608
    %v610 = vsel %vm607, %v609, %v605
    %v611 = vmul.f32 1.0, %v610
    %v612 = vrcp.pop %v595
    %v613 = vmul.f32 %v595, %v612
    %v614 = vsub.f32 1.0, %v613
    %v615 = vmul.f32 %v612, %v614
    %v616 = vadd.f32 %v612, %v615
    %vm617 = vweird.f32 %v595
    %vm618 = vweird.f32 %v612
    %vm619 = vmor %vm617, %vm618
    %v620 = vsel %vm619, %v612, %v616
    %v621 = vand.u32 2147483647, %v595
    %vm622 = vcmp.eq.f32.partialorder %v621, 8.507059e+37
    %v623 = vand.u32 %v595, 2147483648
    %v624 = vor.u32 1.1754944e-38, %v623
    %v625 = vsel %vm622, %v624, %v620
    %v626 = vmul.f32 1.0, %v625
    %v627 = vrcp.pop %v596
    %v628 = vmul.f32 %v596, %v627
    %v629 = vsub.f32 1.0, %v628
    %v630 = vmul.f32 %v627, %v629
    %v631 = vadd.f32 %v627, %v630
    %vm632 = vweird.f32 %v596
    %vm633 = vweird.f32 %v627
    %vm634 = vmor %vm632, %vm633
    %v635 = vsel %vm634, %v627, %v631
    %v636 = vand.u32 2147483647, %v596
    %vm637 = vcmp.eq.f32.partialorder %v636, 8.507059e+37
    %v638 = vand.u32 %v596, 2147483648
    %v639 = vor.u32 1.1754944e-38, %v638
    %v640 = vsel %vm637, %v639, %v635
    %v641 = vmul.f32 1.0, %v640
    %v642 = vtanh.pop %v584
    %v643 = vmul.f32 %v626, 0.0
    %v644 = vmul.f32 %v611, %v642
    %v645 = vadd.f32 %v643, %v644
    %v646 = vtanh.pop %v645
    %v647 = vmul.f32 %v641, %v646
    %v648 = vpack.c.bf16 %v647, %v647
    %v649 = vld [vmem:[#allocation6] sm:$0xff]
    %v650 = vld [vmem:[#allocation6 + $0x8] sm:$0xff]
    %v651 = vld [vmem:[#allocation6 + $0x10] sm:$0xff]
    %v652 = vld [vmem:[#allocation6 + $0x18] sm:$0xff]
    %v653 = vld [vmem:[#allocation6 + $0x20] sm:$0xff]
    %v654 = vld [vmem:[#allocation6 + $0x28] sm:$0xff]
    %v655 = vld [vmem:[#allocation6 + $0x30] sm:$0xff]
    %v656 = vld [vmem:[#allocation6 + $0x38] sm:$0xff]
    %v657 = vld [vmem:[#allocation6 + $0x40] sm:$0xff]
    %v658 = vld [vmem:[#allocation6 + $0x48] sm:$0xff]
    %v659 = vld [vmem:[#allocation6 + $0x50] sm:$0xff]
    %v660 = vld [vmem:[#allocation6 + $0x58] sm:$0xff]
    %v661 = vld [vmem:[#allocation6 + $0x60] sm:$0xff]
    %v662 = vld [vmem:[#allocation6 + $0x68] sm:$0xff]
    %v663 = vld [vmem:[#allocation6 + $0x70] sm:$0xff]
    %v664 = vld [vmem:[#allocation6 + $0x78] sm:$0xff]
    %v665 = vld [vmem:[#allocation6 + $0x80] sm:$0xff]
    %v666 = vld [vmem:[#allocation6 + $0x88] sm:$0xff]
    %v667 = vld [vmem:[#allocation6 + $0x90] sm:$0xff]
    %v668 = vld [vmem:[#allocation6 + $0x98] sm:$0xff]
    %v669 = vld [vmem:[#allocation6 + $0xa0] sm:$0xff]
    %v670 = vld [vmem:[#allocation6 + $0xa8] sm:$0xff]
    %v671 = vld [vmem:[#allocation6 + $0xb0] sm:$0xff]
    %v672 = vld [vmem:[#allocation6 + $0xb8] sm:$0xff]
    %v673 = vld [vmem:[#allocation6 + $0xc0] sm:$0xff]
    %v674 = vld [vmem:[#allocation6 + $0xc8] sm:$0xff]
    %v675 = vld [vmem:[#allocation6 + $0xd0] sm:$0xff]
    %v676 = vld [vmem:[#allocation6 + $0xd8] sm:$0xff]
    %v677 = vld [vmem:[#allocation6 + $0xe0] sm:$0xff]
    %v678 = vld [vmem:[#allocation6 + $0xe8] sm:$0xff]
    %v679 = vld [vmem:[#allocation6 + $0xf0] sm:$0xff]
    %v680 = vld [vmem:[#allocation6 + $0xf8] sm:$0xff]
    %v681 = vld [vmem:[#allocation8] sm:$0xff]
    %v682 = vld [vmem:[#allocation8 + $0x8] sm:$0xff]
    %v683 = vld [vmem:[#allocation8 + $0x10] sm:$0xff]
    %v684 = vld [vmem:[#allocation8 + $0x18] sm:$0xff]
    %v685 = vld [vmem:[#allocation8 + $0x20] sm:$0xff]
    %v686 = vld [vmem:[#allocation8 + $0x28] sm:$0xff]
    %v687 = vld [vmem:[#allocation8 + $0x30] sm:$0xff]
    %v688 = vld [vmem:[#allocation8 + $0x38] sm:$0xff]
    %v689 = vld [vmem:[#allocation8 + $0x40] sm:$0xff]
    %v690 = vld [vmem:[#allocation8 + $0x48] sm:$0xff]
    %v691 = vld [vmem:[#allocation8 + $0x50] sm:$0xff]
    %v692 = vld [vmem:[#allocation8 + $0x58] sm:$0xff]
    %v693 = vld [vmem:[#allocation8 + $0x60] sm:$0xff]
    %v694 = vld [vmem:[#allocation8 + $0x68] sm:$0xff]
    %v695 = vld [vmem:[#allocation8 + $0x70] sm:$0xff]
    %v696 = vld [vmem:[#allocation8 + $0x78] sm:$0xff]
    %v697 = vld [vmem:[#allocation8 + $0x80] sm:$0xff]
    %v698 = vld [vmem:[#allocation8 + $0x88] sm:$0xff]
    %v699 = vld [vmem:[#allocation8 + $0x90] sm:$0xff]
    %v700 = vld [vmem:[#allocation8 + $0x98] sm:$0xff]
    %v701 = vld [vmem:[#allocation8 + $0xa0] sm:$0xff]
    %v702 = vld [vmem:[#allocation8 + $0xa8] sm:$0xff]
    %v703 = vld [vmem:[#allocation8 + $0xb0] sm:$0xff]
    %v704 = vld [vmem:[#allocation8 + $0xb8] sm:$0xff]
    %v705 = vld [vmem:[#allocation8 + $0xc0] sm:$0xff]
    %v706 = vld [vmem:[#allocation8 + $0xc8] sm:$0xff]
    %v707 = vld [vmem:[#allocation8 + $0xd0] sm:$0xff]
    %v708 = vld [vmem:[#allocation8 + $0xd8] sm:$0xff]
    %v709 = vld [vmem:[#allocation8 + $0xe0] sm:$0xff]
    %v710 = vld [vmem:[#allocation8 + $0xe8] sm:$0xff]
    %v711 = vld [vmem:[#allocation8 + $0xf0] sm:$0xff]
    %v712 = vld [vmem:[#allocation8 + $0xf8] sm:$0xff]
    %v745 = vunpack.c.l.b16 %v681
    %v746 = vunpack.c.h.b16 %v681
    %v747 = vunpack.c.l.b16 %v682
    %v748 = vunpack.c.h.b16 %v682
    %v749 = vunpack.c.l.b16 %v683
    %v750 = vunpack.c.h.b16 %v683
    %v751 = vunpack.c.l.b16 %v684
    %v752 = vunpack.c.h.b16 %v684
    %v753 = vunpack.c.l.b16 %v685
    %v754 = vunpack.c.h.b16 %v685
    %v755 = vunpack.c.l.b16 %v686
    %v756 = vunpack.c.h.b16 %v686
    %v757 = vunpack.c.l.b16 %v687
    %v758 = vunpack.c.h.b16 %v687
    %v759 = vunpack.c.l.b16 %v688
    %v760 = vunpack.c.h.b16 %v688
    %v761 = vunpack.c.l.b16 %v689
    %v762 = vunpack.c.h.b16 %v689
    %v763 = vunpack.c.l.b16 %v690
    %v764 = vunpack.c.h.b16 %v690
    %v765 = vunpack.c.l.b16 %v691
    %v766 = vunpack.c.h.b16 %v691
    %v767 = vunpack.c.l.b16 %v692
    %v768 = vunpack.c.h.b16 %v692
    %v769 = vunpack.c.l.b16 %v693
    %v770 = vunpack.c.h.b16 %v693
    %v771 = vunpack.c.l.b16 %v694
    %v772 = vunpack.c.h.b16 %v694
    %v773 = vunpack.c.l.b16 %v695
    %v774 = vunpack.c.h.b16 %v695
    %v775 = vunpack.c.l.b16 %v696
    %v776 = vunpack.c.h.b16 %v696
    %v777 = vunpack.c.l.b16 %v697
    %v778 = vunpack.c.h.b16 %v697
    %v779 = vunpack.c.l.b16 %v698
    %v780 = vunpack.c.h.b16 %v698
    %v781 = vunpack.c.l.b16 %v699
    %v782 = vunpack.c.h.b16 %v699
    %v783 = vunpack.c.l.b16 %v700
    %v784 = vunpack.c.h.b16 %v700
    %v785 = vunpack.c.l.b16 %v701
    %v786 = vunpack.c.h.b16 %v701
    %v787 = vunpack.c.l.b16 %v702
    %v788 = vunpack.c.h.b16 %v702
    %v789 = vunpack.c.l.b16 %v703
    %v790 = vunpack.c.h.b16 %v703
    %v791 = vunpack.c.l.b16 %v704
    %v792 = vunpack.c.h.b16 %v704
    %v793 = vunpack.c.l.b16 %v705
    %v794 = vunpack.c.h.b16 %v705
    %v795 = vunpack.c.l.b16 %v706
    %v796 = vunpack.c.h.b16 %v706
    %v797 = vunpack.c.l.b16 %v707
    %v798 = vunpack.c.h.b16 %v707
    %v799 = vunpack.c.l.b16 %v708
    %v800 = vunpack.c.h.b16 %v708
    %v801 = vunpack.c.l.b16 %v709
    %v802 = vunpack.c.h.b16 %v709
    %v803 = vunpack.c.l.b16 %v710
    %v804 = vunpack.c.h.b16 %v710
    %v805 = vunpack.c.l.b16 %v711
    %v806 = vunpack.c.h.b16 %v711
    %v807 = vunpack.c.l.b16 %v712
    %v808 = vunpack.c.h.b16 %v712
    %v809 = vpack.c.b16 %v749, %v745
    %v810 = vpack.c.b16 %v750, %v746
    %v811 = vpack.c.b16 %v751, %v747
    %v812 = vpack.c.b16 %v752, %v748
    %v813 = vpack.c.b16 %v757, %v753
    %v814 = vpack.c.b16 %v758, %v754
    %v815 = vpack.c.b16 %v759, %v755
    %v816 = vpack.c.b16 %v760, %v756
    %v817 = vpack.c.b16 %v765, %v761
    %v818 = vpack.c.b16 %v766, %v762
    %v819 = vpack.c.b16 %v767, %v763
    %v820 = vpack.c.b16 %v768, %v764
    %v821 = vpack.c.b16 %v773, %v769
    %v822 = vpack.c.b16 %v774, %v770
    %v823 = vpack.c.b16 %v775, %v771
    %v824 = vpack.c.b16 %v776, %v772
    %v825 = vpack.c.b16 %v781, %v777
    %v826 = vpack.c.b16 %v782, %v778
    %v827 = vpack.c.b16 %v783, %v779
    %v828 = vpack.c.b16 %v784, %v780
    %v829 = vpack.c.b16 %v789, %v785
    %v830 = vpack.c.b16 %v790, %v786
    %v831 = vpack.c.b16 %v791, %v787
    %v832 = vpack.c.b16 %v792, %v788
    %v833 = vpack.c.b16 %v797, %v793
    %v834 = vpack.c.b16 %v798, %v794
    %v835 = vpack.c.b16 %v799, %v795
    %v836 = vpack.c.b16 %v800, %v796
    %v837 = vpack.c.b16 %v805, %v801
    %v838 = vpack.c.b16 %v806, %v802
    %v839 = vpack.c.b16 %v807, %v803
    %v840 = vpack.c.b16 %v808, %v804
    %873 = vmatpush.bf16.msra.mxu0 %v837
    %874 = vmatpush.bf16.msra.mxu0 %v833
    %875 = vmatpush.bf16.msra.mxu0 %v829
    %876 = vmatpush.bf16.msra.mxu0 %v825
    %877 = vmatpush.bf16.msra.mxu0 %v821
    %878 = vmatpush.bf16.msra.mxu0 %v817
    %879 = vmatpush.bf16.msra.mxu0 %v813
    %880 = vmatpush.bf16.msra.mxu0 %v809
    %881 = vmatmul.bf16.gmra.mxu0 0
    %v882 = vpop.f32.mrf.mxu0
    %v883 = vadd.f32 0.0, %v882
    %v884 = vpop.f32.mrf.mxu0
    %885 = vdwg.mxu0
    %886 = vmatpush.bf16.msra.mxu0 %v838
    %887 = vmatpush.bf16.msra.mxu0 %v834
    %888 = vmatpush.bf16.msra.mxu0 %v830
    %889 = vmatpush.bf16.msra.mxu0 %v826
    %890 = vmatpush.bf16.msra.mxu0 %v822
    %891 = vmatpush.bf16.msra.mxu0 %v818
    %892 = vmatpush.bf16.msra.mxu0 %v814
    %893 = vmatpush.bf16.msra.mxu0 %v810
    %894 = vmatmul.bf16.gmra.mxu0 0
    %v895 = vpop.f32.mrf.mxu0
    %v896 = vadd.f32 0.0, %v895
    %v897 = vpop.f32.mrf.mxu0
    %898 = vdwg.mxu0
    %899 = vmatpush.bf16.msra.mxu0 %v839
    %900 = vmatpush.bf16.msra.mxu0 %v835
    %901 = vmatpush.bf16.msra.mxu0 %v831
    %902 = vmatpush.bf16.msra.mxu0 %v827
    %903 = vmatpush.bf16.msra.mxu0 %v823
    %904 = vmatpush.bf16.msra.mxu0 %v819
    %905 = vmatpush.bf16.msra.mxu0 %v815
    %906 = vmatpush.bf16.msra.mxu0 %v811
    %907 = vmatmul.bf16.gmra.mxu0 0
    %v908 = vpop.f32.mrf.mxu0
    %v909 = vadd.f32 0.0, %v908
    %v910 = vpop.f32.mrf.mxu0
    %911 = vdwg.mxu0
    %912 = vmatpush.bf16.msra.mxu0 %v840
    %913 = vmatpush.bf16.msra.mxu0 %v836
    %914 = vmatpush.bf16.msra.mxu0 %v832
    %915 = vmatpush.bf16.msra.mxu0 %v828
    %916 = vmatpush.bf16.msra.mxu0 %v824
    %917 = vmatpush.bf16.msra.mxu0 %v820
    %918 = vmatpush.bf16.msra.mxu0 %v816
    %919 = vmatpush.bf16.msra.mxu0 %v812
    %920 = vmatmul.bf16.gmra.mxu0 0
    %v921 = vpop.f32.mrf.mxu0
    %v922 = vadd.f32 0.0, %v921
    %v923 = vpop.f32.mrf.mxu0
    %924 = vdwg.mxu0
    %v957 = vunpack.c.l.b16 %v649
    %v958 = vunpack.c.h.b16 %v649
    %v959 = vunpack.c.l.b16 %v650
    %v960 = vunpack.c.h.b16 %v650
    %v961 = vunpack.c.l.b16 %v651
    %v962 = vunpack.c.h.b16 %v651
    %v963 = vunpack.c.l.b16 %v652
    %v964 = vunpack.c.h.b16 %v652
    %v965 = vunpack.c.l.b16 %v653
    %v966 = vunpack.c.h.b16 %v653
    %v967 = vunpack.c.l.b16 %v654
    %v968 = vunpack.c.h.b16 %v654
    %v969 = vunpack.c.l.b16 %v655
    %v970 = vunpack.c.h.b16 %v655
    %v971 = vunpack.c.l.b16 %v656
    %v972 = vunpack.c.h.b16 %v656
    %v973 = vunpack.c.l.b16 %v657
    %v974 = vunpack.c.h.b16 %v657
    %v975 = vunpack.c.l.b16 %v658
    %v976 = vunpack.c.h.b16 %v658
    %v977 = vunpack.c.l.b16 %v659
    %v978 = vunpack.c.h.b16 %v659
    %v979 = vunpack.c.l.b16 %v660
    %v980 = vunpack.c.h.b16 %v660
    %v981 = vunpack.c.l.b16 %v661
    %v982 = vunpack.c.h.b16 %v661
    %v983 = vunpack.c.l.b16 %v662
    %v984 = vunpack.c.h.b16 %v662
    %v985 = vunpack.c.l.b16 %v663
    %v986 = vunpack.c.h.b16 %v663
    %v987 = vunpack.c.l.b16 %v664
    %v988 = vunpack.c.h.b16 %v664
    %v989 = vunpack.c.l.b16 %v665
    %v990 = vunpack.c.h.b16 %v665
    %v991 = vunpack.c.l.b16 %v666
    %v992 = vunpack.c.h.b16 %v666
    %v993 = vunpack.c.l.b16 %v667
    %v994 = vunpack.c.h.b16 %v667
    %v995 = vunpack.c.l.b16 %v668
    %v996 = vunpack.c.h.b16 %v668
    %v997 = vunpack.c.l.b16 %v669
    %v998 = vunpack.c.h.b16 %v669
    %v999 = vunpack.c.l.b16 %v670
    %v1000 = vunpack.c.h.b16 %v670
    %v1001 = vunpack.c.l.b16 %v671
    %v1002 = vunpack.c.h.b16 %v671
    %v1003 = vunpack.c.l.b16 %v672
    %v1004 = vunpack.c.h.b16 %v672
    %v1005 = vunpack.c.l.b16 %v673
    %v1006 = vunpack.c.h.b16 %v673
    %v1007 = vunpack.c.l.b16 %v674
    %v1008 = vunpack.c.h.b16 %v674
    %v1009 = vunpack.c.l.b16 %v675
    %v1010 = vunpack.c.h.b16 %v675
    %v1011 = vunpack.c.l.b16 %v676
    %v1012 = vunpack.c.h.b16 %v676
    %v1013 = vunpack.c.l.b16 %v677
    %v1014 = vunpack.c.h.b16 %v677
    %v1015 = vunpack.c.l.b16 %v678
    %v1016 = vunpack.c.h.b16 %v678
    %v1017 = vunpack.c.l.b16 %v679
    %v1018 = vunpack.c.h.b16 %v679
    %v1019 = vunpack.c.l.b16 %v680
    %v1020 = vunpack.c.h.b16 %v680
    %v1021 = vpack.c.b16 %v961, %v957
    %v1022 = vpack.c.b16 %v962, %v958
    %v1023 = vpack.c.b16 %v963, %v959
    %v1024 = vpack.c.b16 %v964, %v960
    %v1025 = vpack.c.b16 %v969, %v965
    %v1026 = vpack.c.b16 %v970, %v966
    %v1027 = vpack.c.b16 %v971, %v967
    %v1028 = vpack.c.b16 %v972, %v968
    %v1029 = vpack.c.b16 %v977, %v973
    %v1030 = vpack.c.b16 %v978, %v974
    %v1031 = vpack.c.b16 %v979, %v975
    %v1032 = vpack.c.b16 %v980, %v976
    %v1033 = vpack.c.b16 %v985, %v981
    %v1034 = vpack.c.b16 %v986, %v982
    %v1035 = vpack.c.b16 %v987, %v983
    %v1036 = vpack.c.b16 %v988, %v984
    %v1037 = vpack.c.b16 %v993, %v989
    %v1038 = vpack.c.b16 %v994, %v990
    %v1039 = vpack.c.b16 %v995, %v991
    %v1040 = vpack.c.b16 %v996, %v992
    %v1041 = vpack.c.b16 %v1001, %v997
    %v1042 = vpack.c.b16 %v1002, %v998
    %v1043 = vpack.c.b16 %v1003, %v999
    %v1044 = vpack.c.b16 %v1004, %v1000
    %v1045 = vpack.c.b16 %v1009, %v1005
    %v1046 = vpack.c.b16 %v1010, %v1006
    %v1047 = vpack.c.b16 %v1011, %v1007
    %v1048 = vpack.c.b16 %v1012, %v1008
    %v1049 = vpack.c.b16 %v1017, %v1013
    %v1050 = vpack.c.b16 %v1018, %v1014
    %v1051 = vpack.c.b16 %v1019, %v1015
    %v1052 = vpack.c.b16 %v1020, %v1016
    %1085 = vmatpush.bf16.msra.mxu0 %v1049
    %1086 = vmatpush.bf16.msra.mxu0 %v1045
    %1087 = vmatpush.bf16.msra.mxu0 %v1041
    %1088 = vmatpush.bf16.msra.mxu0 %v1037
    %1089 = vmatpush.bf16.msra.mxu0 %v1033
    %1090 = vmatpush.bf16.msra.mxu0 %v1029
    %1091 = vmatpush.bf16.msra.mxu0 %v1025
    %1092 = vmatpush.bf16.msra.mxu0 %v1021
    %1093 = vmatmul.bf16.gmra.mxu0 %v648
    %v1094 = vpop.f32.mrf.mxu0
    %v1095 = vadd.f32 %v883, %v1094
    %v1096 = vpop.f32.mrf.mxu0
    %1097 = vdwg.mxu0
    %1098 = vmatpush.bf16.msra.mxu0 %v1050
    %1099 = vmatpush.bf16.msra.mxu0 %v1046
    %1100 = vmatpush.bf16.msra.mxu0 %v1042
    %1101 = vmatpush.bf16.msra.mxu0 %v1038
    %1102 = vmatpush.bf16.msra.mxu0 %v1034
    %1103 = vmatpush.bf16.msra.mxu0 %v1030
    %1104 = vmatpush.bf16.msra.mxu0 %v1026
    %1105 = vmatpush.bf16.msra.mxu0 %v1022
    %1106 = vmatmul.bf16.gmra.mxu0 %v648
    %v1107 = vpop.f32.mrf.mxu0
    %v1108 = vadd.f32 %v896, %v1107
    %v1109 = vpop.f32.mrf.mxu0
    %1110 = vdwg.mxu0
    %1111 = vmatpush.bf16.msra.mxu0 %v1051
    %1112 = vmatpush.bf16.msra.mxu0 %v1047
    %1113 = vmatpush.bf16.msra.mxu0 %v1043
    %1114 = vmatpush.bf16.msra.mxu0 %v1039
    %1115 = vmatpush.bf16.msra.mxu0 %v1035
    %1116 = vmatpush.bf16.msra.mxu0 %v1031
    %1117 = vmatpush.bf16.msra.mxu0 %v1027
    %1118 = vmatpush.bf16.msra.mxu0 %v1023
    %1119 = vmatmul.bf16.gmra.mxu0 %v648
    %v1120 = vpop.f32.mrf.mxu0
    %v1121 = vadd.f32 %v909, %v1120
    %v1122 = vpop.f32.mrf.mxu0
    %1123 = vdwg.mxu0
    %1124 = vmatpush.bf16.msra.mxu0 %v1052
    %1125 = vmatpush.bf16.msra.mxu0 %v1048
    %1126 = vmatpush.bf16.msra.mxu0 %v1044
    %1127 = vmatpush.bf16.msra.mxu0 %v1040
    %1128 = vmatpush.bf16.msra.mxu0 %v1036
    %1129 = vmatpush.bf16.msra.mxu0 %v1032
    %1130 = vmatpush.bf16.msra.mxu0 %v1028
    %1131 = vmatpush.bf16.msra.mxu0 %v1024
    %1132 = vmatmul.bf16.gmra.mxu0 %v648
    %v1133 = vpop.f32.mrf.mxu0
    %v1134 = vadd.f32 %v922, %v1133
    %v1135 = vpop.f32.mrf.mxu0
    %1136 = vdwg.mxu0
    %v1137 = vadd.f32 %v1095, %v99
    %v1138 = vadd.f32 %v1108, %v100
    %v1139 = vadd.f32 %v1121, %v101
    %v1140 = vadd.f32 %v1134, %v102
    %v1141 = vxor.u32 %v1137, 2147483648
    %v1142 = vxor.u32 %v1138, 2147483648
    %v1143 = vxor.u32 %v1139, 2147483648
    %v1144 = vmul.f32 %v1141, 1.442695
    %v1145 = vpow.pop %v1144
    %v1146 = vmul.f32 %v1142, 1.442695
    %v1147 = vpow.pop %v1146
    %v1148 = vmul.f32 %v1143, 1.442695
    %v1149 = vpow.pop %v1148
    %v1150 = vadd.f32 %v1145, 1.0
    %v1151 = vadd.f32 %v1147, 1.0
    %v1152 = vadd.f32 %v1149, 1.0
    %v1153 = vrcp.pop %v1150
    %v1154 = vmul.f32 %v1150, %v1153
    %v1155 = vsub.f32 1.0, %v1154
    %v1156 = vmul.f32 %v1153, %v1155
    %v1157 = vadd.f32 %v1153, %v1156
    %vm1158 = vweird.f32 %v1150
    %vm1159 = vweird.f32 %v1153
    %vm1160 = vmor %vm1158, %vm1159
    %v1161 = vsel %vm1160, %v1153, %v1157
    %v1162 = vand.u32 2147483647, %v1150
    %vm1163 = vcmp.eq.f32.partialorder %v1162, 8.507059e+37
    %v1164 = vand.u32 %v1150, 2147483648
    %v1165 = vor.u32 1.1754944e-38, %v1164
    %v1166 = vsel %vm1163, %v1165, %v1161
    %v1167 = vmul.f32 1.0, %v1166
    %v1168 = vrcp.pop %v1151
    %v1169 = vmul.f32 %v1151, %v1168
    %v1170 = vsub.f32 1.0, %v1169
    %v1171 = vmul.f32 %v1168, %v1170
    %v1172 = vadd.f32 %v1168, %v1171
    %vm1173 = vweird.f32 %v1151
    %vm1174 = vweird.f32 %v1168
    %vm1175 = vmor %vm1173, %vm1174
    %v1176 = vsel %vm1175, %v1168, %v1172
    %v1177 = vand.u32 2147483647, %v1151
    %vm1178 = vcmp.eq.f32.partialorder %v1177, 8.507059e+37
    %v1179 = vand.u32 %v1151, 2147483648
    %v1180 = vor.u32 1.1754944e-38, %v1179
    %v1181 = vsel %vm1178, %v1180, %v1176
    %v1182 = vmul.f32 1.0, %v1181
    %v1183 = vrcp.pop %v1152
    %v1184 = vmul.f32 %v1152, %v1183
    %v1185 = vsub.f32 1.0, %v1184
    %v1186 = vmul.f32 %v1183, %v1185
    %v1187 = vadd.f32 %v1183, %v1186
    %vm1188 = vweird.f32 %v1152
    %vm1189 = vweird.f32 %v1183
    %vm1190 = vmor %vm1188, %vm1189
    %v1191 = vsel %vm1190, %v1183, %v1187
    %v1192 = vand.u32 2147483647, %v1152
    %vm1193 = vcmp.eq.f32.partialorder %v1192, 8.507059e+37
    %v1194 = vand.u32 %v1152, 2147483648
    %v1195 = vor.u32 1.1754944e-38, %v1194
    %v1196 = vsel %vm1193, %v1195, %v1191
    %v1197 = vmul.f32 1.0, %v1196
    %v1198 = vtanh.pop %v1140
    %v1199 = vmul.f32 %v1182, 0.0
    %v1200 = vmul.f32 %v1167, %v1198
    %v1201 = vadd.f32 %v1199, %v1200
    %v1202 = vtanh.pop %v1201
    %v1203 = vmul.f32 %v1197, %v1202
    %s1204 = smul.u32 1, 4
    %s1205 = smul.addr %s1204, 8
    %s1206 = scalar_lea.vmem [#allocation2], %s1205
    %v1207 = vld [vmem:[%s1206] sm:$0xff]
    %v1208 = vld [vmem:[%s1206 + $0x8] sm:$0xff]
    %v1209 = vld [vmem:[%s1206 + $0x10] sm:$0xff]
    %v1210 = vld [vmem:[%s1206 + $0x18] sm:$0xff]
    %1211 = vmatpush.bf16.msra.mxu0 %v493
    %1212 = vmatpush.bf16.msra.mxu0 %v489
    %1213 = vmatpush.bf16.msra.mxu0 %v485
    %1214 = vmatpush.bf16.msra.mxu0 %v481
    %1215 = vmatpush.bf16.msra.mxu0 %v477
    %1216 = vmatpush.bf16.msra.mxu0 %v473
    %1217 = vmatpush.bf16.msra.mxu0 %v469
    %1218 = vmatpush.bf16.msra.mxu0 %v465
    %1219 = vmatmul.bf16.gmra.mxu0 %v648
    %v1220 = vpop.f32.mrf.mxu0
    %v1221 = vadd.f32 0.0, %v1220
    %v1222 = vpop.f32.mrf.mxu0
    %1223 = vdwg.mxu0
    %1224 = vmatpush.bf16.msra.mxu0 %v494
    %1225 = vmatpush.bf16.msra.mxu0 %v490
    %1226 = vmatpush.bf16.msra.mxu0 %v486
    %1227 = vmatpush.bf16.msra.mxu0 %v482
    %1228 = vmatpush.bf16.msra.mxu0 %v478
    %1229 = vmatpush.bf16.msra.mxu0 %v474
    %1230 = vmatpush.bf16.msra.mxu0 %v470
    %1231 = vmatpush.bf16.msra.mxu0 %v466
    %1232 = vmatmul.bf16.gmra.mxu0 %v648
    %v1233 = vpop.f32.mrf.mxu0
    %v1234 = vadd.f32 0.0, %v1233
    %v1235 = vpop.f32.mrf.mxu0
    %1236 = vdwg.mxu0
    %1237 = vmatpush.bf16.msra.mxu0 %v495
    %1238 = vmatpush.bf16.msra.mxu0 %v491
    %1239 = vmatpush.bf16.msra.mxu0 %v487
    %1240 = vmatpush.bf16.msra.mxu0 %v483
    %1241 = vmatpush.bf16.msra.mxu0 %v479
    %1242 = vmatpush.bf16.msra.mxu0 %v475
    %1243 = vmatpush.bf16.msra.mxu0 %v471
    %1244 = vmatpush.bf16.msra.mxu0 %v467
    %1245 = vmatmul.bf16.gmra.mxu0 %v648
    %v1246 = vpop.f32.mrf.mxu0
    %v1247 = vadd.f32 0.0, %v1246
    %v1248 = vpop.f32.mrf.mxu0
    %1249 = vdwg.mxu0
    %1250 = vmatpush.bf16.msra.mxu0 %v496
    %1251 = vmatpush.bf16.msra.mxu0 %v492
    %1252 = vmatpush.bf16.msra.mxu0 %v488
    %1253 = vmatpush.bf16.msra.mxu0 %v484
    %1254 = vmatpush.bf16.msra.mxu0 %v480
    %1255 = vmatpush.bf16.msra.mxu0 %v476
    %1256 = vmatpush.bf16.msra.mxu0 %v472
    %1257 = vmatpush.bf16.msra.mxu0 %v468
    %1258 = vmatmul.bf16.gmra.mxu0 %v648
    %v1259 = vpop.f32.mrf.mxu0
    %v1260 = vadd.f32 0.0, %v1259
    %v1261 = vpop.f32.mrf.mxu0
    %1262 = vdwg.mxu0
    %v1263 = vadd.f32 %v1207, %v1221
    %v1264 = vadd.f32 %v1208, %v1234
    %v1265 = vadd.f32 %v1209, %v1247
    %v1266 = vadd.f32 %v1210, %v1260
    %v1267 = vxor.u32 %v1263, 2147483648
    %v1268 = vxor.u32 %v1264, 2147483648
    %v1269 = vxor.u32 %v1265, 2147483648
    %v1270 = vmul.f32 %v1267, 1.442695
    %v1271 = vpow.pop %v1270
    %v1272 = vmul.f32 %v1268, 1.442695
    %v1273 = vpow.pop %v1272
    %v1274 = vmul.f32 %v1269, 1.442695
    %v1275 = vpow.pop %v1274
    %v1276 = vadd.f32 %v1271, 1.0
    %v1277 = vadd.f32 %v1273, 1.0
    %v1278 = vadd.f32 %v1275, 1.0
    %v1279 = vrcp.pop %v1276
    %v1280 = vmul.f32 %v1276, %v1279
    %v1281 = vsub.f32 1.0, %v1280
    %v1282 = vmul.f32 %v1279, %v1281
    %v1283 = vadd.f32 %v1279, %v1282
    %vm1284 = vweird.f32 %v1276
    %vm1285 = vweird.f32 %v1279
    %vm1286 = vmor %vm1284, %vm1285
    %v1287 = vsel %vm1286, %v1279, %v1283
    %v1288 = vand.u32 2147483647, %v1276
    %vm1289 = vcmp.eq.f32.partialorder %v1288, 8.507059e+37
    %v1290 = vand.u32 %v1276, 2147483648
    %v1291 = vor.u32 1.1754944e-38, %v1290
    %v1292 = vsel %vm1289, %v1291, %v1287
    %v1293 = vmul.f32 1.0, %v1292
    %v1294 = vrcp.pop %v1277
    %v1295 = vmul.f32 %v1277, %v1294
    %v1296 = vsub.f32 1.0, %v1295
    %v1297 = vmul.f32 %v1294, %v1296
    %v1298 = vadd.f32 %v1294, %v1297
    %vm1299 = vweird.f32 %v1277
    %vm1300 = vweird.f32 %v1294
    %vm1301 = vmor %vm1299, %vm1300
    %v1302 = vsel %vm1301, %v1294, %v1298
    %v1303 = vand.u32 2147483647, %v1277
    %vm1304 = vcmp.eq.f32.partialorder %v1303, 8.507059e+37
    %v1305 = vand.u32 %v1277, 2147483648
    %v1306 = vor.u32 1.1754944e-38, %v1305
    %v1307 = vsel %vm1304, %v1306, %v1302
    %v1308 = vmul.f32 1.0, %v1307
    %v1309 = vrcp.pop %v1278
    %v1310 = vmul.f32 %v1278, %v1309
    %v1311 = vsub.f32 1.0, %v1310
    %v1312 = vmul.f32 %v1309, %v1311
    %v1313 = vadd.f32 %v1309, %v1312
    %vm1314 = vweird.f32 %v1278
    %vm1315 = vweird.f32 %v1309
    %vm1316 = vmor %vm1314, %vm1315
    %v1317 = vsel %vm1316, %v1309, %v1313
    %v1318 = vand.u32 2147483647, %v1278
    %vm1319 = vcmp.eq.f32.partialorder %v1318, 8.507059e+37
    %v1320 = vand.u32 %v1278, 2147483648
    %v1321 = vor.u32 1.1754944e-38, %v1320
    %v1322 = vsel %vm1319, %v1321, %v1317
    %v1323 = vmul.f32 1.0, %v1322
    %v1324 = vtanh.pop %v1266
    %v1325 = vmul.f32 %v1308, %v645
    %v1326 = vmul.f32 %v1293, %v1324
    %v1327 = vadd.f32 %v1325, %v1326
    %v1328 = vtanh.pop %v1327
    %v1329 = vmul.f32 %v1323, %v1328
    %v1330 = vpack.c.bf16 %v1329, %v1329
    %v1331 = vpack.c.bf16 %v1203, %v1203
    %1332 = vmatpush.bf16.msra.mxu0 %v837
    %1333 = vmatpush.bf16.msra.mxu0 %v833
    %1334 = vmatpush.bf16.msra.mxu0 %v829
    %1335 = vmatpush.bf16.msra.mxu0 %v825
    %1336 = vmatpush.bf16.msra.mxu0 %v821
    %1337 = vmatpush.bf16.msra.mxu0 %v817
    %1338 = vmatpush.bf16.msra.mxu0 %v813
    %1339 = vmatpush.bf16.msra.mxu0 %v809
    %1340 = vmatmul.bf16.gmra.mxu0 %v1331
    %v1341 = vpop.f32.mrf.mxu0
    %v1342 = vadd.f32 0.0, %v1341
    %v1343 = vpop.f32.mrf.mxu0
    %1344 = vdwg.mxu0
    %1345 = vmatpush.bf16.msra.mxu0 %v838
    %1346 = vmatpush.bf16.msra.mxu0 %v834
    %1347 = vmatpush.bf16.msra.mxu0 %v830
    %1348 = vmatpush.bf16.msra.mxu0 %v826
    %1349 = vmatpush.bf16.msra.mxu0 %v822
    %1350 = vmatpush.bf16.msra.mxu0 %v818
    %1351 = vmatpush.bf16.msra.mxu0 %v814
    %1352 = vmatpush.bf16.msra.mxu0 %v810
    %1353 = vmatmul.bf16.gmra.mxu0 %v1331
    %v1354 = vpop.f32.mrf.mxu0
    %v1355 = vadd.f32 0.0, %v1354
    %v1356 = vpop.f32.mrf.mxu0
    %1357 = vdwg.mxu0
    %1358 = vmatpush.bf16.msra.mxu0 %v839
    %1359 = vmatpush.bf16.msra.mxu0 %v835
    %1360 = vmatpush.bf16.msra.mxu0 %v831
    %1361 = vmatpush.bf16.msra.mxu0 %v827
    %1362 = vmatpush.bf16.msra.mxu0 %v823
    %1363 = vmatpush.bf16.msra.mxu0 %v819
    %1364 = vmatpush.bf16.msra.mxu0 %v815
    %1365 = vmatpush.bf16.msra.mxu0 %v811
    %1366 = vmatmul.bf16.gmra.mxu0 %v1331
    %v1367 = vpop.f32.mrf.mxu0
    %v1368 = vadd.f32 0.0, %v1367
    %v1369 = vpop.f32.mrf.mxu0
    %1370 = vdwg.mxu0
    %1371 = vmatpush.bf16.msra.mxu0 %v840
    %1372 = vmatpush.bf16.msra.mxu0 %v836
    %1373 = vmatpush.bf16.msra.mxu0 %v832
    %1374 = vmatpush.bf16.msra.mxu0 %v828
    %1375 = vmatpush.bf16.msra.mxu0 %v824
    %1376 = vmatpush.bf16.msra.mxu0 %v820
    %1377 = vmatpush.bf16.msra.mxu0 %v816
    %1378 = vmatpush.bf16.msra.mxu0 %v812
    %1379 = vmatmul.bf16.gmra.mxu0 %v1331
    %v1380 = vpop.f32.mrf.mxu0
    %v1381 = vadd.f32 0.0, %v1380
    %v1382 = vpop.f32.mrf.mxu0
    %1383 = vdwg.mxu0
    %1384 = vmatpush.bf16.msra.mxu0 %v1049
    %1385 = vmatpush.bf16.msra.mxu0 %v1045
    %1386 = vmatpush.bf16.msra.mxu0 %v1041
    %1387 = vmatpush.bf16.msra.mxu0 %v1037
    %1388 = vmatpush.bf16.msra.mxu0 %v1033
    %1389 = vmatpush.bf16.msra.mxu0 %v1029
    %1390 = vmatpush.bf16.msra.mxu0 %v1025
    %1391 = vmatpush.bf16.msra.mxu0 %v1021
    %1392 = vmatmul.bf16.gmra.mxu0 %v1330
    %v1393 = vpop.f32.mrf.mxu0
    %v1394 = vadd.f32 %v1342, %v1393
    %v1395 = vpop.f32.mrf.mxu0
    %1396 = vdwg.mxu0
    %1397 = vmatpush.bf16.msra.mxu0 %v1050
    %1398 = vmatpush.bf16.msra.mxu0 %v1046
    %1399 = vmatpush.bf16.msra.mxu0 %v1042
    %1400 = vmatpush.bf16.msra.mxu0 %v1038
    %1401 = vmatpush.bf16.msra.mxu0 %v1034
    %1402 = vmatpush.bf16.msra.mxu0 %v1030
    %1403 = vmatpush.bf16.msra.mxu0 %v1026
    %1404 = vmatpush.bf16.msra.mxu0 %v1022
    %1405 = vmatmul.bf16.gmra.mxu0 %v1330
    %v1406 = vpop.f32.mrf.mxu0
    %v1407 = vadd.f32 %v1355, %v1406
    %v1408 = vpop.f32.mrf.mxu0
    %1409 = vdwg.mxu0
    %1410 = vmatpush.bf16.msra.mxu0 %v1051
    %1411 = vmatpush.bf16.msra.mxu0 %v1047
    %1412 = vmatpush.bf16.msra.mxu0 %v1043
    %1413 = vmatpush.bf16.msra.mxu0 %v1039
    %1414 = vmatpush.bf16.msra.mxu0 %v1035
    %1415 = vmatpush.bf16.msra.mxu0 %v1031
    %1416 = vmatpush.bf16.msra.mxu0 %v1027
    %1417 = vmatpush.bf16.msra.mxu0 %v1023
    %1418 = vmatmul.bf16.gmra.mxu0 %v1330
    %v1419 = vpop.f32.mrf.mxu0
    %v1420 = vadd.f32 %v1368, %v1419
    %v1421 = vpop.f32.mrf.mxu0
    %1422 = vdwg.mxu0
    %1423 = vmatpush.bf16.msra.mxu0 %v1052
    %1424 = vmatpush.bf16.msra.mxu0 %v1048
    %1425 = vmatpush.bf16.msra.mxu0 %v1044
    %1426 = vmatpush.bf16.msra.mxu0 %v1040
    %1427 = vmatpush.bf16.msra.mxu0 %v1036
    %1428 = vmatpush.bf16.msra.mxu0 %v1032
    %1429 = vmatpush.bf16.msra.mxu0 %v1028
    %1430 = vmatpush.bf16.msra.mxu0 %v1024
    %1431 = vmatmul.bf16.gmra.mxu0 %v1330
    %v1432 = vpop.f32.mrf.mxu0
    %v1433 = vadd.f32 %v1381, %v1432
    %v1434 = vpop.f32.mrf.mxu0
    %1435 = vdwg.mxu0
    %v1436 = vadd.f32 %v1394, %v99
    %v1437 = vadd.f32 %v1407, %v100
    %v1438 = vadd.f32 %v1420, %v101
    %v1439 = vadd.f32 %v1433, %v102
    %v1440 = vxor.u32 %v1436, 2147483648
    %v1441 = vxor.u32 %v1437, 2147483648
    %v1442 = vxor.u32 %v1438, 2147483648
    %v1443 = vmul.f32 %v1440, 1.442695
    %v1444 = vpow.pop %v1443
    %v1445 = vmul.f32 %v1441, 1.442695
    %v1446 = vpow.pop %v1445
    %v1447 = vmul.f32 %v1442, 1.442695
    %v1448 = vpow.pop %v1447
    %v1449 = vadd.f32 %v1444, 1.0
    %v1450 = vadd.f32 %v1446, 1.0
    %v1451 = vadd.f32 %v1448, 1.0
    %v1452 = vrcp.pop %v1449
    %v1453 = vmul.f32 %v1449, %v1452
    %v1454 = vsub.f32 1.0, %v1453
    %v1455 = vmul.f32 %v1452, %v1454
    %v1456 = vadd.f32 %v1452, %v1455
    %vm1457 = vweird.f32 %v1449
    %vm1458 = vweird.f32 %v1452
    %vm1459 = vmor %vm1457, %vm1458
    %v1460 = vsel %vm1459, %v1452, %v1456
    %v1461 = vand.u32 2147483647, %v1449
    %vm1462 = vcmp.eq.f32.partialorder %v1461, 8.507059e+37
    %v1463 = vand.u32 %v1449, 2147483648
    %v1464 = vor.u32 1.1754944e-38, %v1463
    %v1465 = vsel %vm1462, %v1464, %v1460
    %v1466 = vmul.f32 1.0, %v1465
    %v1467 = vrcp.pop %v1450
    %v1468 = vmul.f32 %v1450, %v1467
    %v1469 = vsub.f32 1.0, %v1468
    %v1470 = vmul.f32 %v1467, %v1469
    %v1471 = vadd.f32 %v1467, %v1470
    %vm1472 = vweird.f32 %v1450
    %vm1473 = vweird.f32 %v1467
    %vm1474 = vmor %vm1472, %vm1473
    %v1475 = vsel %vm1474, %v1467, %v1471
    %v1476 = vand.u32 2147483647, %v1450
    %vm1477 = vcmp.eq.f32.partialorder %v1476, 8.507059e+37
    %v1478 = vand.u32 %v1450, 2147483648
    %v1479 = vor.u32 1.1754944e-38, %v1478
    %v1480 = vsel %vm1477, %v1479, %v1475
    %v1481 = vmul.f32 1.0, %v1480
    %v1482 = vrcp.pop %v1451
    %v1483 = vmul.f32 %v1451, %v1482
    %v1484 = vsub.f32 1.0, %v1483
    %v1485 = vmul.f32 %v1482, %v1484
    %v1486 = vadd.f32 %v1482, %v1485
    %vm1487 = vweird.f32 %v1451
    %vm1488 = vweird.f32 %v1482
    %vm1489 = vmor %vm1487, %vm1488
    %v1490 = vsel %vm1489, %v1482, %v1486
    %v1491 = vand.u32 2147483647, %v1451
    %vm1492 = vcmp.eq.f32.partialorder %v1491, 8.507059e+37
    %v1493 = vand.u32 %v1451, 2147483648
    %v1494 = vor.u32 1.1754944e-38, %v1493
    %v1495 = vsel %vm1492, %v1494, %v1490
    %v1496 = vmul.f32 1.0, %v1495
    %v1497 = vtanh.pop %v1439
    %v1498 = vmul.f32 %v1481, %v1201
    %v1499 = vmul.f32 %v1466, %v1497
    %v1500 = vadd.f32 %v1498, %v1499
    %v1501 = vtanh.pop %v1500
    %v1502 = vmul.f32 %v1496, %v1501
    %s1503 = smul.u32 2, 4
    %s1504 = smul.addr %s1503, 8
    %s1505 = scalar_lea.vmem [#allocation2], %s1504
    %v1506 = vld [vmem:[%s1505] sm:$0xff]
    %v1507 = vld [vmem:[%s1505 + $0x8] sm:$0xff]
    %v1508 = vld [vmem:[%s1505 + $0x10] sm:$0xff]
    %v1509 = vld [vmem:[%s1505 + $0x18] sm:$0xff]
    %1510 = vmatpush.bf16.msra.mxu0 %v493
    %1511 = vmatpush.bf16.msra.mxu0 %v489
    %1512 = vmatpush.bf16.msra.mxu0 %v485
    %1513 = vmatpush.bf16.msra.mxu0 %v481
    %1514 = vmatpush.bf16.msra.mxu0 %v477
    %1515 = vmatpush.bf16.msra.mxu0 %v473
    %1516 = vmatpush.bf16.msra.mxu0 %v469
    %1517 = vmatpush.bf16.msra.mxu0 %v465
    %1518 = vmatmul.bf16.gmra.mxu0 %v1330
    %v1519 = vpop.f32.mrf.mxu0
    %v1520 = vadd.f32 0.0, %v1519
    %v1521 = vpop.f32.mrf.mxu0
    %1522 = vdwg.mxu0
    %1523 = vmatpush.bf16.msra.mxu0 %v494
    %1524 = vmatpush.bf16.msra.mxu0 %v490
    %1525 = vmatpush.bf16.msra.mxu0 %v486
    %1526 = vmatpush.bf16.msra.mxu0 %v482
    %1527 = vmatpush.bf16.msra.mxu0 %v478
    %1528 = vmatpush.bf16.msra.mxu0 %v474
    %1529 = vmatpush.bf16.msra.mxu0 %v470
    %1530 = vmatpush.bf16.msra.mxu0 %v466
    %1531 = vmatmul.bf16.gmra.mxu0 %v1330
    %v1532 = vpop.f32.mrf.mxu0
    %v1533 = vadd.f32 0.0, %v1532
    %v1534 = vpop.f32.mrf.mxu0
    %1535 = vdwg.mxu0
    %1536 = vmatpush.bf16.msra.mxu0 %v495
    %1537 = vmatpush.bf16.msra.mxu0 %v491
    %1538 = vmatpush.bf16.msra.mxu0 %v487
    %1539 = vmatpush.bf16.msra.mxu0 %v483
    %1540 = vmatpush.bf16.msra.mxu0 %v479
    %1541 = vmatpush.bf16.msra.mxu0 %v475
    %1542 = vmatpush.bf16.msra.mxu0 %v471
    %1543 = vmatpush.bf16.msra.mxu0 %v467
    %1544 = vmatmul.bf16.gmra.mxu0 %v1330
    %v1545 = vpop.f32.mrf.mxu0
    %v1546 = vadd.f32 0.0, %v1545
    %v1547 = vpop.f32.mrf.mxu0
    %1548 = vdwg.mxu0
    %1549 = vmatpush.bf16.msra.mxu0 %v496
    %1550 = vmatpush.bf16.msra.mxu0 %v492
    %1551 = vmatpush.bf16.msra.mxu0 %v488
    %1552 = vmatpush.bf16.msra.mxu0 %v484
    %1553 = vmatpush.bf16.msra.mxu0 %v480
    %1554 = vmatpush.bf16.msra.mxu0 %v476
    %1555 = vmatpush.bf16.msra.mxu0 %v472
    %1556 = vmatpush.bf16.msra.mxu0 %v468
    %1557 = vmatmul.bf16.gmra.mxu0 %v1330
    %v1558 = vpop.f32.mrf.mxu0
    %v1559 = vadd.f32 0.0, %v1558
    %v1560 = vpop.f32.mrf.mxu0
    %1561 = vdwg.mxu0
    %v1562 = vadd.f32 %v1506, %v1520
    %v1563 = vadd.f32 %v1507, %v1533
    %v1564 = vadd.f32 %v1508, %v1546
    %v1565 = vadd.f32 %v1509, %v1559
    %v1566 = vxor.u32 %v1562, 2147483648
    %v1567 = vxor.u32 %v1563, 2147483648
    %v1568 = vxor.u32 %v1564, 2147483648
    %v1569 = vmul.f32 %v1566, 1.442695
    %v1570 = vpow.pop %v1569
    %v1571 = vmul.f32 %v1567, 1.442695
    %v1572 = vpow.pop %v1571
    %v1573 = vmul.f32 %v1568, 1.442695
    %v1574 = vpow.pop %v1573
    %v1575 = vadd.f32 %v1570, 1.0
    %v1576 = vadd.f32 %v1572, 1.0
    %v1577 = vadd.f32 %v1574, 1.0
    %v1578 = vrcp.pop %v1575
    %v1579 = vmul.f32 %v1575, %v1578
    %v1580 = vsub.f32 1.0, %v1579
    %v1581 = vmul.f32 %v1578, %v1580
    %v1582 = vadd.f32 %v1578, %v1581
    %vm1583 = vweird.f32 %v1575
    %vm1584 = vweird.f32 %v1578
    %vm1585 = vmor %vm1583, %vm1584
    %v1586 = vsel %vm1585, %v1578, %v1582
    %v1587 = vand.u32 2147483647, %v1575
    %vm1588 = vcmp.eq.f32.partialorder %v1587, 8.507059e+37
    %v1589 = vand.u32 %v1575, 2147483648
    %v1590 = vor.u32 1.1754944e-38, %v1589
    %v1591 = vsel %vm1588, %v1590, %v1586
    %v1592 = vmul.f32 1.0, %v1591
    %v1593 = vrcp.pop %v1576
    %v1594 = vmul.f32 %v1576, %v1593
    %v1595 = vsub.f32 1.0, %v1594
    %v1596 = vmul.f32 %v1593, %v1595
    %v1597 = vadd.f32 %v1593, %v1596
    %vm1598 = vweird.f32 %v1576
    %vm1599 = vweird.f32 %v1593
    %vm1600 = vmor %vm1598, %vm1599
    %v1601 = vsel %vm1600, %v1593, %v1597
    %v1602 = vand.u32 2147483647, %v1576
    %vm1603 = vcmp.eq.f32.partialorder %v1602, 8.507059e+37
    %v1604 = vand.u32 %v1576, 2147483648
    %v1605 = vor.u32 1.1754944e-38, %v1604
    %v1606 = vsel %vm1603, %v1605, %v1601
    %v1607 = vmul.f32 1.0, %v1606
    %v1608 = vrcp.pop %v1577
    %v1609 = vmul.f32 %v1577, %v1608
    %v1610 = vsub.f32 1.0, %v1609
    %v1611 = vmul.f32 %v1608, %v1610
    %v1612 = vadd.f32 %v1608, %v1611
    %vm1613 = vweird.f32 %v1577
    %vm1614 = vweird.f32 %v1608
    %vm1615 = vmor %vm1613, %vm1614
    %v1616 = vsel %vm1615, %v1608, %v1612
    %v1617 = vand.u32 2147483647, %v1577
    %vm1618 = vcmp.eq.f32.partialorder %v1617, 8.507059e+37
    %v1619 = vand.u32 %v1577, 2147483648
    %v1620 = vor.u32 1.1754944e-38, %v1619
    %v1621 = vsel %vm1618, %v1620, %v1616
    %v1622 = vmul.f32 1.0, %v1621
    %v1623 = vtanh.pop %v1565
    %v1624 = vmul.f32 %v1607, %v1327
    %v1625 = vmul.f32 %v1592, %v1623
    %v1626 = vadd.f32 %v1624, %v1625
    %v1627 = vtanh.pop %v1626
    %v1628 = vmul.f32 %v1622, %v1627
    %v1629 = vpack.c.bf16 %v1628, %v1628
    %v1630 = vpack.c.bf16 %v1502, %v1502
    %1631 = vmatpush.bf16.msra.mxu0 %v837
    %1632 = vmatpush.bf16.msra.mxu0 %v833
    %1633 = vmatpush.bf16.msra.mxu0 %v829
    %1634 = vmatpush.bf16.msra.mxu0 %v825
    %1635 = vmatpush.bf16.msra.mxu0 %v821
    %1636 = vmatpush.bf16.msra.mxu0 %v817
    %1637 = vmatpush.bf16.msra.mxu0 %v813
    %1638 = vmatpush.bf16.msra.mxu0 %v809
    %1639 = vmatmul.bf16.gmra.mxu0 %v1630
    %v1640 = vpop.f32.mrf.mxu0
    %v1641 = vadd.f32 0.0, %v1640
    %v1642 = vpop.f32.mrf.mxu0
    %1643 = vdwg.mxu0
    %1644 = vmatpush.bf16.msra.mxu0 %v838
    %1645 = vmatpush.bf16.msra.mxu0 %v834
    %1646 = vmatpush.bf16.msra.mxu0 %v830
    %1647 = vmatpush.bf16.msra.mxu0 %v826
    %1648 = vmatpush.bf16.msra.mxu0 %v822
    %1649 = vmatpush.bf16.msra.mxu0 %v818
    %1650 = vmatpush.bf16.msra.mxu0 %v814
    %1651 = vmatpush.bf16.msra.mxu0 %v810
    %1652 = vmatmul.bf16.gmra.mxu0 %v1630
    %v1653 = vpop.f32.mrf.mxu0
    %v1654 = vadd.f32 0.0, %v1653
    %v1655 = vpop.f32.mrf.mxu0
    %1656 = vdwg.mxu0
    %1657 = vmatpush.bf16.msra.mxu0 %v839
    %1658 = vmatpush.bf16.msra.mxu0 %v835
    %1659 = vmatpush.bf16.msra.mxu0 %v831
    %1660 = vmatpush.bf16.msra.mxu0 %v827
    %1661 = vmatpush.bf16.msra.mxu0 %v823
    %1662 = vmatpush.bf16.msra.mxu0 %v819
    %1663 = vmatpush.bf16.msra.mxu0 %v815
    %1664 = vmatpush.bf16.msra.mxu0 %v811
    %1665 = vmatmul.bf16.gmra.mxu0 %v1630
    %v1666 = vpop.f32.mrf.mxu0
    %v1667 = vadd.f32 0.0, %v1666
    %v1668 = vpop.f32.mrf.mxu0
    %1669 = vdwg.mxu0
    %1670 = vmatpush.bf16.msra.mxu0 %v840
    %1671 = vmatpush.bf16.msra.mxu0 %v836
    %1672 = vmatpush.bf16.msra.mxu0 %v832
    %1673 = vmatpush.bf16.msra.mxu0 %v828
    %1674 = vmatpush.bf16.msra.mxu0 %v824
    %1675 = vmatpush.bf16.msra.mxu0 %v820
    %1676 = vmatpush.bf16.msra.mxu0 %v816
    %1677 = vmatpush.bf16.msra.mxu0 %v812
    %1678 = vmatmul.bf16.gmra.mxu0 %v1630
    %v1679 = vpop.f32.mrf.mxu0
    %v1680 = vadd.f32 0.0, %v1679
    %v1681 = vpop.f32.mrf.mxu0
    %1682 = vdwg.mxu0
    %1683 = vmatpush.bf16.msra.mxu0 %v1049
    %1684 = vmatpush.bf16.msra.mxu0 %v1045
    %1685 = vmatpush.bf16.msra.mxu0 %v1041
    %1686 = vmatpush.bf16.msra.mxu0 %v1037
    %1687 = vmatpush.bf16.msra.mxu0 %v1033
    %1688 = vmatpush.bf16.msra.mxu0 %v1029
    %1689 = vmatpush.bf16.msra.mxu0 %v1025
    %1690 = vmatpush.bf16.msra.mxu0 %v1021
    %1691 = vmatmul.bf16.gmra.mxu0 %v1629
    %v1692 = vpop.f32.mrf.mxu0
    %v1693 = vadd.f32 %v1641, %v1692
    %v1694 = vpop.f32.mrf.mxu0
    %1695 = vdwg.mxu0
    %1696 = vmatpush.bf16.msra.mxu0 %v1050
    %1697 = vmatpush.bf16.msra.mxu0 %v1046
    %1698 = vmatpush.bf16.msra.mxu0 %v1042
    %1699 = vmatpush.bf16.msra.mxu0 %v1038
    %1700 = vmatpush.bf16.msra.mxu0 %v1034
    %1701 = vmatpush.bf16.msra.mxu0 %v1030
    %1702 = vmatpush.bf16.msra.mxu0 %v1026
    %1703 = vmatpush.bf16.msra.mxu0 %v1022
    %1704 = vmatmul.bf16.gmra.mxu0 %v1629
    %v1705 = vpop.f32.mrf.mxu0
    %v1706 = vadd.f32 %v1654, %v1705
    %v1707 = vpop.f32.mrf.mxu0
    %1708 = vdwg.mxu0
    %1709 = vmatpush.bf16.msra.mxu0 %v1051
    %1710 = vmatpush.bf16.msra.mxu0 %v1047
    %1711 = vmatpush.bf16.msra.mxu0 %v1043
    %1712 = vmatpush.bf16.msra.mxu0 %v1039
    %1713 = vmatpush.bf16.msra.mxu0 %v1035
    %1714 = vmatpush.bf16.msra.mxu0 %v1031
    %1715 = vmatpush.bf16.msra.mxu0 %v1027
    %1716 = vmatpush.bf16.msra.mxu0 %v1023
    %1717 = vmatmul.bf16.gmra.mxu0 %v1629
    %v1718 = vpop.f32.mrf.mxu0
    %v1719 = vadd.f32 %v1667, %v1718
    %v1720 = vpop.f32.mrf.mxu0
    %1721 = vdwg.mxu0
    %1722 = vmatpush.bf16.msra.mxu0 %v1052
    %1723 = vmatpush.bf16.msra.mxu0 %v1048
    %1724 = vmatpush.bf16.msra.mxu0 %v1044
    %1725 = vmatpush.bf16.msra.mxu0 %v1040
    %1726 = vmatpush.bf16.msra.mxu0 %v1036
    %1727 = vmatpush.bf16.msra.mxu0 %v1032
    %1728 = vmatpush.bf16.msra.mxu0 %v1028
    %1729 = vmatpush.bf16.msra.mxu0 %v1024
    %1730 = vmatmul.bf16.gmra.mxu0 %v1629
    %v1731 = vpop.f32.mrf.mxu0
    %v1732 = vadd.f32 %v1680, %v1731
    %v1733 = vpop.f32.mrf.mxu0
    %1734 = vdwg.mxu0
    %v1735 = vadd.f32 %v1693, %v99
    %v1736 = vadd.f32 %v1706, %v100
    %v1737 = vadd.f32 %v1719, %v101
    %v1738 = vadd.f32 %v1732, %v102
    %v1739 = vxor.u32 %v1735, 2147483648
    %v1740 = vxor.u32 %v1736, 2147483648
    %v1741 = vxor.u32 %v1737, 2147483648
    %v1742 = vmul.f32 %v1739, 1.442695
    %v1743 = vpow.pop %v1742
    %v1744 = vmul.f32 %v1740, 1.442695
    %v1745 = vpow.pop %v1744
    %v1746 = vmul.f32 %v1741, 1.442695
    %v1747 = vpow.pop %v1746
    %v1748 = vadd.f32 %v1743, 1.0
    %v1749 = vadd.f32 %v1745, 1.0
    %v1750 = vadd.f32 %v1747, 1.0
    %v1751 = vrcp.pop %v1748
    %v1752 = vmul.f32 %v1748, %v1751
    %v1753 = vsub.f32 1.0, %v1752
    %v1754 = vmul.f32 %v1751, %v1753
    %v1755 = vadd.f32 %v1751, %v1754
    %vm1756 = vweird.f32 %v1748
    %vm1757 = vweird.f32 %v1751
    %vm1758 = vmor %vm1756, %vm1757
    %v1759 = vsel %vm1758, %v1751, %v1755
    %v1760 = vand.u32 2147483647, %v1748
    %vm1761 = vcmp.eq.f32.partialorder %v1760, 8.507059e+37
    %v1762 = vand.u32 %v1748, 2147483648
    %v1763 = vor.u32 1.1754944e-38, %v1762
    %v1764 = vsel %vm1761, %v1763, %v1759
    %v1765 = vmul.f32 1.0, %v1764
    %v1766 = vrcp.pop %v1749
    %v1767 = vmul.f32 %v1749, %v1766
    %v1768 = vsub.f32 1.0, %v1767
    %v1769 = vmul.f32 %v1766, %v1768
    %v1770 = vadd.f32 %v1766, %v1769
    %vm1771 = vweird.f32 %v1749
    %vm1772 = vweird.f32 %v1766
    %vm1773 = vmor %vm1771, %vm1772
    %v1774 = vsel %vm1773, %v1766, %v1770
    %v1775 = vand.u32 2147483647, %v1749
    %vm1776 = vcmp.eq.f32.partialorder %v1775, 8.507059e+37
    %v1777 = vand.u32 %v1749, 2147483648
    %v1778 = vor.u32 1.1754944e-38, %v1777
    %v1779 = vsel %vm1776, %v1778, %v1774
    %v1780 = vmul.f32 1.0, %v1779
    %v1781 = vrcp.pop %v1750
    %v1782 = vmul.f32 %v1750, %v1781
    %v1783 = vsub.f32 1.0, %v1782
    %v1784 = vmul.f32 %v1781, %v1783
    %v1785 = vadd.f32 %v1781, %v1784
    %vm1786 = vweird.f32 %v1750
    %vm1787 = vweird.f32 %v1781
    %vm1788 = vmor %vm1786, %vm1787
    %v1789 = vsel %vm1788, %v1781, %v1785
    %v1790 = vand.u32 2147483647, %v1750
    %vm1791 = vcmp.eq.f32.partialorder %v1790, 8.507059e+37
    %v1792 = vand.u32 %v1750, 2147483648
    %v1793 = vor.u32 1.1754944e-38, %v1792
    %v1794 = vsel %vm1791, %v1793, %v1789
    %v1795 = vmul.f32 1.0, %v1794
    %v1796 = vtanh.pop %v1738
    %v1797 = vmul.f32 %v1780, %v1500
    %v1798 = vmul.f32 %v1765, %v1796
    %v1799 = vadd.f32 %v1797, %v1798
    %v1800 = vtanh.pop %v1799
    %v1801 = vmul.f32 %v1795, %v1800
    %s1802 = smul.u32 3, 4
    %s1803 = smul.addr %s1802, 8
    %s1804 = scalar_lea.vmem [#allocation2], %s1803
    %v1805 = vld [vmem:[%s1804] sm:$0xff]
    %v1806 = vld [vmem:[%s1804 + $0x8] sm:$0xff]
    %v1807 = vld [vmem:[%s1804 + $0x10] sm:$0xff]
    %v1808 = vld [vmem:[%s1804 + $0x18] sm:$0xff]
    %1809 = vmatpush.bf16.msra.mxu0 %v493
    %1810 = vmatpush.bf16.msra.mxu0 %v489
    %1811 = vmatpush.bf16.msra.mxu0 %v485
    %1812 = vmatpush.bf16.msra.mxu0 %v481
    %1813 = vmatpush.bf16.msra.mxu0 %v477
    %1814 = vmatpush.bf16.msra.mxu0 %v473
    %1815 = vmatpush.bf16.msra.mxu0 %v469
    %1816 = vmatpush.bf16.msra.mxu0 %v465
    %1817 = vmatmul.bf16.gmra.mxu0 %v1629
    %v1818 = vpop.f32.mrf.mxu0
    %v1819 = vadd.f32 0.0, %v1818
    %v1820 = vpop.f32.mrf.mxu0
    %1821 = vdwg.mxu0
    %1822 = vmatpush.bf16.msra.mxu0 %v494
    %1823 = vmatpush.bf16.msra.mxu0 %v490
    %1824 = vmatpush.bf16.msra.mxu0 %v486
    %1825 = vmatpush.bf16.msra.mxu0 %v482
    %1826 = vmatpush.bf16.msra.mxu0 %v478
    %1827 = vmatpush.bf16.msra.mxu0 %v474
    %1828 = vmatpush.bf16.msra.mxu0 %v470
    %1829 = vmatpush.bf16.msra.mxu0 %v466
    %1830 = vmatmul.bf16.gmra.mxu0 %v1629
    %v1831 = vpop.f32.mrf.mxu0
    %v1832 = vadd.f32 0.0, %v1831
    %v1833 = vpop.f32.mrf.mxu0
    %1834 = vdwg.mxu0
    %1835 = vmatpush.bf16.msra.mxu0 %v495
    %1836 = vmatpush.bf16.msra.mxu0 %v491
    %1837 = vmatpush.bf16.msra.mxu0 %v487
    %1838 = vmatpush.bf16.msra.mxu0 %v483
    %1839 = vmatpush.bf16.msra.mxu0 %v479
    %1840 = vmatpush.bf16.msra.mxu0 %v475
    %1841 = vmatpush.bf16.msra.mxu0 %v471
    %1842 = vmatpush.bf16.msra.mxu0 %v467
    %1843 = vmatmul.bf16.gmra.mxu0 %v1629
    %v1844 = vpop.f32.mrf.mxu0
    %v1845 = vadd.f32 0.0, %v1844
    %v1846 = vpop.f32.mrf.mxu0
    %1847 = vdwg.mxu0
    %1848 = vmatpush.bf16.msra.mxu0 %v496
    %1849 = vmatpush.bf16.msra.mxu0 %v492
    %1850 = vmatpush.bf16.msra.mxu0 %v488
    %1851 = vmatpush.bf16.msra.mxu0 %v484
    %1852 = vmatpush.bf16.msra.mxu0 %v480
    %1853 = vmatpush.bf16.msra.mxu0 %v476
    %1854 = vmatpush.bf16.msra.mxu0 %v472
    %1855 = vmatpush.bf16.msra.mxu0 %v468
    %1856 = vmatmul.bf16.gmra.mxu0 %v1629
    %v1857 = vpop.f32.mrf.mxu0
    %v1858 = vadd.f32 0.0, %v1857
    %v1859 = vpop.f32.mrf.mxu0
    %1860 = vdwg.mxu0
    %v1861 = vadd.f32 %v1805, %v1819
    %v1862 = vadd.f32 %v1806, %v1832
    %v1863 = vadd.f32 %v1807, %v1845
    %v1864 = vadd.f32 %v1808, %v1858
    %v1865 = vxor.u32 %v1861, 2147483648
    %v1866 = vxor.u32 %v1862, 2147483648
    %v1867 = vxor.u32 %v1863, 2147483648
    %v1868 = vmul.f32 %v1865, 1.442695
    %v1869 = vpow.pop %v1868
    %v1870 = vmul.f32 %v1866, 1.442695
    %v1871 = vpow.pop %v1870
    %v1872 = vmul.f32 %v1867, 1.442695
    %v1873 = vpow.pop %v1872
    %v1874 = vadd.f32 %v1869, 1.0
    %v1875 = vadd.f32 %v1871, 1.0
    %v1876 = vadd.f32 %v1873, 1.0
    %v1877 = vrcp.pop %v1874
    %v1878 = vmul.f32 %v1874, %v1877
    %v1879 = vsub.f32 1.0, %v1878
    %v1880 = vmul.f32 %v1877, %v1879
    %v1881 = vadd.f32 %v1877, %v1880
    %vm1882 = vweird.f32 %v1874
    %vm1883 = vweird.f32 %v1877
    %vm1884 = vmor %vm1882, %vm1883
    %v1885 = vsel %vm1884, %v1877, %v1881
    %v1886 = vand.u32 2147483647, %v1874
    %vm1887 = vcmp.eq.f32.partialorder %v1886, 8.507059e+37
    %v1888 = vand.u32 %v1874, 2147483648
    %v1889 = vor.u32 1.1754944e-38, %v1888
    %v1890 = vsel %vm1887, %v1889, %v1885
    %v1891 = vmul.f32 1.0, %v1890
    %v1892 = vrcp.pop %v1875
    %v1893 = vmul.f32 %v1875, %v1892
    %v1894 = vsub.f32 1.0, %v1893
    %v1895 = vmul.f32 %v1892, %v1894
    %v1896 = vadd.f32 %v1892, %v1895
    %vm1897 = vweird.f32 %v1875
    %vm1898 = vweird.f32 %v1892
    %vm1899 = vmor %vm1897, %vm1898
    %v1900 = vsel %vm1899, %v1892, %v1896
    %v1901 = vand.u32 2147483647, %v1875
    %vm1902 = vcmp.eq.f32.partialorder %v1901, 8.507059e+37
    %v1903 = vand.u32 %v1875, 2147483648
    %v1904 = vor.u32 1.1754944e-38, %v1903
    %v1905 = vsel %vm1902, %v1904, %v1900
    %v1906 = vmul.f32 1.0, %v1905
    %v1907 = vrcp.pop %v1876
    %v1908 = vmul.f32 %v1876, %v1907
    %v1909 = vsub.f32 1.0, %v1908
    %v1910 = vmul.f32 %v1907, %v1909
    %v1911 = vadd.f32 %v1907, %v1910
    %vm1912 = vweird.f32 %v1876
    %vm1913 = vweird.f32 %v1907
    %vm1914 = vmor %vm1912, %vm1913
    %v1915 = vsel %vm1914, %v1907, %v1911
    %v1916 = vand.u32 2147483647, %v1876
    %vm1917 = vcmp.eq.f32.partialorder %v1916, 8.507059e+37
    %v1918 = vand.u32 %v1876, 2147483648
    %v1919 = vor.u32 1.1754944e-38, %v1918
    %v1920 = vsel %vm1917, %v1919, %v1915
    %v1921 = vmul.f32 1.0, %v1920
    %v1922 = vtanh.pop %v1864
    %v1923 = vmul.f32 %v1906, %v1626
    %v1924 = vmul.f32 %v1891, %v1922
    %v1925 = vadd.f32 %v1923, %v1924
    %v1926 = vtanh.pop %v1925
    %v1927 = vmul.f32 %v1921, %v1926
    %v1928 = vpack.c.bf16 %v1927, %v1927
    %v1929 = vpack.c.bf16 %v1801, %v1801
    %1930 = vmatpush.bf16.msra.mxu0 %v837
    %1931 = vmatpush.bf16.msra.mxu0 %v833
    %1932 = vmatpush.bf16.msra.mxu0 %v829
    %1933 = vmatpush.bf16.msra.mxu0 %v825
    %1934 = vmatpush.bf16.msra.mxu0 %v821
    %1935 = vmatpush.bf16.msra.mxu0 %v817
    %1936 = vmatpush.bf16.msra.mxu0 %v813
    %1937 = vmatpush.bf16.msra.mxu0 %v809
    %1938 = vmatmul.bf16.gmra.mxu0 %v1929
    %v1939 = vpop.f32.mrf.mxu0
    %v1940 = vadd.f32 0.0, %v1939
    %v1941 = vpop.f32.mrf.mxu0
    %1942 = vdwg.mxu0
    %1943 = vmatpush.bf16.msra.mxu0 %v838
    %1944 = vmatpush.bf16.msra.mxu0 %v834
    %1945 = vmatpush.bf16.msra.mxu0 %v830
    %1946 = vmatpush.bf16.msra.mxu0 %v826
    %1947 = vmatpush.bf16.msra.mxu0 %v822
    %1948 = vmatpush.bf16.msra.mxu0 %v818
    %1949 = vmatpush.bf16.msra.mxu0 %v814
    %1950 = vmatpush.bf16.msra.mxu0 %v810
    %1951 = vmatmul.bf16.gmra.mxu0 %v1929
    %v1952 = vpop.f32.mrf.mxu0
    %v1953 = vadd.f32 0.0, %v1952
    %v1954 = vpop.f32.mrf.mxu0
    %1955 = vdwg.mxu0
    %1956 = vmatpush.bf16.msra.mxu0 %v839
    %1957 = vmatpush.bf16.msra.mxu0 %v835
    %1958 = vmatpush.bf16.msra.mxu0 %v831
    %1959 = vmatpush.bf16.msra.mxu0 %v827
    %1960 = vmatpush.bf16.msra.mxu0 %v823
    %1961 = vmatpush.bf16.msra.mxu0 %v819
    %1962 = vmatpush.bf16.msra.mxu0 %v815
    %1963 = vmatpush.bf16.msra.mxu0 %v811
    %1964 = vmatmul.bf16.gmra.mxu0 %v1929
    %v1965 = vpop.f32.mrf.mxu0
    %v1966 = vadd.f32 0.0, %v1965
    %v1967 = vpop.f32.mrf.mxu0
    %1968 = vdwg.mxu0
    %1969 = vmatpush.bf16.msra.mxu0 %v840
    %1970 = vmatpush.bf16.msra.mxu0 %v836
    %1971 = vmatpush.bf16.msra.mxu0 %v832
    %1972 = vmatpush.bf16.msra.mxu0 %v828
    %1973 = vmatpush.bf16.msra.mxu0 %v824
    %1974 = vmatpush.bf16.msra.mxu0 %v820
    %1975 = vmatpush.bf16.msra.mxu0 %v816
    %1976 = vmatpush.bf16.msra.mxu0 %v812
    %1977 = vmatmul.bf16.gmra.mxu0 %v1929
    %v1978 = vpop.f32.mrf.mxu0
    %v1979 = vadd.f32 0.0, %v1978
    %v1980 = vpop.f32.mrf.mxu0
    %1981 = vdwg.mxu0
    %1982 = vmatpush.bf16.msra.mxu0 %v1049
    %1983 = vmatpush.bf16.msra.mxu0 %v1045
    %1984 = vmatpush.bf16.msra.mxu0 %v1041
    %1985 = vmatpush.bf16.msra.mxu0 %v1037
    %1986 = vmatpush.bf16.msra.mxu0 %v1033
    %1987 = vmatpush.bf16.msra.mxu0 %v1029
    %1988 = vmatpush.bf16.msra.mxu0 %v1025
    %1989 = vmatpush.bf16.msra.mxu0 %v1021
    %1990 = vmatmul.bf16.gmra.mxu0 %v1928
    %v1991 = vpop.f32.mrf.mxu0
    %v1992 = vadd.f32 %v1940, %v1991
    %v1993 = vpop.f32.mrf.mxu0
    %1994 = vdwg.mxu0
    %1995 = vmatpush.bf16.msra.mxu0 %v1050
    %1996 = vmatpush.bf16.msra.mxu0 %v1046
    %1997 = vmatpush.bf16.msra.mxu0 %v1042
    %1998 = vmatpush.bf16.msra.mxu0 %v1038
    %1999 = vmatpush.bf16.msra.mxu0 %v1034
    %2000 = vmatpush.bf16.msra.mxu0 %v1030
    %2001 = vmatpush.bf16.msra.mxu0 %v1026
    %2002 = vmatpush.bf16.msra.mxu0 %v1022
    %2003 = vmatmul.bf16.gmra.mxu0 %v1928
    %v2004 = vpop.f32.mrf.mxu0
    %v2005 = vadd.f32 %v1953, %v2004
    %v2006 = vpop.f32.mrf.mxu0
    %2007 = vdwg.mxu0
    %2008 = vmatpush.bf16.msra.mxu0 %v1051
    %2009 = vmatpush.bf16.msra.mxu0 %v1047
    %2010 = vmatpush.bf16.msra.mxu0 %v1043
    %2011 = vmatpush.bf16.msra.mxu0 %v1039
    %2012 = vmatpush.bf16.msra.mxu0 %v1035
    %2013 = vmatpush.bf16.msra.mxu0 %v1031
    %2014 = vmatpush.bf16.msra.mxu0 %v1027
    %2015 = vmatpush.bf16.msra.mxu0 %v1023
    %2016 = vmatmul.bf16.gmra.mxu0 %v1928
    %v2017 = vpop.f32.mrf.mxu0
    %v2018 = vadd.f32 %v1966, %v2017
    %v2019 = vpop.f32.mrf.mxu0
    %2020 = vdwg.mxu0
    %2021 = vmatpush.bf16.msra.mxu0 %v1052
    %2022 = vmatpush.bf16.msra.mxu0 %v1048
    %2023 = vmatpush.bf16.msra.mxu0 %v1044
    %2024 = vmatpush.bf16.msra.mxu0 %v1040
    %2025 = vmatpush.bf16.msra.mxu0 %v1036
    %2026 = vmatpush.bf16.msra.mxu0 %v1032
    %2027 = vmatpush.bf16.msra.mxu0 %v1028
    %2028 = vmatpush.bf16.msra.mxu0 %v1024
    %2029 = vmatmul.bf16.gmra.mxu0 %v1928
    %v2030 = vpop.f32.mrf.mxu0
    %v2031 = vadd.f32 %v1979, %v2030
    %v2032 = vpop.f32.mrf.mxu0
    %2033 = vdwg.mxu0
    %v2034 = vadd.f32 %v1992, %v99
    %v2035 = vadd.f32 %v2005, %v100
    %v2036 = vadd.f32 %v2018, %v101
    %v2037 = vadd.f32 %v2031, %v102
    %v2038 = vxor.u32 %v2034, 2147483648
    %v2039 = vxor.u32 %v2035, 2147483648
    %v2040 = vxor.u32 %v2036, 2147483648
    %v2041 = vmul.f32 %v2038, 1.442695
    %v2042 = vpow.pop %v2041
    %v2043 = vmul.f32 %v2039, 1.442695
    %v2044 = vpow.pop %v2043
    %v2045 = vmul.f32 %v2040, 1.442695
    %v2046 = vpow.pop %v2045
    %v2047 = vadd.f32 %v2042, 1.0
    %v2048 = vadd.f32 %v2044, 1.0
    %v2049 = vadd.f32 %v2046, 1.0
    %v2050 = vrcp.pop %v2047
    %v2051 = vmul.f32 %v2047, %v2050
    %v2052 = vsub.f32 1.0, %v2051
    %v2053 = vmul.f32 %v2050, %v2052
    %v2054 = vadd.f32 %v2050, %v2053
    %vm2055 = vweird.f32 %v2047
    %vm2056 = vweird.f32 %v2050
    %vm2057 = vmor %vm2055, %vm2056
    %v2058 = vsel %vm2057, %v2050, %v2054
    %v2059 = vand.u32 2147483647, %v2047
    %vm2060 = vcmp.eq.f32.partialorder %v2059, 8.507059e+37
    %v2061 = vand.u32 %v2047, 2147483648
    %v2062 = vor.u32 1.1754944e-38, %v2061
    %v2063 = vsel %vm2060, %v2062, %v2058
    %v2064 = vmul.f32 1.0, %v2063
    %v2065 = vrcp.pop %v2048
    %v2066 = vmul.f32 %v2048, %v2065
    %v2067 = vsub.f32 1.0, %v2066
    %v2068 = vmul.f32 %v2065, %v2067
    %v2069 = vadd.f32 %v2065, %v2068
    %vm2070 = vweird.f32 %v2048
    %vm2071 = vweird.f32 %v2065
    %vm2072 = vmor %vm2070, %vm2071
    %v2073 = vsel %vm2072, %v2065, %v2069
    %v2074 = vand.u32 2147483647, %v2048
    %vm2075 = vcmp.eq.f32.partialorder %v2074, 8.507059e+37
    %v2076 = vand.u32 %v2048, 2147483648
    %v2077 = vor.u32 1.1754944e-38, %v2076
    %v2078 = vsel %vm2075, %v2077, %v2073
    %v2079 = vmul.f32 1.0, %v2078
    %v2080 = vrcp.pop %v2049
    %v2081 = vmul.f32 %v2049, %v2080
    %v2082 = vsub.f32 1.0, %v2081
    %v2083 = vmul.f32 %v2080, %v2082
    %v2084 = vadd.f32 %v2080, %v2083
    %vm2085 = vweird.f32 %v2049
    %vm2086 = vweird.f32 %v2080
    %vm2087 = vmor %vm2085, %vm2086
    %v2088 = vsel %vm2087, %v2080, %v2084
    %v2089 = vand.u32 2147483647, %v2049
    %vm2090 = vcmp.eq.f32.partialorder %v2089, 8.507059e+37
    %v2091 = vand.u32 %v2049, 2147483648
    %v2092 = vor.u32 1.1754944e-38, %v2091
    %v2093 = vsel %vm2090, %v2092, %v2088
    %v2094 = vmul.f32 1.0, %v2093
    %v2095 = vtanh.pop %v2037
    %v2096 = vmul.f32 %v2079, %v1799
    %v2097 = vmul.f32 %v2064, %v2095
    %v2098 = vadd.f32 %v2096, %v2097
    %v2099 = vtanh.pop %v2098
    %v2100 = vmul.f32 %v2094, %v2099
    %s2101 = smul.u32 4, 4
    %s2102 = smul.addr %s2101, 8
    %s2103 = scalar_lea.vmem [#allocation2], %s2102
    %v2104 = vld [vmem:[%s2103] sm:$0xff]
    %v2105 = vld [vmem:[%s2103 + $0x8] sm:$0xff]
    %v2106 = vld [vmem:[%s2103 + $0x10] sm:$0xff]
    %v2107 = vld [vmem:[%s2103 + $0x18] sm:$0xff]
    %2108 = vmatpush.bf16.msra.mxu0 %v493
    %2109 = vmatpush.bf16.msra.mxu0 %v489
    %2110 = vmatpush.bf16.msra.mxu0 %v485
    %2111 = vmatpush.bf16.msra.mxu0 %v481
    %2112 = vmatpush.bf16.msra.mxu0 %v477
    %2113 = vmatpush.bf16.msra.mxu0 %v473
    %2114 = vmatpush.bf16.msra.mxu0 %v469
    %2115 = vmatpush.bf16.msra.mxu0 %v465
    %2116 = vmatmul.bf16.gmra.mxu0 %v1928
    %v2117 = vpop.f32.mrf.mxu0
    %v2118 = vadd.f32 0.0, %v2117
    %v2119 = vpop.f32.mrf.mxu0
    %2120 = vdwg.mxu0
    %2121 = vmatpush.bf16.msra.mxu0 %v494
    %2122 = vmatpush.bf16.msra.mxu0 %v490
    %2123 = vmatpush.bf16.msra.mxu0 %v486
    %2124 = vmatpush.bf16.msra.mxu0 %v482
    %2125 = vmatpush.bf16.msra.mxu0 %v478
    %2126 = vmatpush.bf16.msra.mxu0 %v474
    %2127 = vmatpush.bf16.msra.mxu0 %v470
    %2128 = vmatpush.bf16.msra.mxu0 %v466
    %2129 = vmatmul.bf16.gmra.mxu0 %v1928
    %v2130 = vpop.f32.mrf.mxu0
    %v2131 = vadd.f32 0.0, %v2130
    %v2132 = vpop.f32.mrf.mxu0
    %2133 = vdwg.mxu0
    %2134 = vmatpush.bf16.msra.mxu0 %v495
    %2135 = vmatpush.bf16.msra.mxu0 %v491
    %2136 = vmatpush.bf16.msra.mxu0 %v487
    %2137 = vmatpush.bf16.msra.mxu0 %v483
    %2138 = vmatpush.bf16.msra.mxu0 %v479
    %2139 = vmatpush.bf16.msra.mxu0 %v475
    %2140 = vmatpush.bf16.msra.mxu0 %v471
    %2141 = vmatpush.bf16.msra.mxu0 %v467
    %2142 = vmatmul.bf16.gmra.mxu0 %v1928
    %v2143 = vpop.f32.mrf.mxu0
    %v2144 = vadd.f32 0.0, %v2143
    %v2145 = vpop.f32.mrf.mxu0
    %2146 = vdwg.mxu0
    %2147 = vmatpush.bf16.msra.mxu0 %v496
    %2148 = vmatpush.bf16.msra.mxu0 %v492
    %2149 = vmatpush.bf16.msra.mxu0 %v488
    %2150 = vmatpush.bf16.msra.mxu0 %v484
    %2151 = vmatpush.bf16.msra.mxu0 %v480
    %2152 = vmatpush.bf16.msra.mxu0 %v476
    %2153 = vmatpush.bf16.msra.mxu0 %v472
    %2154 = vmatpush.bf16.msra.mxu0 %v468
    %2155 = vmatmul.bf16.gmra.mxu0 %v1928
    %v2156 = vpop.f32.mrf.mxu0
    %v2157 = vadd.f32 0.0, %v2156
    %v2158 = vpop.f32.mrf.mxu0
    %2159 = vdwg.mxu0
    %v2160 = vadd.f32 %v2104, %v2118
    %v2161 = vadd.f32 %v2105, %v2131
    %v2162 = vadd.f32 %v2106, %v2144
    %v2163 = vadd.f32 %v2107, %v2157
    %v2164 = vxor.u32 %v2160, 2147483648
    %v2165 = vxor.u32 %v2161, 2147483648
    %v2166 = vxor.u32 %v2162, 2147483648
    %v2167 = vmul.f32 %v2164, 1.442695
    %v2168 = vpow.pop %v2167
    %v2169 = vmul.f32 %v2165, 1.442695
    %v2170 = vpow.pop %v2169
    %v2171 = vmul.f32 %v2166, 1.442695
    %v2172 = vpow.pop %v2171
    %v2173 = vadd.f32 %v2168, 1.0
    %v2174 = vadd.f32 %v2170, 1.0
    %v2175 = vadd.f32 %v2172, 1.0
    %v2176 = vrcp.pop %v2173
    %v2177 = vmul.f32 %v2173, %v2176
    %v2178 = vsub.f32 1.0, %v2177
    %v2179 = vmul.f32 %v2176, %v2178
    %v2180 = vadd.f32 %v2176, %v2179
    %vm2181 = vweird.f32 %v2173
    %vm2182 = vweird.f32 %v2176
    %vm2183 = vmor %vm2181, %vm2182
    %v2184 = vsel %vm2183, %v2176, %v2180
    %v2185 = vand.u32 2147483647, %v2173
    %vm2186 = vcmp.eq.f32.partialorder %v2185, 8.507059e+37
    %v2187 = vand.u32 %v2173, 2147483648
    %v2188 = vor.u32 1.1754944e-38, %v2187
    %v2189 = vsel %vm2186, %v2188, %v2184
    %v2190 = vmul.f32 1.0, %v2189
    %v2191 = vrcp.pop %v2174
    %v2192 = vmul.f32 %v2174, %v2191
    %v2193 = vsub.f32 1.0, %v2192
    %v2194 = vmul.f32 %v2191, %v2193
    %v2195 = vadd.f32 %v2191, %v2194
    %vm2196 = vweird.f32 %v2174
    %vm2197 = vweird.f32 %v2191
    %vm2198 = vmor %vm2196, %vm2197
    %v2199 = vsel %vm2198, %v2191, %v2195
    %v2200 = vand.u32 2147483647, %v2174
    %vm2201 = vcmp.eq.f32.partialorder %v2200, 8.507059e+37
    %v2202 = vand.u32 %v2174, 2147483648
    %v2203 = vor.u32 1.1754944e-38, %v2202
    %v2204 = vsel %vm2201, %v2203, %v2199
    %v2205 = vmul.f32 1.0, %v2204
    %v2206 = vrcp.pop %v2175
    %v2207 = vmul.f32 %v2175, %v2206
    %v2208 = vsub.f32 1.0, %v2207
    %v2209 = vmul.f32 %v2206, %v2208
    %v2210 = vadd.f32 %v2206, %v2209
    %vm2211 = vweird.f32 %v2175
    %vm2212 = vweird.f32 %v2206
    %vm2213 = vmor %vm2211, %vm2212
    %v2214 = vsel %vm2213, %v2206, %v2210
    %v2215 = vand.u32 2147483647, %v2175
    %vm2216 = vcmp.eq.f32.partialorder %v2215, 8.507059e+37
    %v2217 = vand.u32 %v2175, 2147483648
    %v2218 = vor.u32 1.1754944e-38, %v2217
    %v2219 = vsel %vm2216, %v2218, %v2214
    %v2220 = vmul.f32 1.0, %v2219
    %v2221 = vtanh.pop %v2163
    %v2222 = vmul.f32 %v2205, %v1925
    %v2223 = vmul.f32 %v2190, %v2221
    %v2224 = vadd.f32 %v2222, %v2223
    %v2225 = vtanh.pop %v2224
    %v2226 = vmul.f32 %v2220, %v2225
    %v2227 = vpack.c.bf16 %v2226, %v2226
    %v2228 = vpack.c.bf16 %v2100, %v2100
    %2229 = vmatpush.bf16.msra.mxu0 %v837
    %2230 = vmatpush.bf16.msra.mxu0 %v833
    %2231 = vmatpush.bf16.msra.mxu0 %v829
    %2232 = vmatpush.bf16.msra.mxu0 %v825
    %2233 = vmatpush.bf16.msra.mxu0 %v821
    %2234 = vmatpush.bf16.msra.mxu0 %v817
    %2235 = vmatpush.bf16.msra.mxu0 %v813
    %2236 = vmatpush.bf16.msra.mxu0 %v809
    %2237 = vmatmul.bf16.gmra.mxu0 %v2228
    %v2238 = vpop.f32.mrf.mxu0
    %v2239 = vadd.f32 0.0, %v2238
    %v2240 = vpop.f32.mrf.mxu0
    %2241 = vdwg.mxu0
    %2242 = vmatpush.bf16.msra.mxu0 %v838
    %2243 = vmatpush.bf16.msra.mxu0 %v834
    %2244 = vmatpush.bf16.msra.mxu0 %v830
    %2245 = vmatpush.bf16.msra.mxu0 %v826
    %2246 = vmatpush.bf16.msra.mxu0 %v822
    %2247 = vmatpush.bf16.msra.mxu0 %v818
    %2248 = vmatpush.bf16.msra.mxu0 %v814
    %2249 = vmatpush.bf16.msra.mxu0 %v810
    %2250 = vmatmul.bf16.gmra.mxu0 %v2228
    %v2251 = vpop.f32.mrf.mxu0
    %v2252 = vadd.f32 0.0, %v2251
    %v2253 = vpop.f32.mrf.mxu0
    %2254 = vdwg.mxu0
    %2255 = vmatpush.bf16.msra.mxu0 %v839
    %2256 = vmatpush.bf16.msra.mxu0 %v835
    %2257 = vmatpush.bf16.msra.mxu0 %v831
    %2258 = vmatpush.bf16.msra.mxu0 %v827
    %2259 = vmatpush.bf16.msra.mxu0 %v823
    %2260 = vmatpush.bf16.msra.mxu0 %v819
    %2261 = vmatpush.bf16.msra.mxu0 %v815
    %2262 = vmatpush.bf16.msra.mxu0 %v811
    %2263 = vmatmul.bf16.gmra.mxu0 %v2228
    %v2264 = vpop.f32.mrf.mxu0
    %v2265 = vadd.f32 0.0, %v2264
    %v2266 = vpop.f32.mrf.mxu0
    %2267 = vdwg.mxu0
    %2268 = vmatpush.bf16.msra.mxu0 %v840
    %2269 = vmatpush.bf16.msra.mxu0 %v836
    %2270 = vmatpush.bf16.msra.mxu0 %v832
    %2271 = vmatpush.bf16.msra.mxu0 %v828
    %2272 = vmatpush.bf16.msra.mxu0 %v824
    %2273 = vmatpush.bf16.msra.mxu0 %v820
    %2274 = vmatpush.bf16.msra.mxu0 %v816
    %2275 = vmatpush.bf16.msra.mxu0 %v812
    %2276 = vmatmul.bf16.gmra.mxu0 %v2228
    %v2277 = vpop.f32.mrf.mxu0
    %v2278 = vadd.f32 0.0, %v2277
    %v2279 = vpop.f32.mrf.mxu0
    %2280 = vdwg.mxu0
    %2281 = vmatpush.bf16.msra.mxu0 %v1049
    %2282 = vmatpush.bf16.msra.mxu0 %v1045
    %2283 = vmatpush.bf16.msra.mxu0 %v1041
    %2284 = vmatpush.bf16.msra.mxu0 %v1037
    %2285 = vmatpush.bf16.msra.mxu0 %v1033
    %2286 = vmatpush.bf16.msra.mxu0 %v1029
    %2287 = vmatpush.bf16.msra.mxu0 %v1025
    %2288 = vmatpush.bf16.msra.mxu0 %v1021
    %2289 = vmatmul.bf16.gmra.mxu0 %v2227
    %v2290 = vpop.f32.mrf.mxu0
    %v2291 = vadd.f32 %v2239, %v2290
    %v2292 = vpop.f32.mrf.mxu0
    %2293 = vdwg.mxu0
    %2294 = vmatpush.bf16.msra.mxu0 %v1050
    %2295 = vmatpush.bf16.msra.mxu0 %v1046
    %2296 = vmatpush.bf16.msra.mxu0 %v1042
    %2297 = vmatpush.bf16.msra.mxu0 %v1038
    %2298 = vmatpush.bf16.msra.mxu0 %v1034
    %2299 = vmatpush.bf16.msra.mxu0 %v1030
    %2300 = vmatpush.bf16.msra.mxu0 %v1026
    %2301 = vmatpush.bf16.msra.mxu0 %v1022
    %2302 = vmatmul.bf16.gmra.mxu0 %v2227
    %v2303 = vpop.f32.mrf.mxu0
    %v2304 = vadd.f32 %v2252, %v2303
    %v2305 = vpop.f32.mrf.mxu0
    %2306 = vdwg.mxu0
    %2307 = vmatpush.bf16.msra.mxu0 %v1051
    %2308 = vmatpush.bf16.msra.mxu0 %v1047
    %2309 = vmatpush.bf16.msra.mxu0 %v1043
    %2310 = vmatpush.bf16.msra.mxu0 %v1039
    %2311 = vmatpush.bf16.msra.mxu0 %v1035
    %2312 = vmatpush.bf16.msra.mxu0 %v1031
    %2313 = vmatpush.bf16.msra.mxu0 %v1027
    %2314 = vmatpush.bf16.msra.mxu0 %v1023
    %2315 = vmatmul.bf16.gmra.mxu0 %v2227
    %v2316 = vpop.f32.mrf.mxu0
    %v2317 = vadd.f32 %v2265, %v2316
    %v2318 = vpop.f32.mrf.mxu0
    %2319 = vdwg.mxu0
    %2320 = vmatpush.bf16.msra.mxu0 %v1052
    %2321 = vmatpush.bf16.msra.mxu0 %v1048
    %2322 = vmatpush.bf16.msra.mxu0 %v1044
    %2323 = vmatpush.bf16.msra.mxu0 %v1040
    %2324 = vmatpush.bf16.msra.mxu0 %v1036
    %2325 = vmatpush.bf16.msra.mxu0 %v1032
    %2326 = vmatpush.bf16.msra.mxu0 %v1028
    %2327 = vmatpush.bf16.msra.mxu0 %v1024
    %2328 = vmatmul.bf16.gmra.mxu0 %v2227
    %v2329 = vpop.f32.mrf.mxu0
    %v2330 = vadd.f32 %v2278, %v2329
    %v2331 = vpop.f32.mrf.mxu0
    %2332 = vdwg.mxu0
    %v2333 = vadd.f32 %v2291, %v99
    %v2334 = vadd.f32 %v2304, %v100
    %v2335 = vadd.f32 %v2317, %v101
    %v2336 = vadd.f32 %v2330, %v102
    %v2337 = vxor.u32 %v2333, 2147483648
    %v2338 = vxor.u32 %v2334, 2147483648
    %v2339 = vxor.u32 %v2335, 2147483648
    %v2340 = vmul.f32 %v2337, 1.442695
    %v2341 = vpow.pop %v2340
    %v2342 = vmul.f32 %v2338, 1.442695
    %v2343 = vpow.pop %v2342
    %v2344 = vmul.f32 %v2339, 1.442695
    %v2345 = vpow.pop %v2344
    %v2346 = vadd.f32 %v2341, 1.0
    %v2347 = vadd.f32 %v2343, 1.0
    %v2348 = vadd.f32 %v2345, 1.0
    %v2349 = vrcp.pop %v2346
    %v2350 = vmul.f32 %v2346, %v2349
    %v2351 = vsub.f32 1.0, %v2350
    %v2352 = vmul.f32 %v2349, %v2351
    %v2353 = vadd.f32 %v2349, %v2352
    %vm2354 = vweird.f32 %v2346
    %vm2355 = vweird.f32 %v2349
    %vm2356 = vmor %vm2354, %vm2355
    %v2357 = vsel %vm2356, %v2349, %v2353
    %v2358 = vand.u32 2147483647, %v2346
    %vm2359 = vcmp.eq.f32.partialorder %v2358, 8.507059e+37
    %v2360 = vand.u32 %v2346, 2147483648
    %v2361 = vor.u32 1.1754944e-38, %v2360
    %v2362 = vsel %vm2359, %v2361, %v2357
    %v2363 = vmul.f32 1.0, %v2362
    %v2364 = vrcp.pop %v2347
    %v2365 = vmul.f32 %v2347, %v2364
    %v2366 = vsub.f32 1.0, %v2365
    %v2367 = vmul.f32 %v2364, %v2366
    %v2368 = vadd.f32 %v2364, %v2367
    %vm2369 = vweird.f32 %v2347
    %vm2370 = vweird.f32 %v2364
    %vm2371 = vmor %vm2369, %vm2370
    %v2372 = vsel %vm2371, %v2364, %v2368
    %v2373 = vand.u32 2147483647, %v2347
    %vm2374 = vcmp.eq.f32.partialorder %v2373, 8.507059e+37
    %v2375 = vand.u32 %v2347, 2147483648
    %v2376 = vor.u32 1.1754944e-38, %v2375
    %v2377 = vsel %vm2374, %v2376, %v2372
    %v2378 = vmul.f32 1.0, %v2377
    %v2379 = vrcp.pop %v2348
    %v2380 = vmul.f32 %v2348, %v2379
    %v2381 = vsub.f32 1.0, %v2380
    %v2382 = vmul.f32 %v2379, %v2381
    %v2383 = vadd.f32 %v2379, %v2382
    %vm2384 = vweird.f32 %v2348
    %vm2385 = vweird.f32 %v2379
    %vm2386 = vmor %vm2384, %vm2385
    %v2387 = vsel %vm2386, %v2379, %v2383
    %v2388 = vand.u32 2147483647, %v2348
    %vm2389 = vcmp.eq.f32.partialorder %v2388, 8.507059e+37
    %v2390 = vand.u32 %v2348, 2147483648
    %v2391 = vor.u32 1.1754944e-38, %v2390
    %v2392 = vsel %vm2389, %v2391, %v2387
    %v2393 = vmul.f32 1.0, %v2392
    %v2394 = vtanh.pop %v2336
    %v2395 = vmul.f32 %v2378, %v2098
    %v2396 = vmul.f32 %v2363, %v2394
    %v2397 = vadd.f32 %v2395, %v2396
    %v2398 = vtanh.pop %v2397
    %v2399 = vmul.f32 %v2393, %v2398
    %s2400 = smul.u32 5, 4
    %s2401 = smul.addr %s2400, 8
    %s2402 = scalar_lea.vmem [#allocation2], %s2401
    %v2403 = vld [vmem:[%s2402] sm:$0xff]
    %v2404 = vld [vmem:[%s2402 + $0x8] sm:$0xff]
    %v2405 = vld [vmem:[%s2402 + $0x10] sm:$0xff]
    %v2406 = vld [vmem:[%s2402 + $0x18] sm:$0xff]
    %2407 = vmatpush.bf16.msra.mxu0 %v493
    %2408 = vmatpush.bf16.msra.mxu0 %v489
    %2409 = vmatpush.bf16.msra.mxu0 %v485
    %2410 = vmatpush.bf16.msra.mxu0 %v481
    %2411 = vmatpush.bf16.msra.mxu0 %v477
    %2412 = vmatpush.bf16.msra.mxu0 %v473
    %2413 = vmatpush.bf16.msra.mxu0 %v469
    %2414 = vmatpush.bf16.msra.mxu0 %v465
    %2415 = vmatmul.bf16.gmra.mxu0 %v2227
    %v2416 = vpop.f32.mrf.mxu0
    %v2417 = vadd.f32 0.0, %v2416
    %v2418 = vpop.f32.mrf.mxu0
    %2419 = vdwg.mxu0
    %2420 = vmatpush.bf16.msra.mxu0 %v494
    %2421 = vmatpush.bf16.msra.mxu0 %v490
    %2422 = vmatpush.bf16.msra.mxu0 %v486
    %2423 = vmatpush.bf16.msra.mxu0 %v482
    %2424 = vmatpush.bf16.msra.mxu0 %v478
    %2425 = vmatpush.bf16.msra.mxu0 %v474
    %2426 = vmatpush.bf16.msra.mxu0 %v470
    %2427 = vmatpush.bf16.msra.mxu0 %v466
    %2428 = vmatmul.bf16.gmra.mxu0 %v2227
    %v2429 = vpop.f32.mrf.mxu0
    %v2430 = vadd.f32 0.0, %v2429
    %v2431 = vpop.f32.mrf.mxu0
    %2432 = vdwg.mxu0
    %2433 = vmatpush.bf16.msra.mxu0 %v495
    %2434 = vmatpush.bf16.msra.mxu0 %v491
    %2435 = vmatpush.bf16.msra.mxu0 %v487
    %2436 = vmatpush.bf16.msra.mxu0 %v483
    %2437 = vmatpush.bf16.msra.mxu0 %v479
    %2438 = vmatpush.bf16.msra.mxu0 %v475
    %2439 = vmatpush.bf16.msra.mxu0 %v471
    %2440 = vmatpush.bf16.msra.mxu0 %v467
    %2441 = vmatmul.bf16.gmra.mxu0 %v2227
    %v2442 = vpop.f32.mrf.mxu0
    %v2443 = vadd.f32 0.0, %v2442
    %v2444 = vpop.f32.mrf.mxu0
    %2445 = vdwg.mxu0
    %2446 = vmatpush.bf16.msra.mxu0 %v496
    %2447 = vmatpush.bf16.msra.mxu0 %v492
    %2448 = vmatpush.bf16.msra.mxu0 %v488
    %2449 = vmatpush.bf16.msra.mxu0 %v484
    %2450 = vmatpush.bf16.msra.mxu0 %v480
    %2451 = vmatpush.bf16.msra.mxu0 %v476
    %2452 = vmatpush.bf16.msra.mxu0 %v472
    %2453 = vmatpush.bf16.msra.mxu0 %v468
    %2454 = vmatmul.bf16.gmra.mxu0 %v2227
    %v2455 = vpop.f32.mrf.mxu0
    %v2456 = vadd.f32 0.0, %v2455
    %v2457 = vpop.f32.mrf.mxu0
    %2458 = vdwg.mxu0
    %v2459 = vadd.f32 %v2403, %v2417
    %v2460 = vadd.f32 %v2404, %v2430
    %v2461 = vadd.f32 %v2405, %v2443
    %v2462 = vadd.f32 %v2406, %v2456
    %v2463 = vxor.u32 %v2459, 2147483648
    %v2464 = vxor.u32 %v2460, 2147483648
    %v2465 = vxor.u32 %v2461, 2147483648
    %v2466 = vmul.f32 %v2463, 1.442695
    %v2467 = vpow.pop %v2466
    %v2468 = vmul.f32 %v2464, 1.442695
    %v2469 = vpow.pop %v2468
    %v2470 = vmul.f32 %v2465, 1.442695
    %v2471 = vpow.pop %v2470
    %v2472 = vadd.f32 %v2467, 1.0
    %v2473 = vadd.f32 %v2469, 1.0
    %v2474 = vadd.f32 %v2471, 1.0
    %v2475 = vrcp.pop %v2472
    %v2476 = vmul.f32 %v2472, %v2475
    %v2477 = vsub.f32 1.0, %v2476
    %v2478 = vmul.f32 %v2475, %v2477
    %v2479 = vadd.f32 %v2475, %v2478
    %vm2480 = vweird.f32 %v2472
    %vm2481 = vweird.f32 %v2475
    %vm2482 = vmor %vm2480, %vm2481
    %v2483 = vsel %vm2482, %v2475, %v2479
    %v2484 = vand.u32 2147483647, %v2472
    %vm2485 = vcmp.eq.f32.partialorder %v2484, 8.507059e+37
    %v2486 = vand.u32 %v2472, 2147483648
    %v2487 = vor.u32 1.1754944e-38, %v2486
    %v2488 = vsel %vm2485, %v2487, %v2483
    %v2489 = vmul.f32 1.0, %v2488
    %v2490 = vrcp.pop %v2473
    %v2491 = vmul.f32 %v2473, %v2490
    %v2492 = vsub.f32 1.0, %v2491
    %v2493 = vmul.f32 %v2490, %v2492
    %v2494 = vadd.f32 %v2490, %v2493
    %vm2495 = vweird.f32 %v2473
    %vm2496 = vweird.f32 %v2490
    %vm2497 = vmor %vm2495, %vm2496
    %v2498 = vsel %vm2497, %v2490, %v2494
    %v2499 = vand.u32 2147483647, %v2473
    %vm2500 = vcmp.eq.f32.partialorder %v2499, 8.507059e+37
    %v2501 = vand.u32 %v2473, 2147483648
    %v2502 = vor.u32 1.1754944e-38, %v2501
    %v2503 = vsel %vm2500, %v2502, %v2498
    %v2504 = vmul.f32 1.0, %v2503
    %v2505 = vrcp.pop %v2474
    %v2506 = vmul.f32 %v2474, %v2505
    %v2507 = vsub.f32 1.0, %v2506
    %v2508 = vmul.f32 %v2505, %v2507
    %v2509 = vadd.f32 %v2505, %v2508
    %vm2510 = vweird.f32 %v2474
    %vm2511 = vweird.f32 %v2505
    %vm2512 = vmor %vm2510, %vm2511
    %v2513 = vsel %vm2512, %v2505, %v2509
    %v2514 = vand.u32 2147483647, %v2474
    %vm2515 = vcmp.eq.f32.partialorder %v2514, 8.507059e+37
    %v2516 = vand.u32 %v2474, 2147483648
    %v2517 = vor.u32 1.1754944e-38, %v2516
    %v2518 = vsel %vm2515, %v2517, %v2513
    %v2519 = vmul.f32 1.0, %v2518
    %v2520 = vtanh.pop %v2462
    %v2521 = vmul.f32 %v2504, %v2224
    %v2522 = vmul.f32 %v2489, %v2520
    %v2523 = vadd.f32 %v2521, %v2522
    %v2524 = vtanh.pop %v2523
    %v2525 = vmul.f32 %v2519, %v2524
    %v2526 = vpack.c.bf16 %v2525, %v2525
    %v2527 = vpack.c.bf16 %v2399, %v2399
    %2528 = vmatpush.bf16.msra.mxu0 %v837
    %2529 = vmatpush.bf16.msra.mxu0 %v833
    %2530 = vmatpush.bf16.msra.mxu0 %v829
    %2531 = vmatpush.bf16.msra.mxu0 %v825
    %2532 = vmatpush.bf16.msra.mxu0 %v821
    %2533 = vmatpush.bf16.msra.mxu0 %v817
    %2534 = vmatpush.bf16.msra.mxu0 %v813
    %2535 = vmatpush.bf16.msra.mxu0 %v809
    %2536 = vmatmul.bf16.gmra.mxu0 %v2527
    %v2537 = vpop.f32.mrf.mxu0
    %v2538 = vadd.f32 0.0, %v2537
    %v2539 = vpop.f32.mrf.mxu0
    %2540 = vdwg.mxu0
    %2541 = vmatpush.bf16.msra.mxu0 %v838
    %2542 = vmatpush.bf16.msra.mxu0 %v834
    %2543 = vmatpush.bf16.msra.mxu0 %v830
    %2544 = vmatpush.bf16.msra.mxu0 %v826
    %2545 = vmatpush.bf16.msra.mxu0 %v822
    %2546 = vmatpush.bf16.msra.mxu0 %v818
    %2547 = vmatpush.bf16.msra.mxu0 %v814
    %2548 = vmatpush.bf16.msra.mxu0 %v810
    %2549 = vmatmul.bf16.gmra.mxu0 %v2527
    %v2550 = vpop.f32.mrf.mxu0
    %v2551 = vadd.f32 0.0, %v2550
    %v2552 = vpop.f32.mrf.mxu0
    %2553 = vdwg.mxu0
    %2554 = vmatpush.bf16.msra.mxu0 %v839
    %2555 = vmatpush.bf16.msra.mxu0 %v835
    %2556 = vmatpush.bf16.msra.mxu0 %v831
    %2557 = vmatpush.bf16.msra.mxu0 %v827
    %2558 = vmatpush.bf16.msra.mxu0 %v823
    %2559 = vmatpush.bf16.msra.mxu0 %v819
    %2560 = vmatpush.bf16.msra.mxu0 %v815
    %2561 = vmatpush.bf16.msra.mxu0 %v811
    %2562 = vmatmul.bf16.gmra.mxu0 %v2527
    %v2563 = vpop.f32.mrf.mxu0
    %v2564 = vadd.f32 0.0, %v2563
    %v2565 = vpop.f32.mrf.mxu0
    %2566 = vdwg.mxu0
    %2567 = vmatpush.bf16.msra.mxu0 %v840
    %2568 = vmatpush.bf16.msra.mxu0 %v836
    %2569 = vmatpush.bf16.msra.mxu0 %v832
    %2570 = vmatpush.bf16.msra.mxu0 %v828
    %2571 = vmatpush.bf16.msra.mxu0 %v824
    %2572 = vmatpush.bf16.msra.mxu0 %v820
    %2573 = vmatpush.bf16.msra.mxu0 %v816
    %2574 = vmatpush.bf16.msra.mxu0 %v812
    %2575 = vmatmul.bf16.gmra.mxu0 %v2527
    %v2576 = vpop.f32.mrf.mxu0
    %v2577 = vadd.f32 0.0, %v2576
    %v2578 = vpop.f32.mrf.mxu0
    %2579 = vdwg.mxu0
    %2580 = vmatpush.bf16.msra.mxu0 %v1049
    %2581 = vmatpush.bf16.msra.mxu0 %v1045
    %2582 = vmatpush.bf16.msra.mxu0 %v1041
    %2583 = vmatpush.bf16.msra.mxu0 %v1037
    %2584 = vmatpush.bf16.msra.mxu0 %v1033
    %2585 = vmatpush.bf16.msra.mxu0 %v1029
    %2586 = vmatpush.bf16.msra.mxu0 %v1025
    %2587 = vmatpush.bf16.msra.mxu0 %v1021
    %2588 = vmatmul.bf16.gmra.mxu0 %v2526
    %v2589 = vpop.f32.mrf.mxu0
    %v2590 = vadd.f32 %v2538, %v2589
    %v2591 = vpop.f32.mrf.mxu0
    %2592 = vdwg.mxu0
    %2593 = vmatpush.bf16.msra.mxu0 %v1050
    %2594 = vmatpush.bf16.msra.mxu0 %v1046
    %2595 = vmatpush.bf16.msra.mxu0 %v1042
    %2596 = vmatpush.bf16.msra.mxu0 %v1038
    %2597 = vmatpush.bf16.msra.mxu0 %v1034
    %2598 = vmatpush.bf16.msra.mxu0 %v1030
    %2599 = vmatpush.bf16.msra.mxu0 %v1026
    %2600 = vmatpush.bf16.msra.mxu0 %v1022
    %2601 = vmatmul.bf16.gmra.mxu0 %v2526
    %v2602 = vpop.f32.mrf.mxu0
    %v2603 = vadd.f32 %v2551, %v2602
    %v2604 = vpop.f32.mrf.mxu0
    %2605 = vdwg.mxu0
    %2606 = vmatpush.bf16.msra.mxu0 %v1051
    %2607 = vmatpush.bf16.msra.mxu0 %v1047
    %2608 = vmatpush.bf16.msra.mxu0 %v1043
    %2609 = vmatpush.bf16.msra.mxu0 %v1039
    %2610 = vmatpush.bf16.msra.mxu0 %v1035
    %2611 = vmatpush.bf16.msra.mxu0 %v1031
    %2612 = vmatpush.bf16.msra.mxu0 %v1027
    %2613 = vmatpush.bf16.msra.mxu0 %v1023
    %2614 = vmatmul.bf16.gmra.mxu0 %v2526
    %v2615 = vpop.f32.mrf.mxu0
    %v2616 = vadd.f32 %v2564, %v2615
    %v2617 = vpop.f32.mrf.mxu0
    %2618 = vdwg.mxu0
    %2619 = vmatpush.bf16.msra.mxu0 %v1052
    %2620 = vmatpush.bf16.msra.mxu0 %v1048
    %2621 = vmatpush.bf16.msra.mxu0 %v1044
    %2622 = vmatpush.bf16.msra.mxu0 %v1040
    %2623 = vmatpush.bf16.msra.mxu0 %v1036
    %2624 = vmatpush.bf16.msra.mxu0 %v1032
    %2625 = vmatpush.bf16.msra.mxu0 %v1028
    %2626 = vmatpush.bf16.msra.mxu0 %v1024
    %2627 = vmatmul.bf16.gmra.mxu0 %v2526
    %v2628 = vpop.f32.mrf.mxu0
    %v2629 = vadd.f32 %v2577, %v2628
    %v2630 = vpop.f32.mrf.mxu0
    %2631 = vdwg.mxu0
    %v2632 = vadd.f32 %v2590, %v99
    %v2633 = vadd.f32 %v2603, %v100
    %v2634 = vadd.f32 %v2616, %v101
    %v2635 = vadd.f32 %v2629, %v102
    %v2636 = vxor.u32 %v2632, 2147483648
    %v2637 = vxor.u32 %v2633, 2147483648
    %v2638 = vxor.u32 %v2634, 2147483648
    %v2639 = vmul.f32 %v2636, 1.442695
    %v2640 = vpow.pop %v2639
    %v2641 = vmul.f32 %v2637, 1.442695
    %v2642 = vpow.pop %v2641
    %v2643 = vmul.f32 %v2638, 1.442695
    %v2644 = vpow.pop %v2643
    %v2645 = vadd.f32 %v2640, 1.0
    %v2646 = vadd.f32 %v2642, 1.0
    %v2647 = vadd.f32 %v2644, 1.0
    %v2648 = vrcp.pop %v2645
    %v2649 = vmul.f32 %v2645, %v2648
    %v2650 = vsub.f32 1.0, %v2649
    %v2651 = vmul.f32 %v2648, %v2650
    %v2652 = vadd.f32 %v2648, %v2651
    %vm2653 = vweird.f32 %v2645
    %vm2654 = vweird.f32 %v2648
    %vm2655 = vmor %vm2653, %vm2654
    %v2656 = vsel %vm2655, %v2648, %v2652
    %v2657 = vand.u32 2147483647, %v2645
    %vm2658 = vcmp.eq.f32.partialorder %v2657, 8.507059e+37
    %v2659 = vand.u32 %v2645, 2147483648
    %v2660 = vor.u32 1.1754944e-38, %v2659
    %v2661 = vsel %vm2658, %v2660, %v2656
    %v2662 = vmul.f32 1.0, %v2661
    %v2663 = vrcp.pop %v2646
    %v2664 = vmul.f32 %v2646, %v2663
    %v2665 = vsub.f32 1.0, %v2664
    %v2666 = vmul.f32 %v2663, %v2665
    %v2667 = vadd.f32 %v2663, %v2666
    %vm2668 = vweird.f32 %v2646
    %vm2669 = vweird.f32 %v2663
    %vm2670 = vmor %vm2668, %vm2669
    %v2671 = vsel %vm2670, %v2663, %v2667
    %v2672 = vand.u32 2147483647, %v2646
    %vm2673 = vcmp.eq.f32.partialorder %v2672, 8.507059e+37
    %v2674 = vand.u32 %v2646, 2147483648
    %v2675 = vor.u32 1.1754944e-38, %v2674
    %v2676 = vsel %vm2673, %v2675, %v2671
    %v2677 = vmul.f32 1.0, %v2676
    %v2678 = vrcp.pop %v2647
    %v2679 = vmul.f32 %v2647, %v2678
    %v2680 = vsub.f32 1.0, %v2679
    %v2681 = vmul.f32 %v2678, %v2680
    %v2682 = vadd.f32 %v2678, %v2681
    %vm2683 = vweird.f32 %v2647
    %vm2684 = vweird.f32 %v2678
    %vm2685 = vmor %vm2683, %vm2684
    %v2686 = vsel %vm2685, %v2678, %v2682
    %v2687 = vand.u32 2147483647, %v2647
    %vm2688 = vcmp.eq.f32.partialorder %v2687, 8.507059e+37
    %v2689 = vand.u32 %v2647, 2147483648
    %v2690 = vor.u32 1.1754944e-38, %v2689
    %v2691 = vsel %vm2688, %v2690, %v2686
    %v2692 = vmul.f32 1.0, %v2691
    %v2693 = vtanh.pop %v2635
    %v2694 = vmul.f32 %v2677, %v2397
    %v2695 = vmul.f32 %v2662, %v2693
    %v2696 = vadd.f32 %v2694, %v2695
    %v2697 = vtanh.pop %v2696
    %v2698 = vmul.f32 %v2692, %v2697
    %s2699 = smul.u32 6, 4
    %s2700 = smul.addr %s2699, 8
    %s2701 = scalar_lea.vmem [#allocation2], %s2700
    %v2702 = vld [vmem:[%s2701] sm:$0xff]
    %v2703 = vld [vmem:[%s2701 + $0x8] sm:$0xff]
    %v2704 = vld [vmem:[%s2701 + $0x10] sm:$0xff]
    %v2705 = vld [vmem:[%s2701 + $0x18] sm:$0xff]
    %2706 = vmatpush.bf16.msra.mxu0 %v493
    %2707 = vmatpush.bf16.msra.mxu0 %v489
    %2708 = vmatpush.bf16.msra.mxu0 %v485
    %2709 = vmatpush.bf16.msra.mxu0 %v481
    %2710 = vmatpush.bf16.msra.mxu0 %v477
    %2711 = vmatpush.bf16.msra.mxu0 %v473
    %2712 = vmatpush.bf16.msra.mxu0 %v469
    %2713 = vmatpush.bf16.msra.mxu0 %v465
    %2714 = vmatmul.bf16.gmra.mxu0 %v2526
    %v2715 = vpop.f32.mrf.mxu0
    %v2716 = vadd.f32 0.0, %v2715
    %v2717 = vpop.f32.mrf.mxu0
    %2718 = vdwg.mxu0
    %2719 = vmatpush.bf16.msra.mxu0 %v494
    %2720 = vmatpush.bf16.msra.mxu0 %v490
    %2721 = vmatpush.bf16.msra.mxu0 %v486
    %2722 = vmatpush.bf16.msra.mxu0 %v482
    %2723 = vmatpush.bf16.msra.mxu0 %v478
    %2724 = vmatpush.bf16.msra.mxu0 %v474
    %2725 = vmatpush.bf16.msra.mxu0 %v470
    %2726 = vmatpush.bf16.msra.mxu0 %v466
    %2727 = vmatmul.bf16.gmra.mxu0 %v2526
    %v2728 = vpop.f32.mrf.mxu0
    %v2729 = vadd.f32 0.0, %v2728
    %v2730 = vpop.f32.mrf.mxu0
    %2731 = vdwg.mxu0
    %2732 = vmatpush.bf16.msra.mxu0 %v495
    %2733 = vmatpush.bf16.msra.mxu0 %v491
    %2734 = vmatpush.bf16.msra.mxu0 %v487
    %2735 = vmatpush.bf16.msra.mxu0 %v483
    %2736 = vmatpush.bf16.msra.mxu0 %v479
    %2737 = vmatpush.bf16.msra.mxu0 %v475
    %2738 = vmatpush.bf16.msra.mxu0 %v471
    %2739 = vmatpush.bf16.msra.mxu0 %v467
    %2740 = vmatmul.bf16.gmra.mxu0 %v2526
    %v2741 = vpop.f32.mrf.mxu0
    %v2742 = vadd.f32 0.0, %v2741
    %v2743 = vpop.f32.mrf.mxu0
    %2744 = vdwg.mxu0
    %2745 = vmatpush.bf16.msra.mxu0 %v496
    %2746 = vmatpush.bf16.msra.mxu0 %v492
    %2747 = vmatpush.bf16.msra.mxu0 %v488
    %2748 = vmatpush.bf16.msra.mxu0 %v484
    %2749 = vmatpush.bf16.msra.mxu0 %v480
    %2750 = vmatpush.bf16.msra.mxu0 %v476
    %2751 = vmatpush.bf16.msra.mxu0 %v472
    %2752 = vmatpush.bf16.msra.mxu0 %v468
    %2753 = vmatmul.bf16.gmra.mxu0 %v2526
    %v2754 = vpop.f32.mrf.mxu0
    %v2755 = vadd.f32 0.0, %v2754
    %v2756 = vpop.f32.mrf.mxu0
    %2757 = vdwg.mxu0
    %v2758 = vadd.f32 %v2702, %v2716
    %v2759 = vadd.f32 %v2703, %v2729
    %v2760 = vadd.f32 %v2704, %v2742
    %v2761 = vadd.f32 %v2705, %v2755
    %v2762 = vxor.u32 %v2758, 2147483648
    %v2763 = vxor.u32 %v2759, 2147483648
    %v2764 = vxor.u32 %v2760, 2147483648
    %v2765 = vmul.f32 %v2762, 1.442695
    %v2766 = vpow.pop %v2765
    %v2767 = vmul.f32 %v2763, 1.442695
    %v2768 = vpow.pop %v2767
    %v2769 = vmul.f32 %v2764, 1.442695
    %v2770 = vpow.pop %v2769
    %v2771 = vadd.f32 %v2766, 1.0
    %v2772 = vadd.f32 %v2768, 1.0
    %v2773 = vadd.f32 %v2770, 1.0
    %v2774 = vrcp.pop %v2771
    %v2775 = vmul.f32 %v2771, %v2774
    %v2776 = vsub.f32 1.0, %v2775
    %v2777 = vmul.f32 %v2774, %v2776
    %v2778 = vadd.f32 %v2774, %v2777
    %vm2779 = vweird.f32 %v2771
    %vm2780 = vweird.f32 %v2774
    %vm2781 = vmor %vm2779, %vm2780
    %v2782 = vsel %vm2781, %v2774, %v2778
    %v2783 = vand.u32 2147483647, %v2771
    %vm2784 = vcmp.eq.f32.partialorder %v2783, 8.507059e+37
    %v2785 = vand.u32 %v2771, 2147483648
    %v2786 = vor.u32 1.1754944e-38, %v2785
    %v2787 = vsel %vm2784, %v2786, %v2782
    %v2788 = vmul.f32 1.0, %v2787
    %v2789 = vrcp.pop %v2772
    %v2790 = vmul.f32 %v2772, %v2789
    %v2791 = vsub.f32 1.0, %v2790
    %v2792 = vmul.f32 %v2789, %v2791
    %v2793 = vadd.f32 %v2789, %v2792
    %vm2794 = vweird.f32 %v2772
    %vm2795 = vweird.f32 %v2789
    %vm2796 = vmor %vm2794, %vm2795
    %v2797 = vsel %vm2796, %v2789, %v2793
    %v2798 = vand.u32 2147483647, %v2772
    %vm2799 = vcmp.eq.f32.partialorder %v2798, 8.507059e+37
    %v2800 = vand.u32 %v2772, 2147483648
    %v2801 = vor.u32 1.1754944e-38, %v2800
    %v2802 = vsel %vm2799, %v2801, %v2797
    %v2803 = vmul.f32 1.0, %v2802
    %v2804 = vrcp.pop %v2773
    %v2805 = vmul.f32 %v2773, %v2804
    %v2806 = vsub.f32 1.0, %v2805
    %v2807 = vmul.f32 %v2804, %v2806
    %v2808 = vadd.f32 %v2804, %v2807
    %vm2809 = vweird.f32 %v2773
    %vm2810 = vweird.f32 %v2804
    %vm2811 = vmor %vm2809, %vm2810
    %v2812 = vsel %vm2811, %v2804, %v2808
    %v2813 = vand.u32 2147483647, %v2773
    %vm2814 = vcmp.eq.f32.partialorder %v2813, 8.507059e+37
    %v2815 = vand.u32 %v2773, 2147483648
    %v2816 = vor.u32 1.1754944e-38, %v2815
    %v2817 = vsel %vm2814, %v2816, %v2812
    %v2818 = vmul.f32 1.0, %v2817
    %v2819 = vtanh.pop %v2761
    %v2820 = vmul.f32 %v2803, %v2523
    %v2821 = vmul.f32 %v2788, %v2819
    %v2822 = vadd.f32 %v2820, %v2821
    %v2823 = vtanh.pop %v2822
    %v2824 = vmul.f32 %v2818, %v2823
    %v2825 = vpack.c.bf16 %v2824, %v2824
    %v2826 = vpack.c.bf16 %v2698, %v2698
    %2827 = vmatpush.bf16.msra.mxu0 %v837
    %2828 = vmatpush.bf16.msra.mxu0 %v833
    %2829 = vmatpush.bf16.msra.mxu0 %v829
    %2830 = vmatpush.bf16.msra.mxu0 %v825
    %2831 = vmatpush.bf16.msra.mxu0 %v821
    %2832 = vmatpush.bf16.msra.mxu0 %v817
    %2833 = vmatpush.bf16.msra.mxu0 %v813
    %2834 = vmatpush.bf16.msra.mxu0 %v809
    %2835 = vmatmul.bf16.gmra.mxu0 %v2826
    %v2836 = vpop.f32.mrf.mxu0
    %v2837 = vadd.f32 0.0, %v2836
    %v2838 = vpop.f32.mrf.mxu0
    %2839 = vdwg.mxu0
    %2840 = vmatpush.bf16.msra.mxu0 %v838
    %2841 = vmatpush.bf16.msra.mxu0 %v834
    %2842 = vmatpush.bf16.msra.mxu0 %v830
    %2843 = vmatpush.bf16.msra.mxu0 %v826
    %2844 = vmatpush.bf16.msra.mxu0 %v822
    %2845 = vmatpush.bf16.msra.mxu0 %v818
    %2846 = vmatpush.bf16.msra.mxu0 %v814
    %2847 = vmatpush.bf16.msra.mxu0 %v810
    %2848 = vmatmul.bf16.gmra.mxu0 %v2826
    %v2849 = vpop.f32.mrf.mxu0
    %v2850 = vadd.f32 0.0, %v2849
    %v2851 = vpop.f32.mrf.mxu0
    %2852 = vdwg.mxu0
    %2853 = vmatpush.bf16.msra.mxu0 %v839
    %2854 = vmatpush.bf16.msra.mxu0 %v835
    %2855 = vmatpush.bf16.msra.mxu0 %v831
    %2856 = vmatpush.bf16.msra.mxu0 %v827
    %2857 = vmatpush.bf16.msra.mxu0 %v823
    %2858 = vmatpush.bf16.msra.mxu0 %v819
    %2859 = vmatpush.bf16.msra.mxu0 %v815
    %2860 = vmatpush.bf16.msra.mxu0 %v811
    %2861 = vmatmul.bf16.gmra.mxu0 %v2826
    %v2862 = vpop.f32.mrf.mxu0
    %v2863 = vadd.f32 0.0, %v2862
    %v2864 = vpop.f32.mrf.mxu0
    %2865 = vdwg.mxu0
    %2866 = vmatpush.bf16.msra.mxu0 %v840
    %2867 = vmatpush.bf16.msra.mxu0 %v836
    %2868 = vmatpush.bf16.msra.mxu0 %v832
    %2869 = vmatpush.bf16.msra.mxu0 %v828
    %2870 = vmatpush.bf16.msra.mxu0 %v824
    %2871 = vmatpush.bf16.msra.mxu0 %v820
    %2872 = vmatpush.bf16.msra.mxu0 %v816
    %2873 = vmatpush.bf16.msra.mxu0 %v812
    %2874 = vmatmul.bf16.gmra.mxu0 %v2826
    %v2875 = vpop.f32.mrf.mxu0
    %v2876 = vadd.f32 0.0, %v2875
    %v2877 = vpop.f32.mrf.mxu0
    %2878 = vdwg.mxu0
    %2879 = vmatpush.bf16.msra.mxu0 %v1049
    %2880 = vmatpush.bf16.msra.mxu0 %v1045
    %2881 = vmatpush.bf16.msra.mxu0 %v1041
    %2882 = vmatpush.bf16.msra.mxu0 %v1037
    %2883 = vmatpush.bf16.msra.mxu0 %v1033
    %2884 = vmatpush.bf16.msra.mxu0 %v1029
    %2885 = vmatpush.bf16.msra.mxu0 %v1025
    %2886 = vmatpush.bf16.msra.mxu0 %v1021
    %2887 = vmatmul.bf16.gmra.mxu0 %v2825
    %v2888 = vpop.f32.mrf.mxu0
    %v2889 = vadd.f32 %v2837, %v2888
    %v2890 = vpop.f32.mrf.mxu0
    %2891 = vdwg.mxu0
    %2892 = vmatpush.bf16.msra.mxu0 %v1050
    %2893 = vmatpush.bf16.msra.mxu0 %v1046
    %2894 = vmatpush.bf16.msra.mxu0 %v1042
    %2895 = vmatpush.bf16.msra.mxu0 %v1038
    %2896 = vmatpush.bf16.msra.mxu0 %v1034
    %2897 = vmatpush.bf16.msra.mxu0 %v1030
    %2898 = vmatpush.bf16.msra.mxu0 %v1026
    %2899 = vmatpush.bf16.msra.mxu0 %v1022
    %2900 = vmatmul.bf16.gmra.mxu0 %v2825
    %v2901 = vpop.f32.mrf.mxu0
    %v2902 = vadd.f32 %v2850, %v2901
    %v2903 = vpop.f32.mrf.mxu0
    %2904 = vdwg.mxu0
    %2905 = vmatpush.bf16.msra.mxu0 %v1051
    %2906 = vmatpush.bf16.msra.mxu0 %v1047
    %2907 = vmatpush.bf16.msra.mxu0 %v1043
    %2908 = vmatpush.bf16.msra.mxu0 %v1039
    %2909 = vmatpush.bf16.msra.mxu0 %v1035
    %2910 = vmatpush.bf16.msra.mxu0 %v1031
    %2911 = vmatpush.bf16.msra.mxu0 %v1027
    %2912 = vmatpush.bf16.msra.mxu0 %v1023
    %2913 = vmatmul.bf16.gmra.mxu0 %v2825
    %v2914 = vpop.f32.mrf.mxu0
    %v2915 = vadd.f32 %v2863, %v2914
    %v2916 = vpop.f32.mrf.mxu0
    %2917 = vdwg.mxu0
    %2918 = vmatpush.bf16.msra.mxu0 %v1052
    %2919 = vmatpush.bf16.msra.mxu0 %v1048
    %2920 = vmatpush.bf16.msra.mxu0 %v1044
    %2921 = vmatpush.bf16.msra.mxu0 %v1040
    %2922 = vmatpush.bf16.msra.mxu0 %v1036
    %2923 = vmatpush.bf16.msra.mxu0 %v1032
    %2924 = vmatpush.bf16.msra.mxu0 %v1028
    %2925 = vmatpush.bf16.msra.mxu0 %v1024
    %2926 = vmatmul.bf16.gmra.mxu0 %v2825
    %v2927 = vpop.f32.mrf.mxu0
    %v2928 = vadd.f32 %v2876, %v2927
    %v2929 = vpop.f32.mrf.mxu0
    %2930 = vdwg.mxu0
    %v2931 = vadd.f32 %v2889, %v99
    %v2932 = vadd.f32 %v2902, %v100
    %v2933 = vadd.f32 %v2915, %v101
    %v2934 = vadd.f32 %v2928, %v102
    %v2935 = vxor.u32 %v2931, 2147483648
    %v2936 = vxor.u32 %v2932, 2147483648
    %v2937 = vxor.u32 %v2933, 2147483648
    %v2938 = vmul.f32 %v2935, 1.442695
    %v2939 = vpow.pop %v2938
    %v2940 = vmul.f32 %v2936, 1.442695
    %v2941 = vpow.pop %v2940
    %v2942 = vmul.f32 %v2937, 1.442695
    %v2943 = vpow.pop %v2942
    %v2944 = vadd.f32 %v2939, 1.0
    %v2945 = vadd.f32 %v2941, 1.0
    %v2946 = vadd.f32 %v2943, 1.0
    %v2947 = vrcp.pop %v2944
    %v2948 = vmul.f32 %v2944, %v2947
    %v2949 = vsub.f32 1.0, %v2948
    %v2950 = vmul.f32 %v2947, %v2949
    %v2951 = vadd.f32 %v2947, %v2950
    %vm2952 = vweird.f32 %v2944
    %vm2953 = vweird.f32 %v2947
    %vm2954 = vmor %vm2952, %vm2953
    %v2955 = vsel %vm2954, %v2947, %v2951
    %v2956 = vand.u32 2147483647, %v2944
    %vm2957 = vcmp.eq.f32.partialorder %v2956, 8.507059e+37
    %v2958 = vand.u32 %v2944, 2147483648
    %v2959 = vor.u32 1.1754944e-38, %v2958
    %v2960 = vsel %vm2957, %v2959, %v2955
    %v2961 = vmul.f32 1.0, %v2960
    %v2962 = vrcp.pop %v2945
    %v2963 = vmul.f32 %v2945, %v2962
    %v2964 = vsub.f32 1.0, %v2963
    %v2965 = vmul.f32 %v2962, %v2964
    %v2966 = vadd.f32 %v2962, %v2965
    %vm2967 = vweird.f32 %v2945
    %vm2968 = vweird.f32 %v2962
    %vm2969 = vmor %vm2967, %vm2968
    %v2970 = vsel %vm2969, %v2962, %v2966
    %v2971 = vand.u32 2147483647, %v2945
    %vm2972 = vcmp.eq.f32.partialorder %v2971, 8.507059e+37
    %v2973 = vand.u32 %v2945, 2147483648
    %v2974 = vor.u32 1.1754944e-38, %v2973
    %v2975 = vsel %vm2972, %v2974, %v2970
    %v2976 = vmul.f32 1.0, %v2975
    %v2977 = vrcp.pop %v2946
    %v2978 = vmul.f32 %v2946, %v2977
    %v2979 = vsub.f32 1.0, %v2978
    %v2980 = vmul.f32 %v2977, %v2979
    %v2981 = vadd.f32 %v2977, %v2980
    %vm2982 = vweird.f32 %v2946
    %vm2983 = vweird.f32 %v2977
    %vm2984 = vmor %vm2982, %vm2983
    %v2985 = vsel %vm2984, %v2977, %v2981
    %v2986 = vand.u32 2147483647, %v2946
    %vm2987 = vcmp.eq.f32.partialorder %v2986, 8.507059e+37
    %v2988 = vand.u32 %v2946, 2147483648
    %v2989 = vor.u32 1.1754944e-38, %v2988
    %v2990 = vsel %vm2987, %v2989, %v2985
    %v2991 = vmul.f32 1.0, %v2990
    %v2992 = vtanh.pop %v2934
    %v2993 = vmul.f32 %v2976, %v2696
    %v2994 = vmul.f32 %v2961, %v2992
    %v2995 = vadd.f32 %v2993, %v2994
    %v2996 = vtanh.pop %v2995
    %v2997 = vmul.f32 %v2991, %v2996
    %s2998 = smul.u32 7, 4
    %s2999 = smul.addr %s2998, 8
    %s3000 = scalar_lea.vmem [#allocation2], %s2999
    %v3001 = vld [vmem:[%s3000] sm:$0xff]
    %v3002 = vld [vmem:[%s3000 + $0x8] sm:$0xff]
    %v3003 = vld [vmem:[%s3000 + $0x10] sm:$0xff]
    %v3004 = vld [vmem:[%s3000 + $0x18] sm:$0xff]
    %3005 = vmatpush.bf16.msra.mxu0 %v493
    %3006 = vmatpush.bf16.msra.mxu0 %v489
    %3007 = vmatpush.bf16.msra.mxu0 %v485
    %3008 = vmatpush.bf16.msra.mxu0 %v481
    %3009 = vmatpush.bf16.msra.mxu0 %v477
    %3010 = vmatpush.bf16.msra.mxu0 %v473
    %3011 = vmatpush.bf16.msra.mxu0 %v469
    %3012 = vmatpush.bf16.msra.mxu0 %v465
    %3013 = vmatmul.bf16.gmra.mxu0 %v2825
    %v3014 = vpop.f32.mrf.mxu0
    %v3015 = vadd.f32 0.0, %v3014
    %v3016 = vpop.f32.mrf.mxu0
    %3017 = vdwg.mxu0
    %3018 = vmatpush.bf16.msra.mxu0 %v494
    %3019 = vmatpush.bf16.msra.mxu0 %v490
    %3020 = vmatpush.bf16.msra.mxu0 %v486
    %3021 = vmatpush.bf16.msra.mxu0 %v482
    %3022 = vmatpush.bf16.msra.mxu0 %v478
    %3023 = vmatpush.bf16.msra.mxu0 %v474
    %3024 = vmatpush.bf16.msra.mxu0 %v470
    %3025 = vmatpush.bf16.msra.mxu0 %v466
    %3026 = vmatmul.bf16.gmra.mxu0 %v2825
    %v3027 = vpop.f32.mrf.mxu0
    %v3028 = vadd.f32 0.0, %v3027
    %v3029 = vpop.f32.mrf.mxu0
    %3030 = vdwg.mxu0
    %3031 = vmatpush.bf16.msra.mxu0 %v495
    %3032 = vmatpush.bf16.msra.mxu0 %v491
    %3033 = vmatpush.bf16.msra.mxu0 %v487
    %3034 = vmatpush.bf16.msra.mxu0 %v483
    %3035 = vmatpush.bf16.msra.mxu0 %v479
    %3036 = vmatpush.bf16.msra.mxu0 %v475
    %3037 = vmatpush.bf16.msra.mxu0 %v471
    %3038 = vmatpush.bf16.msra.mxu0 %v467
    %3039 = vmatmul.bf16.gmra.mxu0 %v2825
    %v3040 = vpop.f32.mrf.mxu0
    %v3041 = vadd.f32 0.0, %v3040
    %v3042 = vpop.f32.mrf.mxu0
    %3043 = vdwg.mxu0
    %3044 = vmatpush.bf16.msra.mxu0 %v496
    %3045 = vmatpush.bf16.msra.mxu0 %v492
    %3046 = vmatpush.bf16.msra.mxu0 %v488
    %3047 = vmatpush.bf16.msra.mxu0 %v484
    %3048 = vmatpush.bf16.msra.mxu0 %v480
    %3049 = vmatpush.bf16.msra.mxu0 %v476
    %3050 = vmatpush.bf16.msra.mxu0 %v472
    %3051 = vmatpush.bf16.msra.mxu0 %v468
    %3052 = vmatmul.bf16.gmra.mxu0 %v2825
    %v3053 = vpop.f32.mrf.mxu0
    %v3054 = vadd.f32 0.0, %v3053
    %v3055 = vpop.f32.mrf.mxu0
    %3056 = vdwg.mxu0
    %v3057 = vadd.f32 %v3001, %v3015
    %v3058 = vadd.f32 %v3002, %v3028
    %v3059 = vadd.f32 %v3003, %v3041
    %v3060 = vadd.f32 %v3004, %v3054
    %v3061 = vxor.u32 %v3057, 2147483648
    %v3062 = vxor.u32 %v3058, 2147483648
    %v3063 = vxor.u32 %v3059, 2147483648
    %v3064 = vmul.f32 %v3061, 1.442695
    %v3065 = vpow.pop %v3064
    %v3066 = vmul.f32 %v3062, 1.442695
    %v3067 = vpow.pop %v3066
    %v3068 = vmul.f32 %v3063, 1.442695
    %v3069 = vpow.pop %v3068
    %v3070 = vadd.f32 %v3065, 1.0
    %v3071 = vadd.f32 %v3067, 1.0
    %v3072 = vadd.f32 %v3069, 1.0
    %v3073 = vrcp.pop %v3070
    %v3074 = vmul.f32 %v3070, %v3073
    %v3075 = vsub.f32 1.0, %v3074
    %v3076 = vmul.f32 %v3073, %v3075
    %v3077 = vadd.f32 %v3073, %v3076
    %vm3078 = vweird.f32 %v3070
    %vm3079 = vweird.f32 %v3073
    %vm3080 = vmor %vm3078, %vm3079
    %v3081 = vsel %vm3080, %v3073, %v3077
    %v3082 = vand.u32 2147483647, %v3070
    %vm3083 = vcmp.eq.f32.partialorder %v3082, 8.507059e+37
    %v3084 = vand.u32 %v3070, 2147483648
    %v3085 = vor.u32 1.1754944e-38, %v3084
    %v3086 = vsel %vm3083, %v3085, %v3081
    %v3087 = vmul.f32 1.0, %v3086
    %v3088 = vrcp.pop %v3071
    %v3089 = vmul.f32 %v3071, %v3088
    %v3090 = vsub.f32 1.0, %v3089
    %v3091 = vmul.f32 %v3088, %v3090
    %v3092 = vadd.f32 %v3088, %v3091
    %vm3093 = vweird.f32 %v3071
    %vm3094 = vweird.f32 %v3088
    %vm3095 = vmor %vm3093, %vm3094
    %v3096 = vsel %vm3095, %v3088, %v3092
    %v3097 = vand.u32 2147483647, %v3071
    %vm3098 = vcmp.eq.f32.partialorder %v3097, 8.507059e+37
    %v3099 = vand.u32 %v3071, 2147483648
    %v3100 = vor.u32 1.1754944e-38, %v3099
    %v3101 = vsel %vm3098, %v3100, %v3096
    %v3102 = vmul.f32 1.0, %v3101
    %v3103 = vrcp.pop %v3072
    %v3104 = vmul.f32 %v3072, %v3103
    %v3105 = vsub.f32 1.0, %v3104
    %v3106 = vmul.f32 %v3103, %v3105
    %v3107 = vadd.f32 %v3103, %v3106
    %vm3108 = vweird.f32 %v3072
    %vm3109 = vweird.f32 %v3103
    %vm3110 = vmor %vm3108, %vm3109
    %v3111 = vsel %vm3110, %v3103, %v3107
    %v3112 = vand.u32 2147483647, %v3072
    %vm3113 = vcmp.eq.f32.partialorder %v3112, 8.507059e+37
    %v3114 = vand.u32 %v3072, 2147483648
    %v3115 = vor.u32 1.1754944e-38, %v3114
    %v3116 = vsel %vm3113, %v3115, %v3111
    %v3117 = vmul.f32 1.0, %v3116
    %v3118 = vtanh.pop %v3060
    %v3119 = vmul.f32 %v3102, %v2822
    %v3120 = vmul.f32 %v3087, %v3118
    %v3121 = vadd.f32 %v3119, %v3120
    %v3122 = vtanh.pop %v3121
    %v3123 = vmul.f32 %v3117, %v3122
    %v3124 = vpack.c.bf16 %v3123, %v3123
    %v3125 = vpack.c.bf16 %v2997, %v2997
    %3126 = vmatpush.bf16.msra.mxu0 %v837
    %3127 = vmatpush.bf16.msra.mxu0 %v833
    %3128 = vmatpush.bf16.msra.mxu0 %v829
    %3129 = vmatpush.bf16.msra.mxu0 %v825
    %3130 = vmatpush.bf16.msra.mxu0 %v821
    %3131 = vmatpush.bf16.msra.mxu0 %v817
    %3132 = vmatpush.bf16.msra.mxu0 %v813
    %3133 = vmatpush.bf16.msra.mxu0 %v809
    %3134 = vmatmul.bf16.gmra.mxu0 %v3125
    %v3135 = vpop.f32.mrf.mxu0
    %v3136 = vadd.f32 0.0, %v3135
    %v3137 = vpop.f32.mrf.mxu0
    %3138 = vdwg.mxu0
    %3139 = vmatpush.bf16.msra.mxu0 %v838
    %3140 = vmatpush.bf16.msra.mxu0 %v834
    %3141 = vmatpush.bf16.msra.mxu0 %v830
    %3142 = vmatpush.bf16.msra.mxu0 %v826
    %3143 = vmatpush.bf16.msra.mxu0 %v822
    %3144 = vmatpush.bf16.msra.mxu0 %v818
    %3145 = vmatpush.bf16.msra.mxu0 %v814
    %3146 = vmatpush.bf16.msra.mxu0 %v810
    %3147 = vmatmul.bf16.gmra.mxu0 %v3125
    %v3148 = vpop.f32.mrf.mxu0
    %v3149 = vadd.f32 0.0, %v3148
    %v3150 = vpop.f32.mrf.mxu0
    %3151 = vdwg.mxu0
    %3152 = vmatpush.bf16.msra.mxu0 %v839
    %3153 = vmatpush.bf16.msra.mxu0 %v835
    %3154 = vmatpush.bf16.msra.mxu0 %v831
    %3155 = vmatpush.bf16.msra.mxu0 %v827
    %3156 = vmatpush.bf16.msra.mxu0 %v823
    %3157 = vmatpush.bf16.msra.mxu0 %v819
    %3158 = vmatpush.bf16.msra.mxu0 %v815
    %3159 = vmatpush.bf16.msra.mxu0 %v811
    %3160 = vmatmul.bf16.gmra.mxu0 %v3125
    %v3161 = vpop.f32.mrf.mxu0
    %v3162 = vadd.f32 0.0, %v3161
    %v3163 = vpop.f32.mrf.mxu0
    %3164 = vdwg.mxu0
    %3165 = vmatpush.bf16.msra.mxu0 %v840
    %3166 = vmatpush.bf16.msra.mxu0 %v836
    %3167 = vmatpush.bf16.msra.mxu0 %v832
    %3168 = vmatpush.bf16.msra.mxu0 %v828
    %3169 = vmatpush.bf16.msra.mxu0 %v824
    %3170 = vmatpush.bf16.msra.mxu0 %v820
    %3171 = vmatpush.bf16.msra.mxu0 %v816
    %3172 = vmatpush.bf16.msra.mxu0 %v812
    %3173 = vmatmul.bf16.gmra.mxu0 %v3125
    %v3174 = vpop.f32.mrf.mxu0
    %v3175 = vadd.f32 0.0, %v3174
    %v3176 = vpop.f32.mrf.mxu0
    %3177 = vdwg.mxu0
    %3178 = vmatpush.bf16.msra.mxu0 %v1049
    %3179 = vmatpush.bf16.msra.mxu0 %v1045
    %3180 = vmatpush.bf16.msra.mxu0 %v1041
    %3181 = vmatpush.bf16.msra.mxu0 %v1037
    %3182 = vmatpush.bf16.msra.mxu0 %v1033
    %3183 = vmatpush.bf16.msra.mxu0 %v1029
    %3184 = vmatpush.bf16.msra.mxu0 %v1025
    %3185 = vmatpush.bf16.msra.mxu0 %v1021
    %3186 = vmatmul.bf16.gmra.mxu0 %v3124
    %v3187 = vpop.f32.mrf.mxu0
    %v3188 = vadd.f32 %v3136, %v3187
    %v3189 = vpop.f32.mrf.mxu0
    %3190 = vdwg.mxu0
    %3191 = vmatpush.bf16.msra.mxu0 %v1050
    %3192 = vmatpush.bf16.msra.mxu0 %v1046
    %3193 = vmatpush.bf16.msra.mxu0 %v1042
    %3194 = vmatpush.bf16.msra.mxu0 %v1038
    %3195 = vmatpush.bf16.msra.mxu0 %v1034
    %3196 = vmatpush.bf16.msra.mxu0 %v1030
    %3197 = vmatpush.bf16.msra.mxu0 %v1026
    %3198 = vmatpush.bf16.msra.mxu0 %v1022
    %3199 = vmatmul.bf16.gmra.mxu0 %v3124
    %v3200 = vpop.f32.mrf.mxu0
    %v3201 = vadd.f32 %v3149, %v3200
    %v3202 = vpop.f32.mrf.mxu0
    %3203 = vdwg.mxu0
    %3204 = vmatpush.bf16.msra.mxu0 %v1051
    %3205 = vmatpush.bf16.msra.mxu0 %v1047
    %3206 = vmatpush.bf16.msra.mxu0 %v1043
    %3207 = vmatpush.bf16.msra.mxu0 %v1039
    %3208 = vmatpush.bf16.msra.mxu0 %v1035
    %3209 = vmatpush.bf16.msra.mxu0 %v1031
    %3210 = vmatpush.bf16.msra.mxu0 %v1027
    %3211 = vmatpush.bf16.msra.mxu0 %v1023
    %3212 = vmatmul.bf16.gmra.mxu0 %v3124
    %v3213 = vpop.f32.mrf.mxu0
    %v3214 = vadd.f32 %v3162, %v3213
    %v3215 = vpop.f32.mrf.mxu0
    %3216 = vdwg.mxu0
    %3217 = vmatpush.bf16.msra.mxu0 %v1052
    %3218 = vmatpush.bf16.msra.mxu0 %v1048
    %3219 = vmatpush.bf16.msra.mxu0 %v1044
    %3220 = vmatpush.bf16.msra.mxu0 %v1040
    %3221 = vmatpush.bf16.msra.mxu0 %v1036
    %3222 = vmatpush.bf16.msra.mxu0 %v1032
    %3223 = vmatpush.bf16.msra.mxu0 %v1028
    %3224 = vmatpush.bf16.msra.mxu0 %v1024
    %3225 = vmatmul.bf16.gmra.mxu0 %v3124
    %v3226 = vpop.f32.mrf.mxu0
    %v3227 = vadd.f32 %v3175, %v3226
    %v3228 = vpop.f32.mrf.mxu0
    %3229 = vdwg.mxu0
    %v3230 = vadd.f32 %v3188, %v99
    %v3231 = vadd.f32 %v3201, %v100
    %v3232 = vadd.f32 %v3214, %v101
    %v3233 = vadd.f32 %v3227, %v102
    %v3234 = vxor.u32 %v3230, 2147483648
    %v3235 = vxor.u32 %v3231, 2147483648
    %v3236 = vxor.u32 %v3232, 2147483648
    %v3237 = vmul.f32 %v3234, 1.442695
    %v3238 = vpow.pop %v3237
    %v3239 = vmul.f32 %v3235, 1.442695
    %v3240 = vpow.pop %v3239
    %v3241 = vmul.f32 %v3236, 1.442695
    %v3242 = vpow.pop %v3241
    %v3243 = vadd.f32 %v3238, 1.0
    %v3244 = vadd.f32 %v3240, 1.0
    %v3245 = vadd.f32 %v3242, 1.0
    %v3246 = vrcp.pop %v3243
    %v3247 = vmul.f32 %v3243, %v3246
    %v3248 = vsub.f32 1.0, %v3247
    %v3249 = vmul.f32 %v3246, %v3248
    %v3250 = vadd.f32 %v3246, %v3249
    %vm3251 = vweird.f32 %v3243
    %vm3252 = vweird.f32 %v3246
    %vm3253 = vmor %vm3251, %vm3252
    %v3254 = vsel %vm3253, %v3246, %v3250
    %v3255 = vand.u32 2147483647, %v3243
    %vm3256 = vcmp.eq.f32.partialorder %v3255, 8.507059e+37
    %v3257 = vand.u32 %v3243, 2147483648
    %v3258 = vor.u32 1.1754944e-38, %v3257
    %v3259 = vsel %vm3256, %v3258, %v3254
    %v3260 = vmul.f32 1.0, %v3259
    %v3261 = vrcp.pop %v3244
    %v3262 = vmul.f32 %v3244, %v3261
    %v3263 = vsub.f32 1.0, %v3262
    %v3264 = vmul.f32 %v3261, %v3263
    %v3265 = vadd.f32 %v3261, %v3264
    %vm3266 = vweird.f32 %v3244
    %vm3267 = vweird.f32 %v3261
    %vm3268 = vmor %vm3266, %vm3267
    %v3269 = vsel %vm3268, %v3261, %v3265
    %v3270 = vand.u32 2147483647, %v3244
    %vm3271 = vcmp.eq.f32.partialorder %v3270, 8.507059e+37
    %v3272 = vand.u32 %v3244, 2147483648
    %v3273 = vor.u32 1.1754944e-38, %v3272
    %v3274 = vsel %vm3271, %v3273, %v3269
    %v3275 = vmul.f32 1.0, %v3274
    %v3276 = vrcp.pop %v3245
    %v3277 = vmul.f32 %v3245, %v3276
    %v3278 = vsub.f32 1.0, %v3277
    %v3279 = vmul.f32 %v3276, %v3278
    %v3280 = vadd.f32 %v3276, %v3279
    %vm3281 = vweird.f32 %v3245
    %vm3282 = vweird.f32 %v3276
    %vm3283 = vmor %vm3281, %vm3282
    %v3284 = vsel %vm3283, %v3276, %v3280
    %v3285 = vand.u32 2147483647, %v3245
    %vm3286 = vcmp.eq.f32.partialorder %v3285, 8.507059e+37
    %v3287 = vand.u32 %v3245, 2147483648
    %v3288 = vor.u32 1.1754944e-38, %v3287
    %v3289 = vsel %vm3286, %v3288, %v3284
    %v3290 = vmul.f32 1.0, %v3289
    %v3291 = vtanh.pop %v3233
    %v3292 = vmul.f32 %v3275, %v2995
    %v3293 = vmul.f32 %v3260, %v3291
    %v3294 = vadd.f32 %v3292, %v3293
    %v3295 = vtanh.pop %v3294
    %v3296 = vmul.f32 %v3290, %v3295
    %v3297 = vpack.c.bf16 %v3296, %v3296
    %v3298 = vld [vmem:[#allocation9] sm:$0xf]
    %v3299 = vld [vmem:[#allocation9 + $0x4] sm:$0xf]
    %v3300 = vld [vmem:[#allocation9 + $0x8] sm:$0xf]
    %v3301 = vld [vmem:[#allocation9 + $0xc] sm:$0xf]
    %v3302 = vld [vmem:[#allocation9 + $0x10] sm:$0xf]
    %v3303 = vld [vmem:[#allocation9 + $0x14] sm:$0xf]
    %v3304 = vld [vmem:[#allocation9 + $0x18] sm:$0xf]
    %v3305 = vld [vmem:[#allocation9 + $0x1c] sm:$0xf]
    %v3306 = vld [vmem:[#allocation9 + $0x20] sm:$0xf]
    %v3307 = vld [vmem:[#allocation9 + $0x24] sm:$0xf]
    %v3308 = vld [vmem:[#allocation9 + $0x28] sm:$0xf]
    %v3309 = vld [vmem:[#allocation9 + $0x2c] sm:$0xf]
    %v3310 = vld [vmem:[#allocation9 + $0x30] sm:$0xf]
    %v3311 = vld [vmem:[#allocation9 + $0x34] sm:$0xf]
    %v3312 = vld [vmem:[#allocation9 + $0x38] sm:$0xf]
    %v3313 = vld [vmem:[#allocation9 + $0x3c] sm:$0xf]
    %v3314 = vld [vmem:[%s8] sm:$0x1]
    %v3316 = vperm.slane %v3314, 0
    %v3334 = vunpack.c.l.b16 %v3298
    %v3335 = vunpack.c.l.b16 %v3299
    %v3336 = vunpack.c.l.b16 %v3300
    %v3337 = vunpack.c.l.b16 %v3301
    %v3338 = vunpack.c.l.b16 %v3302
    %v3339 = vunpack.c.l.b16 %v3303
    %v3340 = vunpack.c.l.b16 %v3304
    %v3341 = vunpack.c.l.b16 %v3305
    %v3342 = vunpack.c.l.b16 %v3306
    %v3343 = vunpack.c.l.b16 %v3307
    %v3344 = vunpack.c.l.b16 %v3308
    %v3345 = vunpack.c.l.b16 %v3309
    %v3346 = vunpack.c.l.b16 %v3310
    %v3347 = vunpack.c.l.b16 %v3311
    %v3348 = vunpack.c.l.b16 %v3312
    %v3349 = vunpack.c.l.b16 %v3313
    %v3350 = vpack.c.b16 %v3335, %v3334
    %v3351 = vpack.c.b16 %v3337, %v3336
    %v3352 = vpack.c.b16 %v3339, %v3338
    %v3353 = vpack.c.b16 %v3341, %v3340
    %v3354 = vpack.c.b16 %v3343, %v3342
    %v3355 = vpack.c.b16 %v3345, %v3344
    %v3356 = vpack.c.b16 %v3347, %v3346
    %v3357 = vpack.c.b16 %v3349, %v3348
    %3366 = vmatpush.bf16.msra.mxu0 %v3357
    %3367 = vmatpush.bf16.msra.mxu0 %v3356
    %3368 = vmatpush.bf16.msra.mxu0 %v3355
    %3369 = vmatpush.bf16.msra.mxu0 %v3354
    %3370 = vmatpush.bf16.msra.mxu0 %v3353
    %3371 = vmatpush.bf16.msra.mxu0 %v3352
    %3372 = vmatpush.bf16.msra.mxu0 %v3351
    %3373 = vmatpush.bf16.msra.mxu0 %v3350
    %3374 = vmatmul.bf16.gmra.mxu0 %v3297
    %v3375 = vpop.f32.mrf.mxu0
    %v3376 = vadd.f32 %v3316, %v3375
    %v3377 = vpop.f32.mrf.mxu0
    %3378 = vdwg.mxu0
    %3379 = vst [vmem:[#allocation11] sm:$0xff] %v3376
    // Predicated region
    $region54: #{tpu_custom_call.1} parent=1 // pred_check
      _
    $region55: #{tpu_custom_call.1} parent=1 // pred_check_branch
      %3381 = sbr.rel (0) target = $region57
    $region56: #{tpu_custom_call.1} parent=1 // pred_region
      %3383 = vsyncadd [#allocation5], 0
      %s3385 = sshll.u32 [#allocation11], 4
      %s3386 = int_to_ptr.vmem [resolvable:$true] %s3385
      %s3387 = sshll.u32 %s9, 4
      %s3388 = int_to_ptr.hbm [resolvable:$true] %s3387
      %3390 = dma.vmem_to_hbm [thread:$0]  %s3386, 128, %s3388, [#allocation5]
    $region57: #{tpu_custom_call.1} parent=1 // pred_fallthru
      _
    // Predicated region
    $region58: #{tpu_custom_call.1} parent=1 // pred_check
      _
    $region59: #{tpu_custom_call.1} parent=1 // pred_check_branch
      %3392 = sbr.rel (0) target = $region61
    $region60: #{tpu_custom_call.1} parent=1 // pred_region
      %3394 = dma.done [#allocation5], 128
    $region61: #{tpu_custom_call.1} parent=1 // pred_fallthru
      _
    %3395 = vsyncpa [#allocation4], 1
    %3396 = vsyncpa [#allocation7], 1
    %3397 = vsyncpa [#allocation10], 1
    %3398 = vsyncpa [#allocation5], 1

</llo_original>
